<compile_context>
chip_gen: v7x
topology: tpu7x:2x2x1
jax: 0.10.0
libtpu: 0.0.40
codegen_flags: <defaults>
</compile_context>

<pallas_src>
import jax
import jax.numpy as jnp
from jax.experimental import pallas as pl
from jax.experimental.pallas import tpu as pltpu


def visual_encoder_kernel(
    x_ref,       # (S, TB, D)  bf16  time-major input
    len_ref,     # (TB, 1)     f32   sequence lengths
    keym_ref,    # (TB, 1, S)  f32   key-axis pad mask (1=valid, 0=pad)
    wih_ref,     # (D, 8H)     bf16  fused input proj  [fwd 4H | bwd 4H], gates (i,f,o,g)
    whh_ref,     # (2H, 8H)    bf16  block-diag recurrent proj, same column layout
    b_ref,       # (1, 8H)     f32   fused bias (b_ih + b_hh), same layout
    wkqv_ref,    # (H, 3H)     bf16  fused attention projections [k | q | v]
    o_ref,       # (TB, H)     f32   output (sum over sequence)
    gx_f_s,      # (S, TB, 4H) f32   scratch: fwd input-gate preactivations
    gx_b_s,      # (S, TB, 4H) f32   scratch: bwd input-gate preactivations
    seq_f_s,     # (S, TB, H)  f32   scratch: fwd hidden states (time-major)
    seq_b_s,     # (S, TB, H)  f32   scratch: bwd hidden states (time-major)
    merged_s,    # (TB, S, H)  f32   scratch: merged outputs (batch-major)
):
    S, TB, D = x_ref.shape
    H = wkqv_ref.shape[0]
    H2, H3, H4, H8 = 2 * H, 3 * H, 4 * H, 8 * H

    lengths = len_ref[...]                                    # (TB, 1) f32
    whh = whh_ref[...]                                        # (2H, 8H) bf16

    # ---- hoisted input projection: ONE (S*TB, D) @ (D, 8H) MXU matmul ------
    x2 = x_ref[...].reshape(S * TB, D)                        # bf16
    gx = (jnp.dot(x2, wih_ref[...], preferred_element_type=jnp.float32)
          + b_ref[...]).reshape(S, TB, H8)
    gx_f_s[...] = gx[..., 0:H4]
    gx_b_s[...] = gx[..., H4:H8]

    def lstm_cell(gates, c):
        # gate column order (i, f, o, g): one wide sigmoid + one tanh (EUP)
        s = jax.nn.sigmoid(gates[:, 0:H3])                    # [i | f | o]
        g = jnp.tanh(gates[:, H3:H4])
        c_new = s[:, H:H2] * c + s[:, 0:H] * g
        h_new = s[:, H2:H3] * jnp.tanh(c_new)
        return h_new, c_new

    zero = jnp.zeros((TB, H), jnp.float32)
    h_f, c_f = zero, zero
    h_b, c_b = zero, zero

    # ---- fused, fully-unrolled bidirectional recurrence ---------------------
    # forward walks t = k, backward walks t = S-1-k; the two independent
    # dependency chains interleave.  ONE MXU matmul per step (block-diag whh).
    for k in range(S):
        tf = k
        tb = S - 1 - k

        h_cat = jnp.concatenate([h_f, h_b], axis=1).astype(jnp.bfloat16)
        g_hh = jnp.dot(h_cat, whh,
                       preferred_element_type=jnp.float32)    # (TB, 8H)

        # forward direction: no per-step masking needed (padded outputs are
        # zeroed after the loop and the forward state is never re-read)
        h_f, c_f = lstm_cell(gx_f_s[tf, :, :] + g_hh[:, 0:H4], c_f)
        seq_f_s[tf, :, :] = h_f

        # backward direction: freeze state while t >= length so the first
        # valid step (t = length-1) sees zero state (packed-sequence semantics)
        h_b_new, c_b_new = lstm_cell(gx_b_s[tb, :, :] + g_hh[:, H4:H8], c_b)
        seq_b_s[tb, :, :] = h_b_new
        m = (jnp.float32(tb) < lengths).astype(jnp.float32)   # (TB, 1) VPU compare
        h_b = m * h_b_new + (1.0 - m) * h_b
        c_b = m * c_b_new + (1.0 - m) * c_b

    # ---- merge_bi='sum', zero padded timesteps, re-layout to batch-major ---
    # (one-time re-layout after the serial loop; uses only proven ref ops)
    for t in range(S):
        mt = (jnp.float32(t) < lengths).astype(jnp.float32)   # (TB, 1)
        merged_s[:, t:t + 1, :] = (
            (seq_f_s[t, :, :] + seq_b_s[t, :, :]) * mt).reshape(TB, 1, H)

    merged = merged_s[...]                                    # (TB, S, H)

    # ---- self-attention (fused k/q/v projection, key-axis pad mask) --------
    # TODO(synk): dropout on attention scores / RNN output omitted (eval mode).
    m2 = merged.reshape(TB * S, H).astype(jnp.bfloat16)
    p = jnp.dot(m2, wkqv_ref[...],
                preferred_element_type=jnp.float32).reshape(TB, S, H3)
    k_p = p[..., 0:H]
    q_p = p[..., H:H2]
    v_p = p[..., H2:H3]

    scores = jnp.einsum('bqh,bkh->bqk',
                        q_p.astype(jnp.bfloat16), k_p.astype(jnp.bfloat16),
                        preferred_element_type=jnp.float32)   # (TB, S, S)
    scores = scores * (1.0 / jnp.sqrt(jnp.float32(H)))
    # pad mask on the *key* axis only, additive -1e5 (as mmlatch does)
    scores = scores + (1.0 - keym_ref[...]) * (-1e5)
    scores = jax.nn.softmax(scores, axis=-1)

    att = jnp.einsum('bqk,bkh->bqh',
                     scores.astype(jnp.bfloat16), v_p.astype(jnp.bfloat16),
                     preferred_element_type=jnp.float32)      # (TB, S, H)

    # return_hidden=False -> sum over the sequence dimension (lane-dense 2-D out)
    o_ref[...] = jnp.sum(att, axis=1)                         # (TB, H)


def visual_encoder_forward(x, lengths, packed, *, block_b=None):
    """x: (B, S, D) f32, lengths: (B,) int32, packed: from pack_params()."""
    B, S, D = x.shape
    H = packed["w_kqv"].shape[0]
    H3, H8 = 3 * H, 8 * H

    # Pad the batch to a multiple of 8 so every (TB, *) tile fills all 8
    # sublanes.  Padded rows get length 0 and are dropped at the end.
    B_pad = -(-B // 8) * 8
    if block_b is None:
        # Single-TC v5e/v6e: one grid step (no per-step overhead).
        # On dual-TC v7x, pass block_b = B_pad // 2 (multiple of 8).
        block_b = B_pad
    TB = block_b
    assert TB % 8 == 0 and B_pad % TB == 0

    pad = B_pad - B
    if pad:
        x = jnp.concatenate([x, jnp.zeros((pad, S, D), x.dtype)], axis=0)
        lengths = jnp.concatenate(
            [lengths, jnp.zeros((pad,), lengths.dtype)], axis=0)

    lens_f = lengths.astype(jnp.float32)
    x_t = jnp.transpose(x, (1, 0, 2)).astype(jnp.bfloat16)     # (S, B_pad, D)
    len_col = lens_f.reshape(B_pad, 1)                          # (B_pad, 1)
    pos = jnp.arange(S, dtype=jnp.float32)
    key_mask = (pos[None, :] < lens_f[:, None]).astype(jnp.float32)
    key_mask = key_mask.reshape(B_pad, 1, S)                    # (B_pad, 1, S)

    grid_spec = pltpu.PrefetchScalarGridSpec(
        num_scalar_prefetch=0,
        grid=(B_pad // TB,),
        in_specs=[
            pl.BlockSpec((S, TB, D), lambda b: (0, b, 0)),      # x (time-major)
            pl.BlockSpec((TB, 1), lambda b: (b, 0)),            # lengths
            pl.BlockSpec((TB, 1, S), lambda b: (b, 0, 0)),      # key mask
            pl.BlockSpec((D, H8), lambda b: (0, 0)),            # fused W_ih
            pl.BlockSpec((2 * H, H8), lambda b: (0, 0)),        # block-diag W_hh
            pl.BlockSpec((1, H8), lambda b: (0, 0)),            # fused bias
            pl.BlockSpec((H, H3), lambda b: (0, 0)),            # fused W_kqv
        ],
        out_specs=pl.BlockSpec((TB, H), lambda b: (b, 0)),
        scratch_shapes=[
            pltpu.VMEM((S, TB, 4 * H), jnp.float32),            # gx fwd
            pltpu.VMEM((S, TB, 4 * H), jnp.float32),            # gx bwd
            pltpu.VMEM((S, TB, H), jnp.float32),                # fwd hidden
            pltpu.VMEM((S, TB, H), jnp.float32),                # bwd hidden
            pltpu.VMEM((TB, S, H), jnp.float32),                # merged (batch-major)
        ],
    )

    out = pl.pallas_call(
        visual_encoder_kernel,
        out_shape=jax.ShapeDtypeStruct((B_pad, H), jnp.float32),
        grid_spec=grid_spec,
        compiler_params=pltpu.CompilerParams(
            dimension_semantics=("parallel",)),   # shards batch tiles on v7x
    )(x_t, len_col, key_mask,
      packed["w_ih"], packed["w_hh"], packed["bias"], packed["w_kqv"])

    return out[:B]


def init_params(key, input_size, hidden_size):
    """Synthetic PyTorch-layout parameters: U(-1/sqrt(H), 1/sqrt(H)).

    LSTM weights are (4H, in) with gate row order (i, f, g, o), like nn.LSTM.
    Attention projections are nn.Linear(H, H, bias=False) weights (out, in).
    """
    D, H = input_size, hidden_size
    scale = 1.0 / float(H) ** 0.5
    ks = jax.random.split(key, 11)

    def u(k, shape):
        return jax.random.uniform(k, shape, jnp.float32, -scale, scale)

    return {
        "w_ih_f": u(ks[0], (4 * H, D)), "w_hh_f": u(ks[1], (4 * H, H)),
        "b_f": u(ks[2], (4 * H,)) + u(ks[3], (4 * H,)),      # b_ih + b_hh
        "w_ih_b": u(ks[4], (4 * H, D)), "w_hh_b": u(ks[5], (4 * H, H)),
        "b_b": u(ks[6], (4 * H,)) + u(ks[7], (4 * H,)),
        "wk": u(ks[8], (H, H)), "wq": u(ks[9], (H, H)), "wv": u(ks[10], (H, H)),
    }


def pack_params(params, hidden_size):
    """Fuse / reorder weights for the kernel.

    Kernel gate-column layout (width 8H): [ fwd: i f o g | bwd: i f o g ],
    i.e. direction-major with per-direction gate order (i, f, o, g).
    Matmul weights are cast to bf16 (MXU inputs); bias stays f32.
    """
    H = hidden_size

    def split_gates(w):          # PyTorch order i, f, g, o along the first axis
        return w[0:H], w[H:2 * H], w[2 * H:3 * H], w[3 * H:4 * H]

    def reorder_T(w):            # (4H, X) -> (X, 4H) columns ordered i, f, o, g
        i, f, g, o = split_gates(w)
        return jnp.concatenate([i.T, f.T, o.T, g.T], axis=1)

    def reorder_bias(b):         # (4H,) -> (4H,) ordered i, f, o, g
        i, f, g, o = split_gates(b)
        return jnp.concatenate([i, f, o, g], axis=0)

    w_ih = jnp.concatenate([reorder_T(params["w_ih_f"]),
                            reorder_T(params["w_ih_b"])], axis=1)       # (D, 8H)

    whh_f = reorder_T(params["w_hh_f"])                                  # (H, 4H)
    whh_b = reorder_T(params["w_hh_b"])                                  # (H, 4H)
    z = jnp.zeros((H, 4 * H), jnp.float32)
    w_hh = jnp.concatenate([jnp.concatenate([whh_f, z], axis=1),
                            jnp.concatenate([z, whh_b], axis=1)], axis=0)  # (2H, 8H)

    bias = jnp.concatenate([reorder_bias(params["b_f"]),
                            reorder_bias(params["b_b"])],
                           axis=0).reshape(1, 8 * H)                     # (1, 8H)

    w_kqv = jnp.concatenate([params["wk"].T, params["wq"].T,
                             params["wv"].T], axis=1)                    # (H, 3H)

    return {
        "w_ih": w_ih.astype(jnp.bfloat16),
        "w_hh": w_hh.astype(jnp.bfloat16),
        "bias": bias.astype(jnp.float32),
        "w_kqv": w_kqv.astype(jnp.bfloat16),
    }


if __name__ == "__main__":
    # cfg: input_size=32, hidden_size=32, layers=1, bidirectional=True,
    #      rnn_type='lstm', attention=True, return_hidden=False, dropout=0.0
    B, S, D, H = 4, 8, 32, 32

    key = jax.random.PRNGKey(0)
    kx, kp = jax.random.split(key)

    x = jax.random.normal(kx, (B, S, D), dtype=jnp.float32)
    lengths = jnp.array([S, 5, 3, 6], dtype=jnp.int32)

    params = init_params(kp, D, H)
    packed = pack_params(params, H)

    out = visual_encoder_forward(x, lengths, packed)
    out = jax.block_until_ready(out)

    assert out.shape == (B, H)
    assert bool(jnp.all(jnp.isfinite(out)))
    print("KERNEL_OK")
</pallas_src>

<mosaic_0001>
module attributes {stable_mosaic.version = 11 : i64} {
  func.func @visual_encoder_kernel(%arg0: i32, %arg1: memref<8x8x32xbf16, #tpu.memory_space<vmem>>, %arg2: memref<8x1xf32, #tpu.memory_space<vmem>>, %arg3: memref<8x1x8xf32, #tpu.memory_space<vmem>>, %arg4: memref<32x256xbf16, #tpu.memory_space<vmem>>, %arg5: memref<64x256xbf16, #tpu.memory_space<vmem>>, %arg6: memref<1x256xf32, #tpu.memory_space<vmem>>, %arg7: memref<32x96xbf16, #tpu.memory_space<vmem>>, %arg8: memref<8x32xf32, #tpu.memory_space<vmem>>, %arg9: memref<8x8x128xf32, #tpu.memory_space<vmem>>, %arg10: memref<8x8x128xf32, #tpu.memory_space<vmem>>, %arg11: memref<8x8x32xf32, #tpu.memory_space<vmem>>, %arg12: memref<8x8x32xf32, #tpu.memory_space<vmem>>, %arg13: memref<8x8x32xf32, #tpu.memory_space<vmem>>) attributes {dimension_semantics = [#tpu.dimension_semantics<parallel>], iteration_bounds = array<i64: 1>, scalar_prefetch = 0 : i64, scratch_operands = 5 : i64, tpu.core_type = #tpu.core_type<tc>, window_params = [{transform_indices = @transform_0, window_bounds = array<i64: 8, 8, 32>}, {transform_indices = @transform_1, window_bounds = array<i64: 8, 1>}, {transform_indices = @transform_2, window_bounds = array<i64: 8, 1, 8>}, {pipeline_mode = #tpu.pipeline_mode<synchronous>, transform_indices = @transform_3, window_bounds = array<i64: 32, 256>}, {pipeline_mode = #tpu.pipeline_mode<synchronous>, transform_indices = @transform_4, window_bounds = array<i64: 64, 256>}, {pipeline_mode = #tpu.pipeline_mode<synchronous>, transform_indices = @transform_5, window_bounds = array<i64: 1, 256>}, {pipeline_mode = #tpu.pipeline_mode<synchronous>, transform_indices = @transform_6, window_bounds = array<i64: 32, 96>}, {transform_indices = @transform_7, window_bounds = array<i64: 8, 32>}]} {
    %c0 = arith.constant 0 : index
    %c0_0 = arith.constant 0 : index
    %0 = vector.load %arg2[%c0, %c0_0] : memref<8x1xf32, #tpu.memory_space<vmem>>, vector<8x1xf32>
    %c0_1 = arith.constant 0 : index
    %c0_2 = arith.constant 0 : index
    %1 = vector.load %arg5[%c0_1, %c0_2] : memref<64x256xbf16, #tpu.memory_space<vmem>>, vector<64x256xbf16>
    %c0_3 = arith.constant 0 : index
    %c0_4 = arith.constant 0 : index
    %c0_5 = arith.constant 0 : index
    %2 = vector.load %arg1[%c0_3, %c0_4, %c0_5] : memref<8x8x32xbf16, #tpu.memory_space<vmem>>, vector<8x8x32xbf16>
    %3 = vector.shape_cast %2 : vector<8x8x32xbf16> to vector<64x32xbf16>
    %c0_6 = arith.constant 0 : index
    %c0_7 = arith.constant 0 : index
    %4 = vector.load %arg4[%c0_6, %c0_7] : memref<32x256xbf16, #tpu.memory_space<vmem>>, vector<32x256xbf16>
    %cst = arith.constant dense<0.000000e+00> : vector<64x256xf32>
    %5 = tpu.matmul %3, %4, %cst {dimension_numbers = #tpu.dot_dimension_numbers<[1], [0], [0], [1], [0, 0, 1, 1], [], []>} : vector<64x32xbf16>, vector<32x256xbf16>, vector<64x256xf32> -> vector<64x256xf32>
    %c0_8 = arith.constant 0 : index
    %c0_9 = arith.constant 0 : index
    %6 = vector.load %arg6[%c0_8, %c0_9] : memref<1x256xf32, #tpu.memory_space<vmem>>, vector<1x256xf32>
    %7 = vector.broadcast %6 : vector<1x256xf32> to vector<64x256xf32>
    %8 = arith.addf %5, %7 : vector<64x256xf32>
    %9 = vector.shape_cast %8 : vector<64x256xf32> to vector<8x8x256xf32>
    %10 = vector.extract_strided_slice %9 {offsets = [0, 0, 0], sizes = [8, 8, 128], strides = [1, 1, 1]} : vector<8x8x256xf32> to vector<8x8x128xf32>
    %c0_10 = arith.constant 0 : index
    %c0_11 = arith.constant 0 : index
    %c0_12 = arith.constant 0 : index
    %11 = vector.load %arg9[%c0_10, %c0_11, %c0_12] : memref<8x8x128xf32, #tpu.memory_space<vmem>>, vector<8x8x128xf32>
    tpu.vector_store %arg9[%c0_10, %c0_11, %c0_12], %10 {strides = array<i32>} : memref<8x8x128xf32, #tpu.memory_space<vmem>>, vector<8x8x128xf32>,
    %12 = vector.extract_strided_slice %9 {offsets = [0, 0, 128], sizes = [8, 8, 128], strides = [1, 1, 1]} : vector<8x8x256xf32> to vector<8x8x128xf32>
    %c0_13 = arith.constant 0 : index
    %c0_14 = arith.constant 0 : index
    %c0_15 = arith.constant 0 : index
    %13 = vector.load %arg10[%c0_13, %c0_14, %c0_15] : memref<8x8x128xf32, #tpu.memory_space<vmem>>, vector<8x8x128xf32>
    tpu.vector_store %arg10[%c0_13, %c0_14, %c0_15], %12 {strides = array<i32>} : memref<8x8x128xf32, #tpu.memory_space<vmem>>, vector<8x8x128xf32>,
    %cst_16 = arith.constant 0.000000e+00 : f32
    %14 = vector.broadcast %cst_16 : f32 to vector<8x32xf32>
    %15 = tpu.concatenate %14, %14 in 1 : vector<8x32xf32>, vector<8x32xf32> -> vector<8x64xf32>
    %16 = arith.truncf %15 : vector<8x64xf32> to vector<8x64xbf16>
    %cst_17 = arith.constant dense<0.000000e+00> : vector<8x256xf32>
    %17 = tpu.matmul %16, %1, %cst_17 {dimension_numbers = #tpu.dot_dimension_numbers<[1], [0], [0], [1], [0, 0, 1, 1], [], []>} : vector<8x64xbf16>, vector<64x256xbf16>, vector<8x256xf32> -> vector<8x256xf32>
    %c0_18 = arith.constant 0 : index
    %c0_19 = arith.constant 0 : index
    %c0_20 = arith.constant 0 : index
    %18 = vector.load %arg9[%c0_18, %c0_19, %c0_20] : memref<8x8x128xf32, #tpu.memory_space<vmem>>, vector<1x8x128xf32>
    %19 = vector.shape_cast %18 : vector<1x8x128xf32> to vector<8x128xf32>
    %20 = vector.extract_strided_slice %17 {offsets = [0, 0], sizes = [8, 128], strides = [1, 1]} : vector<8x256xf32> to vector<8x128xf32>
    %21 = arith.addf %19, %20 : vector<8x128xf32>
    %22 = vector.extract_strided_slice %21 {offsets = [0, 0], sizes = [8, 96], strides = [1, 1]} : vector<8x128xf32> to vector<8x96xf32>
    %23 = arith.negf %22 : vector<8x96xf32>
    %24 = math.exp %23 : vector<8x96xf32>
    %cst_21 = arith.constant 1.000000e+00 : f32
    %25 = vector.broadcast %cst_21 : f32 to vector<8x96xf32>
    %26 = arith.addf %25, %24 : vector<8x96xf32>
    %27 = arith.divf %25, %26 : vector<8x96xf32>
    %28 = vector.extract_strided_slice %21 {offsets = [0, 96], sizes = [8, 32], strides = [1, 1]} : vector<8x128xf32> to vector<8x32xf32>
    %29 = math.tanh %28 : vector<8x32xf32>
    %30 = vector.extract_strided_slice %27 {offsets = [0, 32], sizes = [8, 32], strides = [1, 1]} : vector<8x96xf32> to vector<8x32xf32>
    %31 = arith.mulf %30, %14 : vector<8x32xf32>
    %32 = vector.extract_strided_slice %27 {offsets = [0, 0], sizes = [8, 32], strides = [1, 1]} : vector<8x96xf32> to vector<8x32xf32>
    %33 = arith.mulf %32, %29 : vector<8x32xf32>
    %34 = arith.addf %31, %33 : vector<8x32xf32>
    %35 = vector.extract_strided_slice %27 {offsets = [0, 64], sizes = [8, 32], strides = [1, 1]} : vector<8x96xf32> to vector<8x32xf32>
    %36 = math.tanh %34 : vector<8x32xf32>
    %37 = arith.mulf %35, %36 : vector<8x32xf32>
    %c0_22 = arith.constant 0 : index
    %c0_23 = arith.constant 0 : index
    %c0_24 = arith.constant 0 : index
    %38 = vector.load %arg11[%c0_22, %c0_23, %c0_24] : memref<8x8x32xf32, #tpu.memory_space<vmem>>, vector<1x8x32xf32>
    %39 = vector.shape_cast %38 : vector<1x8x32xf32> to vector<8x32xf32>
    %40 = vector.shape_cast %37 : vector<8x32xf32> to vector<1x8x32xf32>
    tpu.vector_store %arg11[%c0_22, %c0_23, %c0_24], %40 {strides = array<i32>} : memref<8x8x32xf32, #tpu.memory_space<vmem>>, vector<1x8x32xf32>,
    %c7 = arith.constant 7 : index
    %c0_25 = arith.constant 0 : index
    %c0_26 = arith.constant 0 : index
    %41 = vector.load %arg10[%c7, %c0_25, %c0_26] : memref<8x8x128xf32, #tpu.memory_space<vmem>>, vector<1x8x128xf32>
    %42 = vector.shape_cast %41 : vector<1x8x128xf32> to vector<8x128xf32>
    %43 = vector.extract_strided_slice %17 {offsets = [0, 128], sizes = [8, 128], strides = [1, 1]} : vector<8x256xf32> to vector<8x128xf32>
    %44 = arith.addf %42, %43 : vector<8x128xf32>
    %45 = vector.extract_strided_slice %44 {offsets = [0, 0], sizes = [8, 96], strides = [1, 1]} : vector<8x128xf32> to vector<8x96xf32>
    %46 = arith.negf %45 : vector<8x96xf32>
    %47 = math.exp %46 : vector<8x96xf32>
    %cst_27 = arith.constant 1.000000e+00 : f32
    %48 = vector.broadcast %cst_27 : f32 to vector<8x96xf32>
    %49 = arith.addf %48, %47 : vector<8x96xf32>
    %50 = arith.divf %48, %49 : vector<8x96xf32>
    %51 = vector.extract_strided_slice %44 {offsets = [0, 96], sizes = [8, 32], strides = [1, 1]} : vector<8x128xf32> to vector<8x32xf32>
    %52 = math.tanh %51 : vector<8x32xf32>
    %53 = vector.extract_strided_slice %50 {offsets = [0, 32], sizes = [8, 32], strides = [1, 1]} : vector<8x96xf32> to vector<8x32xf32>
    %54 = arith.mulf %53, %14 : vector<8x32xf32>
    %55 = vector.extract_strided_slice %50 {offsets = [0, 0], sizes = [8, 32], strides = [1, 1]} : vector<8x96xf32> to vector<8x32xf32>
    %56 = arith.mulf %55, %52 : vector<8x32xf32>
    %57 = arith.addf %54, %56 : vector<8x32xf32>
    %58 = vector.extract_strided_slice %50 {offsets = [0, 64], sizes = [8, 32], strides = [1, 1]} : vector<8x96xf32> to vector<8x32xf32>
    %59 = math.tanh %57 : vector<8x32xf32>
    %60 = arith.mulf %58, %59 : vector<8x32xf32>
    %c7_28 = arith.constant 7 : index
    %c0_29 = arith.constant 0 : index
    %c0_30 = arith.constant 0 : index
    %61 = vector.load %arg12[%c7_28, %c0_29, %c0_30] : memref<8x8x32xf32, #tpu.memory_space<vmem>>, vector<1x8x32xf32>
    %62 = vector.shape_cast %61 : vector<1x8x32xf32> to vector<8x32xf32>
    %63 = vector.shape_cast %60 : vector<8x32xf32> to vector<1x8x32xf32>
    tpu.vector_store %arg12[%c7_28, %c0_29, %c0_30], %63 {strides = array<i32>} : memref<8x8x32xf32, #tpu.memory_space<vmem>>, vector<1x8x32xf32>,
    %cst_31 = arith.constant 7.000000e+00 : f32
    %64 = vector.broadcast %cst_31 : f32 to vector<8x1xf32>
    %65 = arith.cmpf olt, %64, %0 : vector<8x1xf32>
    %66 = arith.extui %65 : vector<8x1xi1> to vector<8x1xi32>
    %67 = arith.sitofp %66 : vector<8x1xi32> to vector<8x1xf32>
    %68 = vector.broadcast %67 : vector<8x1xf32> to vector<8x32xf32>
    %69 = arith.mulf %68, %60 : vector<8x32xf32>
    %cst_32 = arith.constant 1.000000e+00 : f32
    %70 = vector.broadcast %cst_32 : f32 to vector<8x1xf32>
    %71 = arith.subf %70, %67 : vector<8x1xf32>
    %72 = vector.broadcast %71 : vector<8x1xf32> to vector<8x32xf32>
    %73 = arith.mulf %72, %14 : vector<8x32xf32>
    %74 = arith.addf %69, %73 : vector<8x32xf32>
    %75 = vector.broadcast %67 : vector<8x1xf32> to vector<8x32xf32>
    %76 = arith.mulf %75, %57 : vector<8x32xf32>
    %cst_33 = arith.constant 1.000000e+00 : f32
    %77 = vector.broadcast %cst_33 : f32 to vector<8x1xf32>
    %78 = arith.subf %77, %67 : vector<8x1xf32>
    %79 = vector.broadcast %78 : vector<8x1xf32> to vector<8x32xf32>
    %80 = arith.mulf %79, %14 : vector<8x32xf32>
    %81 = arith.addf %76, %80 : vector<8x32xf32>
    %82 = tpu.concatenate %37, %74 in 1 : vector<8x32xf32>, vector<8x32xf32> -> vector<8x64xf32>
    %83 = arith.truncf %82 : vector<8x64xf32> to vector<8x64xbf16>
    %cst_34 = arith.constant dense<0.000000e+00> : vector<8x256xf32>
    %84 = tpu.matmul %83, %1, %cst_34 {dimension_numbers = #tpu.dot_dimension_numbers<[1], [0], [0], [1], [0, 0, 1, 1], [], []>} : vector<8x64xbf16>, vector<64x256xbf16>, vector<8x256xf32> -> vector<8x256xf32>
    %c1 = arith.constant 1 : index
    %c0_35 = arith.constant 0 : index
    %c0_36 = arith.constant 0 : index
    %85 = vector.load %arg9[%c1, %c0_35, %c0_36] : memref<8x8x128xf32, #tpu.memory_space<vmem>>, vector<1x8x128xf32>
    %86 = vector.shape_cast %85 : vector<1x8x128xf32> to vector<8x128xf32>
    %87 = vector.extract_strided_slice %84 {offsets = [0, 0], sizes = [8, 128], strides = [1, 1]} : vector<8x256xf32> to vector<8x128xf32>
    %88 = arith.addf %86, %87 : vector<8x128xf32>
    %89 = vector.extract_strided_slice %88 {offsets = [0, 0], sizes = [8, 96], strides = [1, 1]} : vector<8x128xf32> to vector<8x96xf32>
    %90 = arith.negf %89 : vector<8x96xf32>
    %91 = math.exp %90 : vector<8x96xf32>
    %cst_37 = arith.constant 1.000000e+00 : f32
    %92 = vector.broadcast %cst_37 : f32 to vector<8x96xf32>
    %93 = arith.addf %92, %91 : vector<8x96xf32>
    %94 = arith.divf %92, %93 : vector<8x96xf32>
    %95 = vector.extract_strided_slice %88 {offsets = [0, 96], sizes = [8, 32], strides = [1, 1]} : vector<8x128xf32> to vector<8x32xf32>
    %96 = math.tanh %95 : vector<8x32xf32>
    %97 = vector.extract_strided_slice %94 {offsets = [0, 32], sizes = [8, 32], strides = [1, 1]} : vector<8x96xf32> to vector<8x32xf32>
    %98 = arith.mulf %97, %34 : vector<8x32xf32>
    %99 = vector.extract_strided_slice %94 {offsets = [0, 0], sizes = [8, 32], strides = [1, 1]} : vector<8x96xf32> to vector<8x32xf32>
    %100 = arith.mulf %99, %96 : vector<8x32xf32>
    %101 = arith.addf %98, %100 : vector<8x32xf32>
    %102 = vector.extract_strided_slice %94 {offsets = [0, 64], sizes = [8, 32], strides = [1, 1]} : vector<8x96xf32> to vector<8x32xf32>
    %103 = math.tanh %101 : vector<8x32xf32>
    %104 = arith.mulf %102, %103 : vector<8x32xf32>
    %c1_38 = arith.constant 1 : index
    %c0_39 = arith.constant 0 : index
    %c0_40 = arith.constant 0 : index
    %105 = vector.load %arg11[%c1_38, %c0_39, %c0_40] : memref<8x8x32xf32, #tpu.memory_space<vmem>>, vector<1x8x32xf32>
    %106 = vector.shape_cast %105 : vector<1x8x32xf32> to vector<8x32xf32>
    %107 = vector.shape_cast %104 : vector<8x32xf32> to vector<1x8x32xf32>
    tpu.vector_store %arg11[%c1_38, %c0_39, %c0_40], %107 {strides = array<i32>} : memref<8x8x32xf32, #tpu.memory_space<vmem>>, vector<1x8x32xf32>,
    %c6 = arith.constant 6 : index
    %c0_41 = arith.constant 0 : index
    %c0_42 = arith.constant 0 : index
    %108 = vector.load %arg10[%c6, %c0_41, %c0_42] : memref<8x8x128xf32, #tpu.memory_space<vmem>>, vector<1x8x128xf32>
    %109 = vector.shape_cast %108 : vector<1x8x128xf32> to vector<8x128xf32>
    %110 = vector.extract_strided_slice %84 {offsets = [0, 128], sizes = [8, 128], strides = [1, 1]} : vector<8x256xf32> to vector<8x128xf32>
    %111 = arith.addf %109, %110 : vector<8x128xf32>
    %112 = vector.extract_strided_slice %111 {offsets = [0, 0], sizes = [8, 96], strides = [1, 1]} : vector<8x128xf32> to vector<8x96xf32>
    %113 = arith.negf %112 : vector<8x96xf32>
    %114 = math.exp %113 : vector<8x96xf32>
    %cst_43 = arith.constant 1.000000e+00 : f32
    %115 = vector.broadcast %cst_43 : f32 to vector<8x96xf32>
    %116 = arith.addf %115, %114 : vector<8x96xf32>
    %117 = arith.divf %115, %116 : vector<8x96xf32>
    %118 = vector.extract_strided_slice %111 {offsets = [0, 96], sizes = [8, 32], strides = [1, 1]} : vector<8x128xf32> to vector<8x32xf32>
    %119 = math.tanh %118 : vector<8x32xf32>
    %120 = vector.extract_strided_slice %117 {offsets = [0, 32], sizes = [8, 32], strides = [1, 1]} : vector<8x96xf32> to vector<8x32xf32>
    %121 = arith.mulf %120, %81 : vector<8x32xf32>
    %122 = vector.extract_strided_slice %117 {offsets = [0, 0], sizes = [8, 32], strides = [1, 1]} : vector<8x96xf32> to vector<8x32xf32>
    %123 = arith.mulf %122, %119 : vector<8x32xf32>
    %124 = arith.addf %121, %123 : vector<8x32xf32>
    %125 = vector.extract_strided_slice %117 {offsets = [0, 64], sizes = [8, 32], strides = [1, 1]} : vector<8x96xf32> to vector<8x32xf32>
    %126 = math.tanh %124 : vector<8x32xf32>
    %127 = arith.mulf %125, %126 : vector<8x32xf32>
    %c6_44 = arith.constant 6 : index
    %c0_45 = arith.constant 0 : index
    %c0_46 = arith.constant 0 : index
    %128 = vector.load %arg12[%c6_44, %c0_45, %c0_46] : memref<8x8x32xf32, #tpu.memory_space<vmem>>, vector<1x8x32xf32>
    %129 = vector.shape_cast %128 : vector<1x8x32xf32> to vector<8x32xf32>
    %130 = vector.shape_cast %127 : vector<8x32xf32> to vector<1x8x32xf32>
    tpu.vector_store %arg12[%c6_44, %c0_45, %c0_46], %130 {strides = array<i32>} : memref<8x8x32xf32, #tpu.memory_space<vmem>>, vector<1x8x32xf32>,
    %cst_47 = arith.constant 6.000000e+00 : f32
    %131 = vector.broadcast %cst_47 : f32 to vector<8x1xf32>
    %132 = arith.cmpf olt, %131, %0 : vector<8x1xf32>
    %133 = arith.extui %132 : vector<8x1xi1> to vector<8x1xi32>
    %134 = arith.sitofp %133 : vector<8x1xi32> to vector<8x1xf32>
    %135 = vector.broadcast %134 : vector<8x1xf32> to vector<8x32xf32>
    %136 = arith.mulf %135, %127 : vector<8x32xf32>
    %cst_48 = arith.constant 1.000000e+00 : f32
    %137 = vector.broadcast %cst_48 : f32 to vector<8x1xf32>
    %138 = arith.subf %137, %134 : vector<8x1xf32>
    %139 = vector.broadcast %138 : vector<8x1xf32> to vector<8x32xf32>
    %140 = arith.mulf %139, %74 : vector<8x32xf32>
    %141 = arith.addf %136, %140 : vector<8x32xf32>
    %142 = vector.broadcast %134 : vector<8x1xf32> to vector<8x32xf32>
    %143 = arith.mulf %142, %124 : vector<8x32xf32>
    %cst_49 = arith.constant 1.000000e+00 : f32
    %144 = vector.broadcast %cst_49 : f32 to vector<8x1xf32>
    %145 = arith.subf %144, %134 : vector<8x1xf32>
    %146 = vector.broadcast %145 : vector<8x1xf32> to vector<8x32xf32>
    %147 = arith.mulf %146, %81 : vector<8x32xf32>
    %148 = arith.addf %143, %147 : vector<8x32xf32>
    %149 = tpu.concatenate %104, %141 in 1 : vector<8x32xf32>, vector<8x32xf32> -> vector<8x64xf32>
    %150 = arith.truncf %149 : vector<8x64xf32> to vector<8x64xbf16>
    %cst_50 = arith.constant dense<0.000000e+00> : vector<8x256xf32>
    %151 = tpu.matmul %150, %1, %cst_50 {dimension_numbers = #tpu.dot_dimension_numbers<[1], [0], [0], [1], [0, 0, 1, 1], [], []>} : vector<8x64xbf16>, vector<64x256xbf16>, vector<8x256xf32> -> vector<8x256xf32>
    %c2 = arith.constant 2 : index
    %c0_51 = arith.constant 0 : index
    %c0_52 = arith.constant 0 : index
    %152 = vector.load %arg9[%c2, %c0_51, %c0_52] : memref<8x8x128xf32, #tpu.memory_space<vmem>>, vector<1x8x128xf32>
    %153 = vector.shape_cast %152 : vector<1x8x128xf32> to vector<8x128xf32>
    %154 = vector.extract_strided_slice %151 {offsets = [0, 0], sizes = [8, 128], strides = [1, 1]} : vector<8x256xf32> to vector<8x128xf32>
    %155 = arith.addf %153, %154 : vector<8x128xf32>
    %156 = vector.extract_strided_slice %155 {offsets = [0, 0], sizes = [8, 96], strides = [1, 1]} : vector<8x128xf32> to vector<8x96xf32>
    %157 = arith.negf %156 : vector<8x96xf32>
    %158 = math.exp %157 : vector<8x96xf32>
    %cst_53 = arith.constant 1.000000e+00 : f32
    %159 = vector.broadcast %cst_53 : f32 to vector<8x96xf32>
    %160 = arith.addf %159, %158 : vector<8x96xf32>
    %161 = arith.divf %159, %160 : vector<8x96xf32>
    %162 = vector.extract_strided_slice %155 {offsets = [0, 96], sizes = [8, 32], strides = [1, 1]} : vector<8x128xf32> to vector<8x32xf32>
    %163 = math.tanh %162 : vector<8x32xf32>
    %164 = vector.extract_strided_slice %161 {offsets = [0, 32], sizes = [8, 32], strides = [1, 1]} : vector<8x96xf32> to vector<8x32xf32>
    %165 = arith.mulf %164, %101 : vector<8x32xf32>
    %166 = vector.extract_strided_slice %161 {offsets = [0, 0], sizes = [8, 32], strides = [1, 1]} : vector<8x96xf32> to vector<8x32xf32>
    %167 = arith.mulf %166, %163 : vector<8x32xf32>
    %168 = arith.addf %165, %167 : vector<8x32xf32>
    %169 = vector.extract_strided_slice %161 {offsets = [0, 64], sizes = [8, 32], strides = [1, 1]} : vector<8x96xf32> to vector<8x32xf32>
    %170 = math.tanh %168 : vector<8x32xf32>
    %171 = arith.mulf %169, %170 : vector<8x32xf32>
    %c2_54 = arith.constant 2 : index
    %c0_55 = arith.constant 0 : index
    %c0_56 = arith.constant 0 : index
    %172 = vector.load %arg11[%c2_54, %c0_55, %c0_56] : memref<8x8x32xf32, #tpu.memory_space<vmem>>, vector<1x8x32xf32>
    %173 = vector.shape_cast %172 : vector<1x8x32xf32> to vector<8x32xf32>
    %174 = vector.shape_cast %171 : vector<8x32xf32> to vector<1x8x32xf32>
    tpu.vector_store %arg11[%c2_54, %c0_55, %c0_56], %174 {strides = array<i32>} : memref<8x8x32xf32, #tpu.memory_space<vmem>>, vector<1x8x32xf32>,
    %c5 = arith.constant 5 : index
    %c0_57 = arith.constant 0 : index
    %c0_58 = arith.constant 0 : index
    %175 = vector.load %arg10[%c5, %c0_57, %c0_58] : memref<8x8x128xf32, #tpu.memory_space<vmem>>, vector<1x8x128xf32>
    %176 = vector.shape_cast %175 : vector<1x8x128xf32> to vector<8x128xf32>
    %177 = vector.extract_strided_slice %151 {offsets = [0, 128], sizes = [8, 128], strides = [1, 1]} : vector<8x256xf32> to vector<8x128xf32>
    %178 = arith.addf %176, %177 : vector<8x128xf32>
    %179 = vector.extract_strided_slice %178 {offsets = [0, 0], sizes = [8, 96], strides = [1, 1]} : vector<8x128xf32> to vector<8x96xf32>
    %180 = arith.negf %179 : vector<8x96xf32>
    %181 = math.exp %180 : vector<8x96xf32>
    %cst_59 = arith.constant 1.000000e+00 : f32
    %182 = vector.broadcast %cst_59 : f32 to vector<8x96xf32>
    %183 = arith.addf %182, %181 : vector<8x96xf32>
    %184 = arith.divf %182, %183 : vector<8x96xf32>
    %185 = vector.extract_strided_slice %178 {offsets = [0, 96], sizes = [8, 32], strides = [1, 1]} : vector<8x128xf32> to vector<8x32xf32>
    %186 = math.tanh %185 : vector<8x32xf32>
    %187 = vector.extract_strided_slice %184 {offsets = [0, 32], sizes = [8, 32], strides = [1, 1]} : vector<8x96xf32> to vector<8x32xf32>
    %188 = arith.mulf %187, %148 : vector<8x32xf32>
    %189 = vector.extract_strided_slice %184 {offsets = [0, 0], sizes = [8, 32], strides = [1, 1]} : vector<8x96xf32> to vector<8x32xf32>
    %190 = arith.mulf %189, %186 : vector<8x32xf32>
    %191 = arith.addf %188, %190 : vector<8x32xf32>
    %192 = vector.extract_strided_slice %184 {offsets = [0, 64], sizes = [8, 32], strides = [1, 1]} : vector<8x96xf32> to vector<8x32xf32>
    %193 = math.tanh %191 : vector<8x32xf32>
    %194 = arith.mulf %192, %193 : vector<8x32xf32>
    %c5_60 = arith.constant 5 : index
    %c0_61 = arith.constant 0 : index
    %c0_62 = arith.constant 0 : index
    %195 = vector.load %arg12[%c5_60, %c0_61, %c0_62] : memref<8x8x32xf32, #tpu.memory_space<vmem>>, vector<1x8x32xf32>
    %196 = vector.shape_cast %195 : vector<1x8x32xf32> to vector<8x32xf32>
    %197 = vector.shape_cast %194 : vector<8x32xf32> to vector<1x8x32xf32>
    tpu.vector_store %arg12[%c5_60, %c0_61, %c0_62], %197 {strides = array<i32>} : memref<8x8x32xf32, #tpu.memory_space<vmem>>, vector<1x8x32xf32>,
    %cst_63 = arith.constant 5.000000e+00 : f32
    %198 = vector.broadcast %cst_63 : f32 to vector<8x1xf32>
    %199 = arith.cmpf olt, %198, %0 : vector<8x1xf32>
    %200 = arith.extui %199 : vector<8x1xi1> to vector<8x1xi32>
    %201 = arith.sitofp %200 : vector<8x1xi32> to vector<8x1xf32>
    %202 = vector.broadcast %201 : vector<8x1xf32> to vector<8x32xf32>
    %203 = arith.mulf %202, %194 : vector<8x32xf32>
    %cst_64 = arith.constant 1.000000e+00 : f32
    %204 = vector.broadcast %cst_64 : f32 to vector<8x1xf32>
    %205 = arith.subf %204, %201 : vector<8x1xf32>
    %206 = vector.broadcast %205 : vector<8x1xf32> to vector<8x32xf32>
    %207 = arith.mulf %206, %141 : vector<8x32xf32>
    %208 = arith.addf %203, %207 : vector<8x32xf32>
    %209 = vector.broadcast %201 : vector<8x1xf32> to vector<8x32xf32>
    %210 = arith.mulf %209, %191 : vector<8x32xf32>
    %cst_65 = arith.constant 1.000000e+00 : f32
    %211 = vector.broadcast %cst_65 : f32 to vector<8x1xf32>
    %212 = arith.subf %211, %201 : vector<8x1xf32>
    %213 = vector.broadcast %212 : vector<8x1xf32> to vector<8x32xf32>
    %214 = arith.mulf %213, %148 : vector<8x32xf32>
    %215 = arith.addf %210, %214 : vector<8x32xf32>
    %216 = tpu.concatenate %171, %208 in 1 : vector<8x32xf32>, vector<8x32xf32> -> vector<8x64xf32>
    %217 = arith.truncf %216 : vector<8x64xf32> to vector<8x64xbf16>
    %cst_66 = arith.constant dense<0.000000e+00> : vector<8x256xf32>
    %218 = tpu.matmul %217, %1, %cst_66 {dimension_numbers = #tpu.dot_dimension_numbers<[1], [0], [0], [1], [0, 0, 1, 1], [], []>} : vector<8x64xbf16>, vector<64x256xbf16>, vector<8x256xf32> -> vector<8x256xf32>
    %c3 = arith.constant 3 : index
    %c0_67 = arith.constant 0 : index
    %c0_68 = arith.constant 0 : index
    %219 = vector.load %arg9[%c3, %c0_67, %c0_68] : memref<8x8x128xf32, #tpu.memory_space<vmem>>, vector<1x8x128xf32>
    %220 = vector.shape_cast %219 : vector<1x8x128xf32> to vector<8x128xf32>
    %221 = vector.extract_strided_slice %218 {offsets = [0, 0], sizes = [8, 128], strides = [1, 1]} : vector<8x256xf32> to vector<8x128xf32>
    %222 = arith.addf %220, %221 : vector<8x128xf32>
    %223 = vector.extract_strided_slice %222 {offsets = [0, 0], sizes = [8, 96], strides = [1, 1]} : vector<8x128xf32> to vector<8x96xf32>
    %224 = arith.negf %223 : vector<8x96xf32>
    %225 = math.exp %224 : vector<8x96xf32>
    %cst_69 = arith.constant 1.000000e+00 : f32
    %226 = vector.broadcast %cst_69 : f32 to vector<8x96xf32>
    %227 = arith.addf %226, %225 : vector<8x96xf32>
    %228 = arith.divf %226, %227 : vector<8x96xf32>
    %229 = vector.extract_strided_slice %222 {offsets = [0, 96], sizes = [8, 32], strides = [1, 1]} : vector<8x128xf32> to vector<8x32xf32>
    %230 = math.tanh %229 : vector<8x32xf32>
    %231 = vector.extract_strided_slice %228 {offsets = [0, 32], sizes = [8, 32], strides = [1, 1]} : vector<8x96xf32> to vector<8x32xf32>
    %232 = arith.mulf %231, %168 : vector<8x32xf32>
    %233 = vector.extract_strided_slice %228 {offsets = [0, 0], sizes = [8, 32], strides = [1, 1]} : vector<8x96xf32> to vector<8x32xf32>
    %234 = arith.mulf %233, %230 : vector<8x32xf32>
    %235 = arith.addf %232, %234 : vector<8x32xf32>
    %236 = vector.extract_strided_slice %228 {offsets = [0, 64], sizes = [8, 32], strides = [1, 1]} : vector<8x96xf32> to vector<8x32xf32>
    %237 = math.tanh %235 : vector<8x32xf32>
    %238 = arith.mulf %236, %237 : vector<8x32xf32>
    %c3_70 = arith.constant 3 : index
    %c0_71 = arith.constant 0 : index
    %c0_72 = arith.constant 0 : index
    %239 = vector.load %arg11[%c3_70, %c0_71, %c0_72] : memref<8x8x32xf32, #tpu.memory_space<vmem>>, vector<1x8x32xf32>
    %240 = vector.shape_cast %239 : vector<1x8x32xf32> to vector<8x32xf32>
    %241 = vector.shape_cast %238 : vector<8x32xf32> to vector<1x8x32xf32>
    tpu.vector_store %arg11[%c3_70, %c0_71, %c0_72], %241 {strides = array<i32>} : memref<8x8x32xf32, #tpu.memory_space<vmem>>, vector<1x8x32xf32>,
    %c4 = arith.constant 4 : index
    %c0_73 = arith.constant 0 : index
    %c0_74 = arith.constant 0 : index
    %242 = vector.load %arg10[%c4, %c0_73, %c0_74] : memref<8x8x128xf32, #tpu.memory_space<vmem>>, vector<1x8x128xf32>
    %243 = vector.shape_cast %242 : vector<1x8x128xf32> to vector<8x128xf32>
    %244 = vector.extract_strided_slice %218 {offsets = [0, 128], sizes = [8, 128], strides = [1, 1]} : vector<8x256xf32> to vector<8x128xf32>
    %245 = arith.addf %243, %244 : vector<8x128xf32>
    %246 = vector.extract_strided_slice %245 {offsets = [0, 0], sizes = [8, 96], strides = [1, 1]} : vector<8x128xf32> to vector<8x96xf32>
    %247 = arith.negf %246 : vector<8x96xf32>
    %248 = math.exp %247 : vector<8x96xf32>
    %cst_75 = arith.constant 1.000000e+00 : f32
    %249 = vector.broadcast %cst_75 : f32 to vector<8x96xf32>
    %250 = arith.addf %249, %248 : vector<8x96xf32>
    %251 = arith.divf %249, %250 : vector<8x96xf32>
    %252 = vector.extract_strided_slice %245 {offsets = [0, 96], sizes = [8, 32], strides = [1, 1]} : vector<8x128xf32> to vector<8x32xf32>
    %253 = math.tanh %252 : vector<8x32xf32>
    %254 = vector.extract_strided_slice %251 {offsets = [0, 32], sizes = [8, 32], strides = [1, 1]} : vector<8x96xf32> to vector<8x32xf32>
    %255 = arith.mulf %254, %215 : vector<8x32xf32>
    %256 = vector.extract_strided_slice %251 {offsets = [0, 0], sizes = [8, 32], strides = [1, 1]} : vector<8x96xf32> to vector<8x32xf32>
    %257 = arith.mulf %256, %253 : vector<8x32xf32>
    %258 = arith.addf %255, %257 : vector<8x32xf32>
    %259 = vector.extract_strided_slice %251 {offsets = [0, 64], sizes = [8, 32], strides = [1, 1]} : vector<8x96xf32> to vector<8x32xf32>
    %260 = math.tanh %258 : vector<8x32xf32>
    %261 = arith.mulf %259, %260 : vector<8x32xf32>
    %c4_76 = arith.constant 4 : index
    %c0_77 = arith.constant 0 : index
    %c0_78 = arith.constant 0 : index
    %262 = vector.load %arg12[%c4_76, %c0_77, %c0_78] : memref<8x8x32xf32, #tpu.memory_space<vmem>>, vector<1x8x32xf32>
    %263 = vector.shape_cast %262 : vector<1x8x32xf32> to vector<8x32xf32>
    %264 = vector.shape_cast %261 : vector<8x32xf32> to vector<1x8x32xf32>
    tpu.vector_store %arg12[%c4_76, %c0_77, %c0_78], %264 {strides = array<i32>} : memref<8x8x32xf32, #tpu.memory_space<vmem>>, vector<1x8x32xf32>,
    %cst_79 = arith.constant 4.000000e+00 : f32
    %265 = vector.broadcast %cst_79 : f32 to vector<8x1xf32>
    %266 = arith.cmpf olt, %265, %0 : vector<8x1xf32>
    %267 = arith.extui %266 : vector<8x1xi1> to vector<8x1xi32>
    %268 = arith.sitofp %267 : vector<8x1xi32> to vector<8x1xf32>
    %269 = vector.broadcast %268 : vector<8x1xf32> to vector<8x32xf32>
    %270 = arith.mulf %269, %261 : vector<8x32xf32>
    %cst_80 = arith.constant 1.000000e+00 : f32
    %271 = vector.broadcast %cst_80 : f32 to vector<8x1xf32>
    %272 = arith.subf %271, %268 : vector<8x1xf32>
    %273 = vector.broadcast %272 : vector<8x1xf32> to vector<8x32xf32>
    %274 = arith.mulf %273, %208 : vector<8x32xf32>
    %275 = arith.addf %270, %274 : vector<8x32xf32>
    %276 = vector.broadcast %268 : vector<8x1xf32> to vector<8x32xf32>
    %277 = arith.mulf %276, %258 : vector<8x32xf32>
    %cst_81 = arith.constant 1.000000e+00 : f32
    %278 = vector.broadcast %cst_81 : f32 to vector<8x1xf32>
    %279 = arith.subf %278, %268 : vector<8x1xf32>
    %280 = vector.broadcast %279 : vector<8x1xf32> to vector<8x32xf32>
    %281 = arith.mulf %280, %215 : vector<8x32xf32>
    %282 = arith.addf %277, %281 : vector<8x32xf32>
    %283 = tpu.concatenate %238, %275 in 1 : vector<8x32xf32>, vector<8x32xf32> -> vector<8x64xf32>
    %284 = arith.truncf %283 : vector<8x64xf32> to vector<8x64xbf16>
    %cst_82 = arith.constant dense<0.000000e+00> : vector<8x256xf32>
    %285 = tpu.matmul %284, %1, %cst_82 {dimension_numbers = #tpu.dot_dimension_numbers<[1], [0], [0], [1], [0, 0, 1, 1], [], []>} : vector<8x64xbf16>, vector<64x256xbf16>, vector<8x256xf32> -> vector<8x256xf32>
    %c4_83 = arith.constant 4 : index
    %c0_84 = arith.constant 0 : index
    %c0_85 = arith.constant 0 : index
    %286 = vector.load %arg9[%c4_83, %c0_84, %c0_85] : memref<8x8x128xf32, #tpu.memory_space<vmem>>, vector<1x8x128xf32>
    %287 = vector.shape_cast %286 : vector<1x8x128xf32> to vector<8x128xf32>
    %288 = vector.extract_strided_slice %285 {offsets = [0, 0], sizes = [8, 128], strides = [1, 1]} : vector<8x256xf32> to vector<8x128xf32>
    %289 = arith.addf %287, %288 : vector<8x128xf32>
    %290 = vector.extract_strided_slice %289 {offsets = [0, 0], sizes = [8, 96], strides = [1, 1]} : vector<8x128xf32> to vector<8x96xf32>
    %291 = arith.negf %290 : vector<8x96xf32>
    %292 = math.exp %291 : vector<8x96xf32>
    %cst_86 = arith.constant 1.000000e+00 : f32
    %293 = vector.broadcast %cst_86 : f32 to vector<8x96xf32>
    %294 = arith.addf %293, %292 : vector<8x96xf32>
    %295 = arith.divf %293, %294 : vector<8x96xf32>
    %296 = vector.extract_strided_slice %289 {offsets = [0, 96], sizes = [8, 32], strides = [1, 1]} : vector<8x128xf32> to vector<8x32xf32>
    %297 = math.tanh %296 : vector<8x32xf32>
    %298 = vector.extract_strided_slice %295 {offsets = [0, 32], sizes = [8, 32], strides = [1, 1]} : vector<8x96xf32> to vector<8x32xf32>
    %299 = arith.mulf %298, %235 : vector<8x32xf32>
    %300 = vector.extract_strided_slice %295 {offsets = [0, 0], sizes = [8, 32], strides = [1, 1]} : vector<8x96xf32> to vector<8x32xf32>
    %301 = arith.mulf %300, %297 : vector<8x32xf32>
    %302 = arith.addf %299, %301 : vector<8x32xf32>
    %303 = vector.extract_strided_slice %295 {offsets = [0, 64], sizes = [8, 32], strides = [1, 1]} : vector<8x96xf32> to vector<8x32xf32>
    %304 = math.tanh %302 : vector<8x32xf32>
    %305 = arith.mulf %303, %304 : vector<8x32xf32>
    %c4_87 = arith.constant 4 : index
    %c0_88 = arith.constant 0 : index
    %c0_89 = arith.constant 0 : index
    %306 = vector.load %arg11[%c4_87, %c0_88, %c0_89] : memref<8x8x32xf32, #tpu.memory_space<vmem>>, vector<1x8x32xf32>
    %307 = vector.shape_cast %306 : vector<1x8x32xf32> to vector<8x32xf32>
    %308 = vector.shape_cast %305 : vector<8x32xf32> to vector<1x8x32xf32>
    tpu.vector_store %arg11[%c4_87, %c0_88, %c0_89], %308 {strides = array<i32>} : memref<8x8x32xf32, #tpu.memory_space<vmem>>, vector<1x8x32xf32>,
    %c3_90 = arith.constant 3 : index
    %c0_91 = arith.constant 0 : index
    %c0_92 = arith.constant 0 : index
    %309 = vector.load %arg10[%c3_90, %c0_91, %c0_92] : memref<8x8x128xf32, #tpu.memory_space<vmem>>, vector<1x8x128xf32>
    %310 = vector.shape_cast %309 : vector<1x8x128xf32> to vector<8x128xf32>
    %311 = vector.extract_strided_slice %285 {offsets = [0, 128], sizes = [8, 128], strides = [1, 1]} : vector<8x256xf32> to vector<8x128xf32>
    %312 = arith.addf %310, %311 : vector<8x128xf32>
    %313 = vector.extract_strided_slice %312 {offsets = [0, 0], sizes = [8, 96], strides = [1, 1]} : vector<8x128xf32> to vector<8x96xf32>
    %314 = arith.negf %313 : vector<8x96xf32>
    %315 = math.exp %314 : vector<8x96xf32>
    %cst_93 = arith.constant 1.000000e+00 : f32
    %316 = vector.broadcast %cst_93 : f32 to vector<8x96xf32>
    %317 = arith.addf %316, %315 : vector<8x96xf32>
    %318 = arith.divf %316, %317 : vector<8x96xf32>
    %319 = vector.extract_strided_slice %312 {offsets = [0, 96], sizes = [8, 32], strides = [1, 1]} : vector<8x128xf32> to vector<8x32xf32>
    %320 = math.tanh %319 : vector<8x32xf32>
    %321 = vector.extract_strided_slice %318 {offsets = [0, 32], sizes = [8, 32], strides = [1, 1]} : vector<8x96xf32> to vector<8x32xf32>
    %322 = arith.mulf %321, %282 : vector<8x32xf32>
    %323 = vector.extract_strided_slice %318 {offsets = [0, 0], sizes = [8, 32], strides = [1, 1]} : vector<8x96xf32> to vector<8x32xf32>
    %324 = arith.mulf %323, %320 : vector<8x32xf32>
    %325 = arith.addf %322, %324 : vector<8x32xf32>
    %326 = vector.extract_strided_slice %318 {offsets = [0, 64], sizes = [8, 32], strides = [1, 1]} : vector<8x96xf32> to vector<8x32xf32>
    %327 = math.tanh %325 : vector<8x32xf32>
    %328 = arith.mulf %326, %327 : vector<8x32xf32>
    %c3_94 = arith.constant 3 : index
    %c0_95 = arith.constant 0 : index
    %c0_96 = arith.constant 0 : index
    %329 = vector.load %arg12[%c3_94, %c0_95, %c0_96] : memref<8x8x32xf32, #tpu.memory_space<vmem>>, vector<1x8x32xf32>
    %330 = vector.shape_cast %329 : vector<1x8x32xf32> to vector<8x32xf32>
    %331 = vector.shape_cast %328 : vector<8x32xf32> to vector<1x8x32xf32>
    tpu.vector_store %arg12[%c3_94, %c0_95, %c0_96], %331 {strides = array<i32>} : memref<8x8x32xf32, #tpu.memory_space<vmem>>, vector<1x8x32xf32>,
    %cst_97 = arith.constant 3.000000e+00 : f32
    %332 = vector.broadcast %cst_97 : f32 to vector<8x1xf32>
    %333 = arith.cmpf olt, %332, %0 : vector<8x1xf32>
    %334 = arith.extui %333 : vector<8x1xi1> to vector<8x1xi32>
    %335 = arith.sitofp %334 : vector<8x1xi32> to vector<8x1xf32>
    %336 = vector.broadcast %335 : vector<8x1xf32> to vector<8x32xf32>
    %337 = arith.mulf %336, %328 : vector<8x32xf32>
    %cst_98 = arith.constant 1.000000e+00 : f32
    %338 = vector.broadcast %cst_98 : f32 to vector<8x1xf32>
    %339 = arith.subf %338, %335 : vector<8x1xf32>
    %340 = vector.broadcast %339 : vector<8x1xf32> to vector<8x32xf32>
    %341 = arith.mulf %340, %275 : vector<8x32xf32>
    %342 = arith.addf %337, %341 : vector<8x32xf32>
    %343 = vector.broadcast %335 : vector<8x1xf32> to vector<8x32xf32>
    %344 = arith.mulf %343, %325 : vector<8x32xf32>
    %cst_99 = arith.constant 1.000000e+00 : f32
    %345 = vector.broadcast %cst_99 : f32 to vector<8x1xf32>
    %346 = arith.subf %345, %335 : vector<8x1xf32>
    %347 = vector.broadcast %346 : vector<8x1xf32> to vector<8x32xf32>
    %348 = arith.mulf %347, %282 : vector<8x32xf32>
    %349 = arith.addf %344, %348 : vector<8x32xf32>
    %350 = tpu.concatenate %305, %342 in 1 : vector<8x32xf32>, vector<8x32xf32> -> vector<8x64xf32>
    %351 = arith.truncf %350 : vector<8x64xf32> to vector<8x64xbf16>
    %cst_100 = arith.constant dense<0.000000e+00> : vector<8x256xf32>
    %352 = tpu.matmul %351, %1, %cst_100 {dimension_numbers = #tpu.dot_dimension_numbers<[1], [0], [0], [1], [0, 0, 1, 1], [], []>} : vector<8x64xbf16>, vector<64x256xbf16>, vector<8x256xf32> -> vector<8x256xf32>
    %c5_101 = arith.constant 5 : index
    %c0_102 = arith.constant 0 : index
    %c0_103 = arith.constant 0 : index
    %353 = vector.load %arg9[%c5_101, %c0_102, %c0_103] : memref<8x8x128xf32, #tpu.memory_space<vmem>>, vector<1x8x128xf32>
    %354 = vector.shape_cast %353 : vector<1x8x128xf32> to vector<8x128xf32>
    %355 = vector.extract_strided_slice %352 {offsets = [0, 0], sizes = [8, 128], strides = [1, 1]} : vector<8x256xf32> to vector<8x128xf32>
    %356 = arith.addf %354, %355 : vector<8x128xf32>
    %357 = vector.extract_strided_slice %356 {offsets = [0, 0], sizes = [8, 96], strides = [1, 1]} : vector<8x128xf32> to vector<8x96xf32>
    %358 = arith.negf %357 : vector<8x96xf32>
    %359 = math.exp %358 : vector<8x96xf32>
    %cst_104 = arith.constant 1.000000e+00 : f32
    %360 = vector.broadcast %cst_104 : f32 to vector<8x96xf32>
    %361 = arith.addf %360, %359 : vector<8x96xf32>
    %362 = arith.divf %360, %361 : vector<8x96xf32>
    %363 = vector.extract_strided_slice %356 {offsets = [0, 96], sizes = [8, 32], strides = [1, 1]} : vector<8x128xf32> to vector<8x32xf32>
    %364 = math.tanh %363 : vector<8x32xf32>
    %365 = vector.extract_strided_slice %362 {offsets = [0, 32], sizes = [8, 32], strides = [1, 1]} : vector<8x96xf32> to vector<8x32xf32>
    %366 = arith.mulf %365, %302 : vector<8x32xf32>
    %367 = vector.extract_strided_slice %362 {offsets = [0, 0], sizes = [8, 32], strides = [1, 1]} : vector<8x96xf32> to vector<8x32xf32>
    %368 = arith.mulf %367, %364 : vector<8x32xf32>
    %369 = arith.addf %366, %368 : vector<8x32xf32>
    %370 = vector.extract_strided_slice %362 {offsets = [0, 64], sizes = [8, 32], strides = [1, 1]} : vector<8x96xf32> to vector<8x32xf32>
    %371 = math.tanh %369 : vector<8x32xf32>
    %372 = arith.mulf %370, %371 : vector<8x32xf32>
    %c5_105 = arith.constant 5 : index
    %c0_106 = arith.constant 0 : index
    %c0_107 = arith.constant 0 : index
    %373 = vector.load %arg11[%c5_105, %c0_106, %c0_107] : memref<8x8x32xf32, #tpu.memory_space<vmem>>, vector<1x8x32xf32>
    %374 = vector.shape_cast %373 : vector<1x8x32xf32> to vector<8x32xf32>
    %375 = vector.shape_cast %372 : vector<8x32xf32> to vector<1x8x32xf32>
    tpu.vector_store %arg11[%c5_105, %c0_106, %c0_107], %375 {strides = array<i32>} : memref<8x8x32xf32, #tpu.memory_space<vmem>>, vector<1x8x32xf32>,
    %c2_108 = arith.constant 2 : index
    %c0_109 = arith.constant 0 : index
    %c0_110 = arith.constant 0 : index
    %376 = vector.load %arg10[%c2_108, %c0_109, %c0_110] : memref<8x8x128xf32, #tpu.memory_space<vmem>>, vector<1x8x128xf32>
    %377 = vector.shape_cast %376 : vector<1x8x128xf32> to vector<8x128xf32>
    %378 = vector.extract_strided_slice %352 {offsets = [0, 128], sizes = [8, 128], strides = [1, 1]} : vector<8x256xf32> to vector<8x128xf32>
    %379 = arith.addf %377, %378 : vector<8x128xf32>
    %380 = vector.extract_strided_slice %379 {offsets = [0, 0], sizes = [8, 96], strides = [1, 1]} : vector<8x128xf32> to vector<8x96xf32>
    %381 = arith.negf %380 : vector<8x96xf32>
    %382 = math.exp %381 : vector<8x96xf32>
    %cst_111 = arith.constant 1.000000e+00 : f32
    %383 = vector.broadcast %cst_111 : f32 to vector<8x96xf32>
    %384 = arith.addf %383, %382 : vector<8x96xf32>
    %385 = arith.divf %383, %384 : vector<8x96xf32>
    %386 = vector.extract_strided_slice %379 {offsets = [0, 96], sizes = [8, 32], strides = [1, 1]} : vector<8x128xf32> to vector<8x32xf32>
    %387 = math.tanh %386 : vector<8x32xf32>
    %388 = vector.extract_strided_slice %385 {offsets = [0, 32], sizes = [8, 32], strides = [1, 1]} : vector<8x96xf32> to vector<8x32xf32>
    %389 = arith.mulf %388, %349 : vector<8x32xf32>
    %390 = vector.extract_strided_slice %385 {offsets = [0, 0], sizes = [8, 32], strides = [1, 1]} : vector<8x96xf32> to vector<8x32xf32>
    %391 = arith.mulf %390, %387 : vector<8x32xf32>
    %392 = arith.addf %389, %391 : vector<8x32xf32>
    %393 = vector.extract_strided_slice %385 {offsets = [0, 64], sizes = [8, 32], strides = [1, 1]} : vector<8x96xf32> to vector<8x32xf32>
    %394 = math.tanh %392 : vector<8x32xf32>
    %395 = arith.mulf %393, %394 : vector<8x32xf32>
    %c2_112 = arith.constant 2 : index
    %c0_113 = arith.constant 0 : index
    %c0_114 = arith.constant 0 : index
    %396 = vector.load %arg12[%c2_112, %c0_113, %c0_114] : memref<8x8x32xf32, #tpu.memory_space<vmem>>, vector<1x8x32xf32>
    %397 = vector.shape_cast %396 : vector<1x8x32xf32> to vector<8x32xf32>
    %398 = vector.shape_cast %395 : vector<8x32xf32> to vector<1x8x32xf32>
    tpu.vector_store %arg12[%c2_112, %c0_113, %c0_114], %398 {strides = array<i32>} : memref<8x8x32xf32, #tpu.memory_space<vmem>>, vector<1x8x32xf32>,
    %cst_115 = arith.constant 2.000000e+00 : f32
    %399 = vector.broadcast %cst_115 : f32 to vector<8x1xf32>
    %400 = arith.cmpf olt, %399, %0 : vector<8x1xf32>
    %401 = arith.extui %400 : vector<8x1xi1> to vector<8x1xi32>
    %402 = arith.sitofp %401 : vector<8x1xi32> to vector<8x1xf32>
    %403 = vector.broadcast %402 : vector<8x1xf32> to vector<8x32xf32>
    %404 = arith.mulf %403, %395 : vector<8x32xf32>
    %cst_116 = arith.constant 1.000000e+00 : f32
    %405 = vector.broadcast %cst_116 : f32 to vector<8x1xf32>
    %406 = arith.subf %405, %402 : vector<8x1xf32>
    %407 = vector.broadcast %406 : vector<8x1xf32> to vector<8x32xf32>
    %408 = arith.mulf %407, %342 : vector<8x32xf32>
    %409 = arith.addf %404, %408 : vector<8x32xf32>
    %410 = vector.broadcast %402 : vector<8x1xf32> to vector<8x32xf32>
    %411 = arith.mulf %410, %392 : vector<8x32xf32>
    %cst_117 = arith.constant 1.000000e+00 : f32
    %412 = vector.broadcast %cst_117 : f32 to vector<8x1xf32>
    %413 = arith.subf %412, %402 : vector<8x1xf32>
    %414 = vector.broadcast %413 : vector<8x1xf32> to vector<8x32xf32>
    %415 = arith.mulf %414, %349 : vector<8x32xf32>
    %416 = arith.addf %411, %415 : vector<8x32xf32>
    %417 = tpu.concatenate %372, %409 in 1 : vector<8x32xf32>, vector<8x32xf32> -> vector<8x64xf32>
    %418 = arith.truncf %417 : vector<8x64xf32> to vector<8x64xbf16>
    %cst_118 = arith.constant dense<0.000000e+00> : vector<8x256xf32>
    %419 = tpu.matmul %418, %1, %cst_118 {dimension_numbers = #tpu.dot_dimension_numbers<[1], [0], [0], [1], [0, 0, 1, 1], [], []>} : vector<8x64xbf16>, vector<64x256xbf16>, vector<8x256xf32> -> vector<8x256xf32>
    %c6_119 = arith.constant 6 : index
    %c0_120 = arith.constant 0 : index
    %c0_121 = arith.constant 0 : index
    %420 = vector.load %arg9[%c6_119, %c0_120, %c0_121] : memref<8x8x128xf32, #tpu.memory_space<vmem>>, vector<1x8x128xf32>
    %421 = vector.shape_cast %420 : vector<1x8x128xf32> to vector<8x128xf32>
    %422 = vector.extract_strided_slice %419 {offsets = [0, 0], sizes = [8, 128], strides = [1, 1]} : vector<8x256xf32> to vector<8x128xf32>
    %423 = arith.addf %421, %422 : vector<8x128xf32>
    %424 = vector.extract_strided_slice %423 {offsets = [0, 0], sizes = [8, 96], strides = [1, 1]} : vector<8x128xf32> to vector<8x96xf32>
    %425 = arith.negf %424 : vector<8x96xf32>
    %426 = math.exp %425 : vector<8x96xf32>
    %cst_122 = arith.constant 1.000000e+00 : f32
    %427 = vector.broadcast %cst_122 : f32 to vector<8x96xf32>
    %428 = arith.addf %427, %426 : vector<8x96xf32>
    %429 = arith.divf %427, %428 : vector<8x96xf32>
    %430 = vector.extract_strided_slice %423 {offsets = [0, 96], sizes = [8, 32], strides = [1, 1]} : vector<8x128xf32> to vector<8x32xf32>
    %431 = math.tanh %430 : vector<8x32xf32>
    %432 = vector.extract_strided_slice %429 {offsets = [0, 32], sizes = [8, 32], strides = [1, 1]} : vector<8x96xf32> to vector<8x32xf32>
    %433 = arith.mulf %432, %369 : vector<8x32xf32>
    %434 = vector.extract_strided_slice %429 {offsets = [0, 0], sizes = [8, 32], strides = [1, 1]} : vector<8x96xf32> to vector<8x32xf32>
    %435 = arith.mulf %434, %431 : vector<8x32xf32>
    %436 = arith.addf %433, %435 : vector<8x32xf32>
    %437 = vector.extract_strided_slice %429 {offsets = [0, 64], sizes = [8, 32], strides = [1, 1]} : vector<8x96xf32> to vector<8x32xf32>
    %438 = math.tanh %436 : vector<8x32xf32>
    %439 = arith.mulf %437, %438 : vector<8x32xf32>
    %c6_123 = arith.constant 6 : index
    %c0_124 = arith.constant 0 : index
    %c0_125 = arith.constant 0 : index
    %440 = vector.load %arg11[%c6_123, %c0_124, %c0_125] : memref<8x8x32xf32, #tpu.memory_space<vmem>>, vector<1x8x32xf32>
    %441 = vector.shape_cast %440 : vector<1x8x32xf32> to vector<8x32xf32>
    %442 = vector.shape_cast %439 : vector<8x32xf32> to vector<1x8x32xf32>
    tpu.vector_store %arg11[%c6_123, %c0_124, %c0_125], %442 {strides = array<i32>} : memref<8x8x32xf32, #tpu.memory_space<vmem>>, vector<1x8x32xf32>,
    %c1_126 = arith.constant 1 : index
    %c0_127 = arith.constant 0 : index
    %c0_128 = arith.constant 0 : index
    %443 = vector.load %arg10[%c1_126, %c0_127, %c0_128] : memref<8x8x128xf32, #tpu.memory_space<vmem>>, vector<1x8x128xf32>
    %444 = vector.shape_cast %443 : vector<1x8x128xf32> to vector<8x128xf32>
    %445 = vector.extract_strided_slice %419 {offsets = [0, 128], sizes = [8, 128], strides = [1, 1]} : vector<8x256xf32> to vector<8x128xf32>
    %446 = arith.addf %444, %445 : vector<8x128xf32>
    %447 = vector.extract_strided_slice %446 {offsets = [0, 0], sizes = [8, 96], strides = [1, 1]} : vector<8x128xf32> to vector<8x96xf32>
    %448 = arith.negf %447 : vector<8x96xf32>
    %449 = math.exp %448 : vector<8x96xf32>
    %cst_129 = arith.constant 1.000000e+00 : f32
    %450 = vector.broadcast %cst_129 : f32 to vector<8x96xf32>
    %451 = arith.addf %450, %449 : vector<8x96xf32>
    %452 = arith.divf %450, %451 : vector<8x96xf32>
    %453 = vector.extract_strided_slice %446 {offsets = [0, 96], sizes = [8, 32], strides = [1, 1]} : vector<8x128xf32> to vector<8x32xf32>
    %454 = math.tanh %453 : vector<8x32xf32>
    %455 = vector.extract_strided_slice %452 {offsets = [0, 32], sizes = [8, 32], strides = [1, 1]} : vector<8x96xf32> to vector<8x32xf32>
    %456 = arith.mulf %455, %416 : vector<8x32xf32>
    %457 = vector.extract_strided_slice %452 {offsets = [0, 0], sizes = [8, 32], strides = [1, 1]} : vector<8x96xf32> to vector<8x32xf32>
    %458 = arith.mulf %457, %454 : vector<8x32xf32>
    %459 = arith.addf %456, %458 : vector<8x32xf32>
    %460 = vector.extract_strided_slice %452 {offsets = [0, 64], sizes = [8, 32], strides = [1, 1]} : vector<8x96xf32> to vector<8x32xf32>
    %461 = math.tanh %459 : vector<8x32xf32>
    %462 = arith.mulf %460, %461 : vector<8x32xf32>
    %c1_130 = arith.constant 1 : index
    %c0_131 = arith.constant 0 : index
    %c0_132 = arith.constant 0 : index
    %463 = vector.load %arg12[%c1_130, %c0_131, %c0_132] : memref<8x8x32xf32, #tpu.memory_space<vmem>>, vector<1x8x32xf32>
    %464 = vector.shape_cast %463 : vector<1x8x32xf32> to vector<8x32xf32>
    %465 = vector.shape_cast %462 : vector<8x32xf32> to vector<1x8x32xf32>
    tpu.vector_store %arg12[%c1_130, %c0_131, %c0_132], %465 {strides = array<i32>} : memref<8x8x32xf32, #tpu.memory_space<vmem>>, vector<1x8x32xf32>,
    %cst_133 = arith.constant 1.000000e+00 : f32
    %466 = vector.broadcast %cst_133 : f32 to vector<8x1xf32>
    %467 = arith.cmpf olt, %466, %0 : vector<8x1xf32>
    %468 = arith.extui %467 : vector<8x1xi1> to vector<8x1xi32>
    %469 = arith.sitofp %468 : vector<8x1xi32> to vector<8x1xf32>
    %470 = vector.broadcast %469 : vector<8x1xf32> to vector<8x32xf32>
    %471 = arith.mulf %470, %462 : vector<8x32xf32>
    %cst_134 = arith.constant 1.000000e+00 : f32
    %472 = vector.broadcast %cst_134 : f32 to vector<8x1xf32>
    %473 = arith.subf %472, %469 : vector<8x1xf32>
    %474 = vector.broadcast %473 : vector<8x1xf32> to vector<8x32xf32>
    %475 = arith.mulf %474, %409 : vector<8x32xf32>
    %476 = arith.addf %471, %475 : vector<8x32xf32>
    %477 = vector.broadcast %469 : vector<8x1xf32> to vector<8x32xf32>
    %478 = arith.mulf %477, %459 : vector<8x32xf32>
    %cst_135 = arith.constant 1.000000e+00 : f32
    %479 = vector.broadcast %cst_135 : f32 to vector<8x1xf32>
    %480 = arith.subf %479, %469 : vector<8x1xf32>
    %481 = vector.broadcast %480 : vector<8x1xf32> to vector<8x32xf32>
    %482 = arith.mulf %481, %416 : vector<8x32xf32>
    %483 = arith.addf %478, %482 : vector<8x32xf32>
    %484 = tpu.concatenate %439, %476 in 1 : vector<8x32xf32>, vector<8x32xf32> -> vector<8x64xf32>
    %485 = arith.truncf %484 : vector<8x64xf32> to vector<8x64xbf16>
    %cst_136 = arith.constant dense<0.000000e+00> : vector<8x256xf32>
    %486 = tpu.matmul %485, %1, %cst_136 {dimension_numbers = #tpu.dot_dimension_numbers<[1], [0], [0], [1], [0, 0, 1, 1], [], []>} : vector<8x64xbf16>, vector<64x256xbf16>, vector<8x256xf32> -> vector<8x256xf32>
    %c7_137 = arith.constant 7 : index
    %c0_138 = arith.constant 0 : index
    %c0_139 = arith.constant 0 : index
    %487 = vector.load %arg9[%c7_137, %c0_138, %c0_139] : memref<8x8x128xf32, #tpu.memory_space<vmem>>, vector<1x8x128xf32>
    %488 = vector.shape_cast %487 : vector<1x8x128xf32> to vector<8x128xf32>
    %489 = vector.extract_strided_slice %486 {offsets = [0, 0], sizes = [8, 128], strides = [1, 1]} : vector<8x256xf32> to vector<8x128xf32>
    %490 = arith.addf %488, %489 : vector<8x128xf32>
    %491 = vector.extract_strided_slice %490 {offsets = [0, 0], sizes = [8, 96], strides = [1, 1]} : vector<8x128xf32> to vector<8x96xf32>
    %492 = arith.negf %491 : vector<8x96xf32>
    %493 = math.exp %492 : vector<8x96xf32>
    %cst_140 = arith.constant 1.000000e+00 : f32
    %494 = vector.broadcast %cst_140 : f32 to vector<8x96xf32>
    %495 = arith.addf %494, %493 : vector<8x96xf32>
    %496 = arith.divf %494, %495 : vector<8x96xf32>
    %497 = vector.extract_strided_slice %490 {offsets = [0, 96], sizes = [8, 32], strides = [1, 1]} : vector<8x128xf32> to vector<8x32xf32>
    %498 = math.tanh %497 : vector<8x32xf32>
    %499 = vector.extract_strided_slice %496 {offsets = [0, 32], sizes = [8, 32], strides = [1, 1]} : vector<8x96xf32> to vector<8x32xf32>
    %500 = arith.mulf %499, %436 : vector<8x32xf32>
    %501 = vector.extract_strided_slice %496 {offsets = [0, 0], sizes = [8, 32], strides = [1, 1]} : vector<8x96xf32> to vector<8x32xf32>
    %502 = arith.mulf %501, %498 : vector<8x32xf32>
    %503 = arith.addf %500, %502 : vector<8x32xf32>
    %504 = vector.extract_strided_slice %496 {offsets = [0, 64], sizes = [8, 32], strides = [1, 1]} : vector<8x96xf32> to vector<8x32xf32>
    %505 = math.tanh %503 : vector<8x32xf32>
    %506 = arith.mulf %504, %505 : vector<8x32xf32>
    %c7_141 = arith.constant 7 : index
    %c0_142 = arith.constant 0 : index
    %c0_143 = arith.constant 0 : index
    %507 = vector.load %arg11[%c7_141, %c0_142, %c0_143] : memref<8x8x32xf32, #tpu.memory_space<vmem>>, vector<1x8x32xf32>
    %508 = vector.shape_cast %507 : vector<1x8x32xf32> to vector<8x32xf32>
    %509 = vector.shape_cast %506 : vector<8x32xf32> to vector<1x8x32xf32>
    tpu.vector_store %arg11[%c7_141, %c0_142, %c0_143], %509 {strides = array<i32>} : memref<8x8x32xf32, #tpu.memory_space<vmem>>, vector<1x8x32xf32>,
    %c0_144 = arith.constant 0 : index
    %c0_145 = arith.constant 0 : index
    %c0_146 = arith.constant 0 : index
    %510 = vector.load %arg10[%c0_144, %c0_145, %c0_146] : memref<8x8x128xf32, #tpu.memory_space<vmem>>, vector<1x8x128xf32>
    %511 = vector.shape_cast %510 : vector<1x8x128xf32> to vector<8x128xf32>
    %512 = vector.extract_strided_slice %486 {offsets = [0, 128], sizes = [8, 128], strides = [1, 1]} : vector<8x256xf32> to vector<8x128xf32>
    %513 = arith.addf %511, %512 : vector<8x128xf32>
    %514 = vector.extract_strided_slice %513 {offsets = [0, 0], sizes = [8, 96], strides = [1, 1]} : vector<8x128xf32> to vector<8x96xf32>
    %515 = arith.negf %514 : vector<8x96xf32>
    %516 = math.exp %515 : vector<8x96xf32>
    %cst_147 = arith.constant 1.000000e+00 : f32
    %517 = vector.broadcast %cst_147 : f32 to vector<8x96xf32>
    %518 = arith.addf %517, %516 : vector<8x96xf32>
    %519 = arith.divf %517, %518 : vector<8x96xf32>
    %520 = vector.extract_strided_slice %513 {offsets = [0, 96], sizes = [8, 32], strides = [1, 1]} : vector<8x128xf32> to vector<8x32xf32>
    %521 = math.tanh %520 : vector<8x32xf32>
    %522 = vector.extract_strided_slice %519 {offsets = [0, 32], sizes = [8, 32], strides = [1, 1]} : vector<8x96xf32> to vector<8x32xf32>
    %523 = arith.mulf %522, %483 : vector<8x32xf32>
    %524 = vector.extract_strided_slice %519 {offsets = [0, 0], sizes = [8, 32], strides = [1, 1]} : vector<8x96xf32> to vector<8x32xf32>
    %525 = arith.mulf %524, %521 : vector<8x32xf32>
    %526 = arith.addf %523, %525 : vector<8x32xf32>
    %527 = vector.extract_strided_slice %519 {offsets = [0, 64], sizes = [8, 32], strides = [1, 1]} : vector<8x96xf32> to vector<8x32xf32>
    %528 = math.tanh %526 : vector<8x32xf32>
    %529 = arith.mulf %527, %528 : vector<8x32xf32>
    %c0_148 = arith.constant 0 : index
    %c0_149 = arith.constant 0 : index
    %c0_150 = arith.constant 0 : index
    %530 = vector.load %arg12[%c0_148, %c0_149, %c0_150] : memref<8x8x32xf32, #tpu.memory_space<vmem>>, vector<1x8x32xf32>
    %531 = vector.shape_cast %530 : vector<1x8x32xf32> to vector<8x32xf32>
    %532 = vector.shape_cast %529 : vector<8x32xf32> to vector<1x8x32xf32>
    tpu.vector_store %arg12[%c0_148, %c0_149, %c0_150], %532 {strides = array<i32>} : memref<8x8x32xf32, #tpu.memory_space<vmem>>, vector<1x8x32xf32>,
    %cst_151 = arith.constant 0.000000e+00 : f32
    %533 = vector.broadcast %cst_151 : f32 to vector<8x1xf32>
    %534 = arith.cmpf olt, %533, %0 : vector<8x1xf32>
    %535 = arith.extui %534 : vector<8x1xi1> to vector<8x1xi32>
    %536 = arith.sitofp %535 : vector<8x1xi32> to vector<8x1xf32>
    %c0_152 = arith.constant 0 : index
    %c0_153 = arith.constant 0 : index
    %c0_154 = arith.constant 0 : index
    %537 = vector.load %arg11[%c0_152, %c0_153, %c0_154] : memref<8x8x32xf32, #tpu.memory_space<vmem>>, vector<1x8x32xf32>
    %538 = vector.shape_cast %537 : vector<1x8x32xf32> to vector<8x32xf32>
    %c0_155 = arith.constant 0 : index
    %c0_156 = arith.constant 0 : index
    %c0_157 = arith.constant 0 : index
    %539 = vector.load %arg12[%c0_155, %c0_156, %c0_157] : memref<8x8x32xf32, #tpu.memory_space<vmem>>, vector<1x8x32xf32>
    %540 = vector.shape_cast %539 : vector<1x8x32xf32> to vector<8x32xf32>
    %541 = arith.addf %538, %540 : vector<8x32xf32>
    %542 = vector.broadcast %536 : vector<8x1xf32> to vector<8x32xf32>
    %543 = arith.mulf %541, %542 : vector<8x32xf32>
    %544 = vector.shape_cast %543 : vector<8x32xf32> to vector<8x1x32xf32>
    %c0_158 = arith.constant 0 : index
    %c0_159 = arith.constant 0 : index
    %c0_160 = arith.constant 0 : index
    %545 = vector.load %arg13[%c0_158, %c0_159, %c0_160] : memref<8x8x32xf32, #tpu.memory_space<vmem>>, vector<8x1x32xf32>
    tpu.vector_store %arg13[%c0_158, %c0_159, %c0_160], %544 {strides = array<i32>} : memref<8x8x32xf32, #tpu.memory_space<vmem>>, vector<8x1x32xf32>,
    %cst_161 = arith.constant 1.000000e+00 : f32
    %546 = vector.broadcast %cst_161 : f32 to vector<8x1xf32>
    %547 = arith.cmpf olt, %546, %0 : vector<8x1xf32>
    %548 = arith.extui %547 : vector<8x1xi1> to vector<8x1xi32>
    %549 = arith.sitofp %548 : vector<8x1xi32> to vector<8x1xf32>
    %c1_162 = arith.constant 1 : index
    %c0_163 = arith.constant 0 : index
    %c0_164 = arith.constant 0 : index
    %550 = vector.load %arg11[%c1_162, %c0_163, %c0_164] : memref<8x8x32xf32, #tpu.memory_space<vmem>>, vector<1x8x32xf32>
    %551 = vector.shape_cast %550 : vector<1x8x32xf32> to vector<8x32xf32>
    %c1_165 = arith.constant 1 : index
    %c0_166 = arith.constant 0 : index
    %c0_167 = arith.constant 0 : index
    %552 = vector.load %arg12[%c1_165, %c0_166, %c0_167] : memref<8x8x32xf32, #tpu.memory_space<vmem>>, vector<1x8x32xf32>
    %553 = vector.shape_cast %552 : vector<1x8x32xf32> to vector<8x32xf32>
    %554 = arith.addf %551, %553 : vector<8x32xf32>
    %555 = vector.broadcast %549 : vector<8x1xf32> to vector<8x32xf32>
    %556 = arith.mulf %554, %555 : vector<8x32xf32>
    %557 = vector.shape_cast %556 : vector<8x32xf32> to vector<8x1x32xf32>
    %c0_168 = arith.constant 0 : index
    %c1_169 = arith.constant 1 : index
    %c0_170 = arith.constant 0 : index
    %558 = vector.load %arg13[%c0_168, %c1_169, %c0_170] : memref<8x8x32xf32, #tpu.memory_space<vmem>>, vector<8x1x32xf32>
    tpu.vector_store %arg13[%c0_168, %c1_169, %c0_170], %557 {strides = array<i32>} : memref<8x8x32xf32, #tpu.memory_space<vmem>>, vector<8x1x32xf32>,
    %cst_171 = arith.constant 2.000000e+00 : f32
    %559 = vector.broadcast %cst_171 : f32 to vector<8x1xf32>
    %560 = arith.cmpf olt, %559, %0 : vector<8x1xf32>
    %561 = arith.extui %560 : vector<8x1xi1> to vector<8x1xi32>
    %562 = arith.sitofp %561 : vector<8x1xi32> to vector<8x1xf32>
    %c2_172 = arith.constant 2 : index
    %c0_173 = arith.constant 0 : index
    %c0_174 = arith.constant 0 : index
    %563 = vector.load %arg11[%c2_172, %c0_173, %c0_174] : memref<8x8x32xf32, #tpu.memory_space<vmem>>, vector<1x8x32xf32>
    %564 = vector.shape_cast %563 : vector<1x8x32xf32> to vector<8x32xf32>
    %c2_175 = arith.constant 2 : index
    %c0_176 = arith.constant 0 : index
    %c0_177 = arith.constant 0 : index
    %565 = vector.load %arg12[%c2_175, %c0_176, %c0_177] : memref<8x8x32xf32, #tpu.memory_space<vmem>>, vector<1x8x32xf32>
    %566 = vector.shape_cast %565 : vector<1x8x32xf32> to vector<8x32xf32>
    %567 = arith.addf %564, %566 : vector<8x32xf32>
    %568 = vector.broadcast %562 : vector<8x1xf32> to vector<8x32xf32>
    %569 = arith.mulf %567, %568 : vector<8x32xf32>
    %570 = vector.shape_cast %569 : vector<8x32xf32> to vector<8x1x32xf32>
    %c0_178 = arith.constant 0 : index
    %c2_179 = arith.constant 2 : index
    %c0_180 = arith.constant 0 : index
    %571 = vector.load %arg13[%c0_178, %c2_179, %c0_180] : memref<8x8x32xf32, #tpu.memory_space<vmem>>, vector<8x1x32xf32>
    tpu.vector_store %arg13[%c0_178, %c2_179, %c0_180], %570 {strides = array<i32>} : memref<8x8x32xf32, #tpu.memory_space<vmem>>, vector<8x1x32xf32>,
    %cst_181 = arith.constant 3.000000e+00 : f32
    %572 = vector.broadcast %cst_181 : f32 to vector<8x1xf32>
    %573 = arith.cmpf olt, %572, %0 : vector<8x1xf32>
    %574 = arith.extui %573 : vector<8x1xi1> to vector<8x1xi32>
    %575 = arith.sitofp %574 : vector<8x1xi32> to vector<8x1xf32>
    %c3_182 = arith.constant 3 : index
    %c0_183 = arith.constant 0 : index
    %c0_184 = arith.constant 0 : index
    %576 = vector.load %arg11[%c3_182, %c0_183, %c0_184] : memref<8x8x32xf32, #tpu.memory_space<vmem>>, vector<1x8x32xf32>
    %577 = vector.shape_cast %576 : vector<1x8x32xf32> to vector<8x32xf32>
    %c3_185 = arith.constant 3 : index
    %c0_186 = arith.constant 0 : index
    %c0_187 = arith.constant 0 : index
    %578 = vector.load %arg12[%c3_185, %c0_186, %c0_187] : memref<8x8x32xf32, #tpu.memory_space<vmem>>, vector<1x8x32xf32>
    %579 = vector.shape_cast %578 : vector<1x8x32xf32> to vector<8x32xf32>
    %580 = arith.addf %577, %579 : vector<8x32xf32>
    %581 = vector.broadcast %575 : vector<8x1xf32> to vector<8x32xf32>
    %582 = arith.mulf %580, %581 : vector<8x32xf32>
    %583 = vector.shape_cast %582 : vector<8x32xf32> to vector<8x1x32xf32>
    %c0_188 = arith.constant 0 : index
    %c3_189 = arith.constant 3 : index
    %c0_190 = arith.constant 0 : index
    %584 = vector.load %arg13[%c0_188, %c3_189, %c0_190] : memref<8x8x32xf32, #tpu.memory_space<vmem>>, vector<8x1x32xf32>
    tpu.vector_store %arg13[%c0_188, %c3_189, %c0_190], %583 {strides = array<i32>} : memref<8x8x32xf32, #tpu.memory_space<vmem>>, vector<8x1x32xf32>,
    %cst_191 = arith.constant 4.000000e+00 : f32
    %585 = vector.broadcast %cst_191 : f32 to vector<8x1xf32>
    %586 = arith.cmpf olt, %585, %0 : vector<8x1xf32>
    %587 = arith.extui %586 : vector<8x1xi1> to vector<8x1xi32>
    %588 = arith.sitofp %587 : vector<8x1xi32> to vector<8x1xf32>
    %c4_192 = arith.constant 4 : index
    %c0_193 = arith.constant 0 : index
    %c0_194 = arith.constant 0 : index
    %589 = vector.load %arg11[%c4_192, %c0_193, %c0_194] : memref<8x8x32xf32, #tpu.memory_space<vmem>>, vector<1x8x32xf32>
    %590 = vector.shape_cast %589 : vector<1x8x32xf32> to vector<8x32xf32>
    %c4_195 = arith.constant 4 : index
    %c0_196 = arith.constant 0 : index
    %c0_197 = arith.constant 0 : index
    %591 = vector.load %arg12[%c4_195, %c0_196, %c0_197] : memref<8x8x32xf32, #tpu.memory_space<vmem>>, vector<1x8x32xf32>
    %592 = vector.shape_cast %591 : vector<1x8x32xf32> to vector<8x32xf32>
    %593 = arith.addf %590, %592 : vector<8x32xf32>
    %594 = vector.broadcast %588 : vector<8x1xf32> to vector<8x32xf32>
    %595 = arith.mulf %593, %594 : vector<8x32xf32>
    %596 = vector.shape_cast %595 : vector<8x32xf32> to vector<8x1x32xf32>
    %c0_198 = arith.constant 0 : index
    %c4_199 = arith.constant 4 : index
    %c0_200 = arith.constant 0 : index
    %597 = vector.load %arg13[%c0_198, %c4_199, %c0_200] : memref<8x8x32xf32, #tpu.memory_space<vmem>>, vector<8x1x32xf32>
    tpu.vector_store %arg13[%c0_198, %c4_199, %c0_200], %596 {strides = array<i32>} : memref<8x8x32xf32, #tpu.memory_space<vmem>>, vector<8x1x32xf32>,
    %cst_201 = arith.constant 5.000000e+00 : f32
    %598 = vector.broadcast %cst_201 : f32 to vector<8x1xf32>
    %599 = arith.cmpf olt, %598, %0 : vector<8x1xf32>
    %600 = arith.extui %599 : vector<8x1xi1> to vector<8x1xi32>
    %601 = arith.sitofp %600 : vector<8x1xi32> to vector<8x1xf32>
    %c5_202 = arith.constant 5 : index
    %c0_203 = arith.constant 0 : index
    %c0_204 = arith.constant 0 : index
    %602 = vector.load %arg11[%c5_202, %c0_203, %c0_204] : memref<8x8x32xf32, #tpu.memory_space<vmem>>, vector<1x8x32xf32>
    %603 = vector.shape_cast %602 : vector<1x8x32xf32> to vector<8x32xf32>
    %c5_205 = arith.constant 5 : index
    %c0_206 = arith.constant 0 : index
    %c0_207 = arith.constant 0 : index
    %604 = vector.load %arg12[%c5_205, %c0_206, %c0_207] : memref<8x8x32xf32, #tpu.memory_space<vmem>>, vector<1x8x32xf32>
    %605 = vector.shape_cast %604 : vector<1x8x32xf32> to vector<8x32xf32>
    %606 = arith.addf %603, %605 : vector<8x32xf32>
    %607 = vector.broadcast %601 : vector<8x1xf32> to vector<8x32xf32>
    %608 = arith.mulf %606, %607 : vector<8x32xf32>
    %609 = vector.shape_cast %608 : vector<8x32xf32> to vector<8x1x32xf32>
    %c0_208 = arith.constant 0 : index
    %c5_209 = arith.constant 5 : index
    %c0_210 = arith.constant 0 : index
    %610 = vector.load %arg13[%c0_208, %c5_209, %c0_210] : memref<8x8x32xf32, #tpu.memory_space<vmem>>, vector<8x1x32xf32>
    tpu.vector_store %arg13[%c0_208, %c5_209, %c0_210], %609 {strides = array<i32>} : memref<8x8x32xf32, #tpu.memory_space<vmem>>, vector<8x1x32xf32>,
    %cst_211 = arith.constant 6.000000e+00 : f32
    %611 = vector.broadcast %cst_211 : f32 to vector<8x1xf32>
    %612 = arith.cmpf olt, %611, %0 : vector<8x1xf32>
    %613 = arith.extui %612 : vector<8x1xi1> to vector<8x1xi32>
    %614 = arith.sitofp %613 : vector<8x1xi32> to vector<8x1xf32>
    %c6_212 = arith.constant 6 : index
    %c0_213 = arith.constant 0 : index
    %c0_214 = arith.constant 0 : index
    %615 = vector.load %arg11[%c6_212, %c0_213, %c0_214] : memref<8x8x32xf32, #tpu.memory_space<vmem>>, vector<1x8x32xf32>
    %616 = vector.shape_cast %615 : vector<1x8x32xf32> to vector<8x32xf32>
    %c6_215 = arith.constant 6 : index
    %c0_216 = arith.constant 0 : index
    %c0_217 = arith.constant 0 : index
    %617 = vector.load %arg12[%c6_215, %c0_216, %c0_217] : memref<8x8x32xf32, #tpu.memory_space<vmem>>, vector<1x8x32xf32>
    %618 = vector.shape_cast %617 : vector<1x8x32xf32> to vector<8x32xf32>
    %619 = arith.addf %616, %618 : vector<8x32xf32>
    %620 = vector.broadcast %614 : vector<8x1xf32> to vector<8x32xf32>
    %621 = arith.mulf %619, %620 : vector<8x32xf32>
    %622 = vector.shape_cast %621 : vector<8x32xf32> to vector<8x1x32xf32>
    %c0_218 = arith.constant 0 : index
    %c6_219 = arith.constant 6 : index
    %c0_220 = arith.constant 0 : index
    %623 = vector.load %arg13[%c0_218, %c6_219, %c0_220] : memref<8x8x32xf32, #tpu.memory_space<vmem>>, vector<8x1x32xf32>
    tpu.vector_store %arg13[%c0_218, %c6_219, %c0_220], %622 {strides = array<i32>} : memref<8x8x32xf32, #tpu.memory_space<vmem>>, vector<8x1x32xf32>,
    %cst_221 = arith.constant 7.000000e+00 : f32
    %624 = vector.broadcast %cst_221 : f32 to vector<8x1xf32>
    %625 = arith.cmpf olt, %624, %0 : vector<8x1xf32>
    %626 = arith.extui %625 : vector<8x1xi1> to vector<8x1xi32>
    %627 = arith.sitofp %626 : vector<8x1xi32> to vector<8x1xf32>
    %c7_222 = arith.constant 7 : index
    %c0_223 = arith.constant 0 : index
    %c0_224 = arith.constant 0 : index
    %628 = vector.load %arg11[%c7_222, %c0_223, %c0_224] : memref<8x8x32xf32, #tpu.memory_space<vmem>>, vector<1x8x32xf32>
    %629 = vector.shape_cast %628 : vector<1x8x32xf32> to vector<8x32xf32>
    %c7_225 = arith.constant 7 : index
    %c0_226 = arith.constant 0 : index
    %c0_227 = arith.constant 0 : index
    %630 = vector.load %arg12[%c7_225, %c0_226, %c0_227] : memref<8x8x32xf32, #tpu.memory_space<vmem>>, vector<1x8x32xf32>
    %631 = vector.shape_cast %630 : vector<1x8x32xf32> to vector<8x32xf32>
    %632 = arith.addf %629, %631 : vector<8x32xf32>
    %633 = vector.broadcast %627 : vector<8x1xf32> to vector<8x32xf32>
    %634 = arith.mulf %632, %633 : vector<8x32xf32>
    %635 = vector.shape_cast %634 : vector<8x32xf32> to vector<8x1x32xf32>
    %c0_228 = arith.constant 0 : index
    %c7_229 = arith.constant 7 : index
    %c0_230 = arith.constant 0 : index
    %636 = vector.load %arg13[%c0_228, %c7_229, %c0_230] : memref<8x8x32xf32, #tpu.memory_space<vmem>>, vector<8x1x32xf32>
    tpu.vector_store %arg13[%c0_228, %c7_229, %c0_230], %635 {strides = array<i32>} : memref<8x8x32xf32, #tpu.memory_space<vmem>>, vector<8x1x32xf32>,
    %c0_231 = arith.constant 0 : index
    %c0_232 = arith.constant 0 : index
    %c0_233 = arith.constant 0 : index
    %637 = vector.load %arg13[%c0_231, %c0_232, %c0_233] : memref<8x8x32xf32, #tpu.memory_space<vmem>>, vector<8x8x32xf32>
    %638 = vector.shape_cast %637 : vector<8x8x32xf32> to vector<64x32xf32>
    %639 = arith.truncf %638 : vector<64x32xf32> to vector<64x32xbf16>
    %c0_234 = arith.constant 0 : index
    %c0_235 = arith.constant 0 : index
    %640 = vector.load %arg7[%c0_234, %c0_235] : memref<32x96xbf16, #tpu.memory_space<vmem>>, vector<32x96xbf16>
    %cst_236 = arith.constant dense<0.000000e+00> : vector<64x96xf32>
    %641 = tpu.matmul %639, %640, %cst_236 {dimension_numbers = #tpu.dot_dimension_numbers<[1], [0], [0], [1], [0, 0, 1, 1], [], []>} : vector<64x32xbf16>, vector<32x96xbf16>, vector<64x96xf32> -> vector<64x96xf32>
    %642 = vector.shape_cast %641 : vector<64x96xf32> to vector<8x8x96xf32>
    %643 = vector.extract_strided_slice %642 {offsets = [0, 0, 0], sizes = [8, 8, 32], strides = [1, 1, 1]} : vector<8x8x96xf32> to vector<8x8x32xf32>
    %644 = vector.extract_strided_slice %642 {offsets = [0, 0, 32], sizes = [8, 8, 32], strides = [1, 1, 1]} : vector<8x8x96xf32> to vector<8x8x32xf32>
    %645 = vector.extract_strided_slice %642 {offsets = [0, 0, 64], sizes = [8, 8, 32], strides = [1, 1, 1]} : vector<8x8x96xf32> to vector<8x8x32xf32>
    %646 = arith.truncf %644 : vector<8x8x32xf32> to vector<8x8x32xbf16>
    %647 = arith.truncf %643 : vector<8x8x32xf32> to vector<8x8x32xbf16>
    "tpu.trace_start"() <{level = 10 : i32, message = "bqh,bkh->bqk"}> : () -> ()
    %cst_237 = arith.constant dense<0.000000e+00> : vector<8x8x8xf32>
    %648 = tpu.matmul %646, %647, %cst_237 {dimension_numbers = #tpu.dot_dimension_numbers<[2], [2], [1], [1], [0, 0, 0, 1, 1, 1], [0], [0]>} : vector<8x8x32xbf16>, vector<8x8x32xbf16>, vector<8x8x8xf32> -> vector<8x8x8xf32>
    %cst_238 = arith.constant 3.200000e+01 : f32
    "tpu.trace_stop"() : () -> ()
    %649 = math.sqrt %cst_238 : f32
    %cst_239 = arith.constant 1.000000e+00 : f32
    %650 = arith.divf %cst_239, %649 : f32
    %651 = vector.broadcast %650 : f32 to vector<8x8x8xf32>
    %652 = arith.mulf %648, %651 : vector<8x8x8xf32>
    %c0_240 = arith.constant 0 : index
    %c0_241 = arith.constant 0 : index
    %c0_242 = arith.constant 0 : index
    %653 = vector.load %arg3[%c0_240, %c0_241, %c0_242] : memref<8x1x8xf32, #tpu.memory_space<vmem>>, vector<8x1x8xf32>
    %cst_243 = arith.constant 1.000000e+00 : f32
    %654 = vector.broadcast %cst_243 : f32 to vector<8x1x8xf32>
    %655 = arith.subf %654, %653 : vector<8x1x8xf32>
    %cst_244 = arith.constant -1.000000e+05 : f32
    %656 = vector.broadcast %cst_244 : f32 to vector<8x1x8xf32>
    %657 = arith.mulf %655, %656 : vector<8x1x8xf32>
    %658 = vector.broadcast %657 : vector<8x1x8xf32> to vector<8x8x8xf32>
    %659 = arith.addf %652, %658 : vector<8x8x8xf32>
    %cst_245 = arith.constant dense<0xFF800000> : vector<8x8xf32>
    %660 = vector.multi_reduction <maximumf>, %659, %cst_245 [2] : vector<8x8x8xf32> to vector<8x8xf32>
    %cst_246 = arith.constant 0xFF800000 : f32
    %661 = vector.broadcast %cst_246 : f32 to vector<8x8xf32>
    %662 = arith.maximumf %661, %660 : vector<8x8xf32>
    %663 = vector.shape_cast %662 : vector<8x8xf32> to vector<8x8x1xf32>
    %664 = vector.broadcast %663 : vector<8x8x1xf32> to vector<8x8x8xf32>
    %665 = arith.subf %659, %664 : vector<8x8x8xf32>
    %666 = math.exp %665 : vector<8x8x8xf32>
    %cst_247 = arith.constant dense<0.000000e+00> : vector<8x8xf32>
    %667 = vector.multi_reduction <add>, %666, %cst_247 [2] : vector<8x8x8xf32> to vector<8x8xf32>
    %668 = vector.shape_cast %667 : vector<8x8xf32> to vector<8x8x1xf32>
    %669 = vector.broadcast %668 : vector<8x8x1xf32> to vector<8x8x8xf32>
    %670 = arith.divf %666, %669 : vector<8x8x8xf32>
    %671 = arith.truncf %670 : vector<8x8x8xf32> to vector<8x8x8xbf16>
    %672 = arith.truncf %645 : vector<8x8x32xf32> to vector<8x8x32xbf16>
    "tpu.trace_start"() <{level = 10 : i32, message = "bqk,bkh->bqh"}> : () -> ()
    %cst_248 = arith.constant dense<0.000000e+00> : vector<8x8x32xf32>
    %673 = tpu.matmul %671, %672, %cst_248 {dimension_numbers = #tpu.dot_dimension_numbers<[2], [1], [1], [2], [0, 0, 0, 1, 1, 2], [0], [0]>} : vector<8x8x8xbf16>, vector<8x8x32xbf16>, vector<8x8x32xf32> -> vector<8x8x32xf32>
    "tpu.trace_stop"() : () -> ()
    %cst_249 = arith.constant dense<0.000000e+00> : vector<8x32xf32>
    %674 = vector.multi_reduction <add>, %673, %cst_249 [1] : vector<8x8x32xf32> to vector<8x32xf32>
    %c0_250 = arith.constant 0 : index
    %c0_251 = arith.constant 0 : index
    %675 = vector.load %arg8[%c0_250, %c0_251] : memref<8x32xf32, #tpu.memory_space<vmem>>, vector<8x32xf32>
    tpu.vector_store %arg8[%c0_250, %c0_251], %674 {strides = array<i32>} : memref<8x32xf32, #tpu.memory_space<vmem>>, vector<8x32xf32>,
    return
  }
  func.func @transform_0(%arg0: i32) -> (i32, i32, i32) {
    %c0_i32 = arith.constant 0 : i32
    %c0_i32_0 = arith.constant 0 : i32
    %c0_i32_1 = arith.constant 0 : i32
    return %c0_i32, %arg0, %c0_i32_0 : i32, i32, i32
  }
  func.func @transform_1(%arg0: i32) -> (i32, i32) {
    %c0_i32 = arith.constant 0 : i32
    %c0_i32_0 = arith.constant 0 : i32
    return %arg0, %c0_i32 : i32, i32
  }
  func.func @transform_2(%arg0: i32) -> (i32, i32, i32) {
    %c0_i32 = arith.constant 0 : i32
    %c0_i32_0 = arith.constant 0 : i32
    %c0_i32_1 = arith.constant 0 : i32
    return %arg0, %c0_i32, %c0_i32_0 : i32, i32, i32
  }
  func.func @transform_3(%arg0: i32) -> (i32, i32) {
    %c0_i32 = arith.constant 0 : i32
    %c0_i32_0 = arith.constant 0 : i32
    %c0_i32_1 = arith.constant 0 : i32
    return %c0_i32, %c0_i32_0 : i32, i32
  }
  func.func @transform_4(%arg0: i32) -> (i32, i32) {
    %c0_i32 = arith.constant 0 : i32
    %c0_i32_0 = arith.constant 0 : i32
    %c0_i32_1 = arith.constant 0 : i32
    return %c0_i32, %c0_i32_0 : i32, i32
  }
  func.func @transform_5(%arg0: i32) -> (i32, i32) {
    %c0_i32 = arith.constant 0 : i32
    %c0_i32_0 = arith.constant 0 : i32
    %c0_i32_1 = arith.constant 0 : i32
    return %c0_i32, %c0_i32_0 : i32, i32
  }
  func.func @transform_6(%arg0: i32) -> (i32, i32) {
    %c0_i32 = arith.constant 0 : i32
    %c0_i32_0 = arith.constant 0 : i32
    %c0_i32_1 = arith.constant 0 : i32
    return %c0_i32, %c0_i32_0 : i32, i32
  }
  func.func @transform_7(%arg0: i32) -> (i32, i32) {
    %c0_i32 = arith.constant 0 : i32
    %c0_i32_0 = arith.constant 0 : i32
    return %arg0, %c0_i32 : i32, i32
  }
}

</mosaic_0001>

<llo_original>
// kernel: tpu_custom_call.1
$region0: #{tpu_custom_call.1}
  #allocation0 [shape = 'u32[]', space=smem, size = 0x4, offset = 0x4, fixed_abs, tag = 'smem constant byte address 0x4 - core index']
  #allocation1 [shape = 'u32[144,128]{1,0:T(1,128)}', space=vmem, size = 0x12000, scoped, tag = 'internal scratch']
  #allocation2 [shape = 'f32[8,8,128]{2,1,0:T(8,128)}', space=vmem, size = 0x8000, scoped, tag = 'scratch operand']
  #allocation3 [shape = 'f32[8,8,128]{2,1,0:T(8,128)}', space=vmem, size = 0x8000, scoped, tag = 'scratch operand']
  #allocation4 [shape = 'f32[8,8,32]{2,1,0:T(8,128)}', space=vmem, size = 0x8000, scoped, tag = 'scratch operand']
  #allocation5 [shape = 'f32[8,8,32]{2,1,0:T(8,128)}', space=vmem, size = 0x8000, scoped, tag = 'scratch operand']
  #allocation6 [shape = 'f32[8,8,32]{2,1,0:T(8,128)}', space=vmem, size = 0x8000, scoped, tag = 'scratch operand']
  %s0 = inlined_call_operand.hbm [shape: bf16[8,8,32], index: 0, kind: input, shape index: {}]
  %s1 = inlined_call_operand.vmem [shape: f32[8,1], index: 1, kind: input, shape index: {}]
  %s2 = inlined_call_operand.vmem [shape: f32[8,1,8], index: 2, kind: input, shape index: {}]
  %s3 = inlined_call_operand.hbm [shape: bf16[32,256], index: 3, kind: input, shape index: {}]
  %s4 = inlined_call_operand.hbm [shape: bf16[64,256], index: 4, kind: input, shape index: {}]
  %s5 = inlined_call_operand.vmem [shape: f32[1,256], index: 5, kind: input, shape index: {}]
  %s6 = inlined_call_operand.vmem [shape: bf16[32,96], index: 6, kind: input, shape index: {}]
  %s7 = inlined_call_operand.hbm [shape: f32[8,32], index: 7, kind: output, shape index: {}]
  %s8 = sld [smem:[#allocation0]]
  $region50: #{tpu_custom_call.1} parent=0
    _
  %s10 = ssub.s32 1, %s8
  %s11 = scalar_select 0, %s10, %s8
  $region1: #{tpu_custom_call.1} parent=0
    #allocation7 [shape = 'u8[16384]{0}', space=vmem, size = 0x4000, scoped, tag = 'input window, operand 0, single buffered']
    #allocation8 [shape = 's32[1]{0}', space=sflag, size = 0x4, scoped, tag = 'scoped memory for tpu_custom_call.1']
    #allocation9 [shape = 's32[1]{0}', space=sflag, size = 0x4, scoped, tag = 'scoped memory for tpu_custom_call.1']
    #allocation10 [shape = 'u8[16384]{0}', space=vmem, size = 0x4000, scoped, tag = 'input window, operand 3, single buffered']
    #allocation11 [shape = 's32[1]{0}', space=sflag, size = 0x4, scoped, tag = 'scoped memory for tpu_custom_call.1']
    #allocation12 [shape = 'u8[32768]{0}', space=vmem, size = 0x8000, scoped, tag = 'input window, operand 4, single buffered']
    #allocation13 [shape = 'u8[4096]{0}', space=vmem, size = 0x1000, scoped, tag = 'output window, operand 0, single buffered']
    %12 = vsyncpa [#allocation8], 0
    %13 = vsyncpa [#allocation11], 0
    %14 = vsyncpa [#allocation9], 0
    // Predicated region
    $region2: #{tpu_custom_call.1} parent=1 // pred_check
      _
    $region3: #{tpu_custom_call.1} parent=1 // pred_check_branch
      %16 = sbr.rel (0) target = $region5
    $region4: #{tpu_custom_call.1} parent=1 // pred_region
      %s18 = ssub.s32 512, 512
      %19 = vsyncadd [#allocation8], %s18
      %s20 = sshll.u32 [#allocation7], 4
      %s21 = int_to_ptr.vmem [resolvable:$true] %s20
      %26 = dma.hbm_to_vmem [thread:$0]  %s0, 512, %s21, [#allocation8], 64, 64, 4
    $region5: #{tpu_custom_call.1} parent=1 // pred_fallthru
      _
    // Predicated region
    $region6: #{tpu_custom_call.1} parent=1 // pred_check
      _
    $region7: #{tpu_custom_call.1} parent=1 // pred_check_branch
      %28 = sbr.rel (0) target = $region9
    $region8: #{tpu_custom_call.1} parent=1 // pred_region
      _
    $region9: #{tpu_custom_call.1} parent=1 // pred_fallthru
      _
    // Predicated region
    $region10: #{tpu_custom_call.1} parent=1 // pred_check
      _
    $region11: #{tpu_custom_call.1} parent=1 // pred_check_branch
      %30 = sbr.rel (0) target = $region13
    $region12: #{tpu_custom_call.1} parent=1 // pred_region
      _
    $region13: #{tpu_custom_call.1} parent=1 // pred_fallthru
      _
    // Predicated region
    $region14: #{tpu_custom_call.1} parent=1 // pred_check
      _
    $region15: #{tpu_custom_call.1} parent=1 // pred_check_branch
      %32 = sbr.rel (0) target = $region17
    $region16: #{tpu_custom_call.1} parent=1 // pred_region
      %s34 = ssub.s32 512, 512
      %35 = vsyncadd [#allocation11], %s34
      %s36 = sshll.u32 [#allocation10], 4
      %s37 = int_to_ptr.vmem [resolvable:$true] %s36
      %42 = dma.hbm_to_vmem [thread:$0]  %s3, 512, %s37, [#allocation11], 128, 128, 8
    $region17: #{tpu_custom_call.1} parent=1 // pred_fallthru
      _
    // Predicated region
    $region18: #{tpu_custom_call.1} parent=1 // pred_check
      _
    $region19: #{tpu_custom_call.1} parent=1 // pred_check_branch
      %44 = sbr.rel (0) target = $region21
    $region20: #{tpu_custom_call.1} parent=1 // pred_region
      %s46 = ssub.s32 1024, 1024
      %47 = vsyncadd [#allocation11], %s46
      %s48 = sshll.u32 [#allocation12], 4
      %s49 = int_to_ptr.vmem [resolvable:$true] %s48
      %54 = dma.hbm_to_vmem [thread:$0]  %s4, 1024, %s49, [#allocation11], 128, 128, 8
    $region21: #{tpu_custom_call.1} parent=1 // pred_fallthru
      _
    // Predicated region
    $region22: #{tpu_custom_call.1} parent=1 // pred_check
      _
    $region23: #{tpu_custom_call.1} parent=1 // pred_check_branch
      %56 = sbr.rel (0) target = $region25
    $region24: #{tpu_custom_call.1} parent=1 // pred_region
      _
    $region25: #{tpu_custom_call.1} parent=1 // pred_fallthru
      _
    // Predicated region
    $region26: #{tpu_custom_call.1} parent=1 // pred_check
      _
    $region27: #{tpu_custom_call.1} parent=1 // pred_check_branch
      %58 = sbr.rel (0) target = $region29
    $region28: #{tpu_custom_call.1} parent=1 // pred_region
      _
    $region29: #{tpu_custom_call.1} parent=1 // pred_fallthru
      _
    // Predicated region
    $region30: #{tpu_custom_call.1} parent=1 // pred_check
      _
    $region31: #{tpu_custom_call.1} parent=1 // pred_check_branch
      %60 = sbr.rel (0) target = $region33
    $region32: #{tpu_custom_call.1} parent=1 // pred_region
      %61 = dma.done [#allocation8], 512
    $region33: #{tpu_custom_call.1} parent=1 // pred_fallthru
      _
    // Predicated region
    $region34: #{tpu_custom_call.1} parent=1 // pred_check
      _
    $region35: #{tpu_custom_call.1} parent=1 // pred_check_branch
      %63 = sbr.rel (0) target = $region37
    $region36: #{tpu_custom_call.1} parent=1 // pred_region
      %64 = dma.done [#allocation11], 512
    $region37: #{tpu_custom_call.1} parent=1 // pred_fallthru
      _
    // Predicated region
    $region38: #{tpu_custom_call.1} parent=1 // pred_check
      _
    $region39: #{tpu_custom_call.1} parent=1 // pred_check_branch
      %66 = sbr.rel (0) target = $region41
    $region40: #{tpu_custom_call.1} parent=1 // pred_region
      %67 = dma.done [#allocation11], 1024
    $region41: #{tpu_custom_call.1} parent=1 // pred_fallthru
      _
    %v69 = vld [vmem:[%s1] sm:$0xff]
    %v70 = vld [vmem:[#allocation12] sm:$0xff]
    %v71 = vld [vmem:[#allocation12 + $0x8] sm:$0xff]
    %v72 = vld [vmem:[#allocation12 + $0x10] sm:$0xff]
    %v73 = vld [vmem:[#allocation12 + $0x18] sm:$0xff]
    %v74 = vld [vmem:[#allocation12 + $0x20] sm:$0xff]
    %v75 = vld [vmem:[#allocation12 + $0x28] sm:$0xff]
    %v76 = vld [vmem:[#allocation12 + $0x30] sm:$0xff]
    %v77 = vld [vmem:[#allocation12 + $0x38] sm:$0xff]
    %v78 = vld [vmem:[#allocation7] sm:$0xf]
    %v79 = vld [vmem:[#allocation7 + $0x4] sm:$0xf]
    %v80 = vld [vmem:[#allocation7 + $0x8] sm:$0xf]
    %v81 = vld [vmem:[#allocation7 + $0xc] sm:$0xf]
    %v82 = vld [vmem:[#allocation7 + $0x10] sm:$0xf]
    %v83 = vld [vmem:[#allocation7 + $0x14] sm:$0xf]
    %v84 = vld [vmem:[#allocation7 + $0x18] sm:$0xf]
    %v85 = vld [vmem:[#allocation7 + $0x1c] sm:$0xf]
    %v86 = vld [vmem:[#allocation10] sm:$0xff]
    %v87 = vld [vmem:[#allocation10 + $0x8] sm:$0xff]
    %v88 = vld [vmem:[#allocation10 + $0x10] sm:$0xff]
    %v89 = vld [vmem:[#allocation10 + $0x18] sm:$0xff]
    %v90 = vld [vmem:[%s5] sm:$0x3]
    %v92 = vlaneseq
    %v93 = vshrl.u32 %v92, 7
    %v94 = vsub.s32 0, %v93
    %v95 = vrot.slane %v90, %v94
    %v96 = vlaneseq
    %v97 = vshrl.u32 %v96, 7
    %v98 = vsub.s32 1, %v97
    %v99 = vrot.slane %v90, %v98
    %v110 = vunpack.c.l.b16 %v78
    %v111 = vunpack.c.l.b16 %v79
    %v112 = vunpack.c.l.b16 %v80
    %v113 = vunpack.c.l.b16 %v81
    %v114 = vunpack.c.l.b16 %v82
    %v115 = vunpack.c.l.b16 %v83
    %v116 = vunpack.c.l.b16 %v84
    %v117 = vunpack.c.l.b16 %v85
    %v118 = vpack.c.b16 %v111, %v110
    %v119 = vpack.c.b16 %v113, %v112
    %v120 = vpack.c.b16 %v115, %v114
    %v121 = vpack.c.b16 %v117, %v116
    %v126 = vunpack.c.l.b16 %v86
    %v127 = vunpack.c.h.b16 %v86
    %v128 = vunpack.c.l.b16 %v87
    %v129 = vunpack.c.h.b16 %v87
    %v130 = vunpack.c.l.b16 %v88
    %v131 = vunpack.c.h.b16 %v88
    %v132 = vunpack.c.l.b16 %v89
    %v133 = vunpack.c.h.b16 %v89
    %v134 = vpack.c.b16 %v128, %v126
    %v135 = vpack.c.b16 %v129, %v127
    %v136 = vpack.c.b16 %v132, %v130
    %v137 = vpack.c.b16 %v133, %v131
    %vm142 = vcmask 261120
    %v144 = vsel %vm142, %v118, 0
    %v147 = vsel %vm142, %v119, 0
    %v150 = vsel %vm142, %v120, 0
    %v153 = vsel %vm142, %v121, 0
    %155 = vmatprep.subr.bf16.mxu0 %v135
    %156 = vmatpush1.bf16.msra.mxu0 %v134
    %157 = vmatprep.subr.bf16.mxu0 %v137
    %158 = vmatpush1.bf16.msra.mxu0 %v136
    %159 = vmatprep.subr.bf16.mxu0 0
    %160 = vmatpush1.bf16.msra.mxu0 0
    %161 = vmatprep.subr.bf16.mxu0 0
    %162 = vmatpush1.bf16.msra.mxu0 0
    %163 = vmatprep.subr.bf16.mxu0 0
    %164 = vmatpush1.bf16.msra.mxu0 0
    %165 = vmatprep.subr.bf16.mxu0 0
    %166 = vmatpush1.bf16.msra.mxu0 0
    %167 = vmatprep.subr.bf16.mxu0 0
    %168 = vmatpush1.bf16.msra.mxu0 0
    %169 = vmatprep.subr.bf16.mxu0 0
    %170 = vmatpush1.bf16.msra.mxu0 0
    %171 = vmatprep.subr.bf16.mxu0 0
    %172 = vmatpush1.bf16.msra.mxu0 0
    %173 = vmatprep.subr.bf16.mxu0 0
    %174 = vmatpush1.bf16.msra.mxu0 0
    %175 = vmatprep.subr.bf16.mxu0 0
    %176 = vmatpush1.bf16.msra.mxu0 0
    %177 = vmatprep.subr.bf16.mxu0 0
    %178 = vmatpush1.bf16.msra.mxu0 0
    %179 = vmatprep.subr.bf16.mxu0 0
    %180 = vmatpush1.bf16.msra.mxu0 0
    %181 = vmatprep.subr.bf16.mxu0 0
    %182 = vmatpush1.bf16.msra.mxu0 0
    %183 = vmatprep.subr.bf16.mxu0 0
    %184 = vmatpush1.bf16.msra.mxu0 0
    %185 = vmatprep.subr.bf16.mxu0 0
    %186 = vmatpush1.bf16.msra.mxu0 0
    %187 = vmatprep.mubr.bf16.mxu0 0
    %188 = vmatmul.mubr.bf16.gmra.mrb[0].mxu0 %v144
    %v189 = vpop.f32.mrb[0].mxu0
    %v190 = vadd.f32 %v95, %v189
    %v191 = vpop.f32.mrb[0].mxu0
    %v192 = vadd.f32 %v99, %v191
    %v193 = vpop.f32.mrb[0].mxu0
    %v194 = vadd.f32 %v95, %v193
    %v195 = vpop.f32.mrb[0].mxu0
    %v196 = vadd.f32 %v99, %v195
    %197 = vmatprep.mubr.bf16.mxu0 0
    %198 = vmatmul.mubr.bf16.gmra.mrb[0].mxu0 %v147
    %v199 = vpop.f32.mrb[0].mxu0
    %v200 = vadd.f32 %v95, %v199
    %v201 = vpop.f32.mrb[0].mxu0
    %v202 = vadd.f32 %v99, %v201
    %v203 = vpop.f32.mrb[0].mxu0
    %v204 = vadd.f32 %v95, %v203
    %v205 = vpop.f32.mrb[0].mxu0
    %v206 = vadd.f32 %v99, %v205
    %207 = vmatprep.mubr.bf16.mxu0 0
    %208 = vmatmul.mubr.bf16.gmra.mrb[0].mxu0 %v150
    %v209 = vpop.f32.mrb[0].mxu0
    %v210 = vadd.f32 %v95, %v209
    %v211 = vpop.f32.mrb[0].mxu0
    %v212 = vadd.f32 %v99, %v211
    %v213 = vpop.f32.mrb[0].mxu0
    %v214 = vadd.f32 %v95, %v213
    %v215 = vpop.f32.mrb[0].mxu0
    %v216 = vadd.f32 %v99, %v215
    %217 = vmatprep.mubr.bf16.mxu0 0
    %218 = vmatmul.mubr.bf16.gmra.mrb[0].mxu0 %v153
    %v219 = vpop.f32.mrb[0].mxu0
    %v220 = vadd.f32 %v95, %v219
    %v221 = vpop.f32.mrb[0].mxu0
    %v222 = vadd.f32 %v99, %v221
    %v223 = vpop.f32.mrb[0].mxu0
    %v224 = vadd.f32 %v95, %v223
    %v225 = vpop.f32.mrb[0].mxu0
    %v226 = vadd.f32 %v99, %v225
    %227 = vdwg.mxu0
    %228 = vst [vmem:[#allocation2] sm:$0xff] %v190
    %229 = vst [vmem:[#allocation2 + $0x8] sm:$0xff] %v194
    %230 = vst [vmem:[#allocation2 + $0x10] sm:$0xff] %v200
    %231 = vst [vmem:[#allocation2 + $0x18] sm:$0xff] %v204
    %232 = vst [vmem:[#allocation2 + $0x20] sm:$0xff] %v210
    %233 = vst [vmem:[#allocation2 + $0x28] sm:$0xff] %v214
    %234 = vst [vmem:[#allocation2 + $0x30] sm:$0xff] %v220
    %235 = vst [vmem:[#allocation2 + $0x38] sm:$0xff] %v224
    %236 = vst [vmem:[#allocation3] sm:$0xff] %v192
    %237 = vst [vmem:[#allocation3 + $0x8] sm:$0xff] %v196
    %238 = vst [vmem:[#allocation3 + $0x10] sm:$0xff] %v202
    %239 = vst [vmem:[#allocation3 + $0x18] sm:$0xff] %v206
    %240 = vst [vmem:[#allocation3 + $0x20] sm:$0xff] %v212
    %241 = vst [vmem:[#allocation3 + $0x28] sm:$0xff] %v216
    %242 = vst [vmem:[#allocation3 + $0x30] sm:$0xff] %v222
    %243 = vst [vmem:[#allocation3 + $0x38] sm:$0xff] %v226
    %v244 = vpack.c.bf16 0.0, 0.0
    %v253 = vunpack.c.l.b16 %v70
    %v254 = vunpack.c.h.b16 %v70
    %v255 = vunpack.c.l.b16 %v71
    %v256 = vunpack.c.h.b16 %v71
    %v257 = vunpack.c.l.b16 %v72
    %v258 = vunpack.c.h.b16 %v72
    %v259 = vunpack.c.l.b16 %v73
    %v260 = vunpack.c.h.b16 %v73
    %v261 = vunpack.c.l.b16 %v74
    %v262 = vunpack.c.h.b16 %v74
    %v263 = vunpack.c.l.b16 %v75
    %v264 = vunpack.c.h.b16 %v75
    %v265 = vunpack.c.l.b16 %v76
    %v266 = vunpack.c.h.b16 %v76
    %v267 = vunpack.c.l.b16 %v77
    %v268 = vunpack.c.h.b16 %v77
    %v269 = vpack.c.b16 %v255, %v253
    %v270 = vpack.c.b16 %v256, %v254
    %v271 = vpack.c.b16 %v259, %v257
    %v272 = vpack.c.b16 %v260, %v258
    %v273 = vpack.c.b16 %v263, %v261
    %v274 = vpack.c.b16 %v264, %v262
    %v275 = vpack.c.b16 %v267, %v265
    %v276 = vpack.c.b16 %v268, %v266
    %vm285 = vcmask 523264
    %v287 = vsel %vm285, %v244, 0
    %289 = vmatprep.subr.bf16.mxu0 %v270
    %290 = vmatpush1.bf16.msra.mxu0 %v269
    %291 = vmatprep.subr.bf16.mxu0 %v272
    %292 = vmatpush1.bf16.msra.mxu0 %v271
    %293 = vmatprep.subr.bf16.mxu0 %v274
    %294 = vmatpush1.bf16.msra.mxu0 %v273
    %295 = vmatprep.subr.bf16.mxu0 %v276
    %296 = vmatpush1.bf16.msra.mxu0 %v275
    %297 = vmatprep.subr.bf16.mxu0 0
    %298 = vmatpush1.bf16.msra.mxu0 0
    %299 = vmatprep.subr.bf16.mxu0 0
    %300 = vmatpush1.bf16.msra.mxu0 0
    %301 = vmatprep.subr.bf16.mxu0 0
    %302 = vmatpush1.bf16.msra.mxu0 0
    %303 = vmatprep.subr.bf16.mxu0 0
    %304 = vmatpush1.bf16.msra.mxu0 0
    %305 = vmatprep.subr.bf16.mxu0 0
    %306 = vmatpush1.bf16.msra.mxu0 0
    %307 = vmatprep.subr.bf16.mxu0 0
    %308 = vmatpush1.bf16.msra.mxu0 0
    %309 = vmatprep.subr.bf16.mxu0 0
    %310 = vmatpush1.bf16.msra.mxu0 0
    %311 = vmatprep.subr.bf16.mxu0 0
    %312 = vmatpush1.bf16.msra.mxu0 0
    %313 = vmatprep.subr.bf16.mxu0 0
    %314 = vmatpush1.bf16.msra.mxu0 0
    %315 = vmatprep.subr.bf16.mxu0 0
    %316 = vmatpush1.bf16.msra.mxu0 0
    %317 = vmatprep.subr.bf16.mxu0 0
    %318 = vmatpush1.bf16.msra.mxu0 0
    %319 = vmatprep.subr.bf16.mxu0 0
    %320 = vmatpush1.bf16.msra.mxu0 0
    %321 = vmatprep.mubr.bf16.mxu0 0
    %322 = vmatmul.mubr.bf16.gmra.mrb[0].mxu0 %v287
    %v323 = vpop.f32.mrb[0].mxu0
    %v324 = vadd.f32 0.0, %v323
    %v325 = vpop.f32.mrb[0].mxu0
    %v326 = vadd.f32 0.0, %v325
    %v327 = vpop.f32.mrb[0].mxu0
    %v328 = vpop.f32.mrb[0].mxu0
    %329 = vdwg.mxu0
    %v330 = vld [vmem:[#allocation2] sm:$0xff]
    %v331 = vadd.f32 %v330, %v324
    %v332 = vxor.u32 %v331, 2147483648
    %v333 = vmul.f32 %v332, 1.442695
    %v334 = vpow.pop %v333
    %v335 = vadd.f32 %v334, 1.0
    %v336 = vrcp.pop %v335
    %v337 = vmul.f32 1.0, %v336
    %v338 = vtanh.pop %v331
    %v339 = vmul.f32 %v337, 0.0
    %341 = vrot.lane.b32.xlu0 %v338, 32
    %v342 = vpop.permute.xlu0 %341
    %v344 = vmul.f32 %v337, %v342
    %346 = vrot.lane.b32.xlu0 %v344, 32
    %v347 = vpop.permute.xlu0 %346
    %v349 = vadd.f32 %v339, %v347
    %v350 = vtanh.pop %v349
    %352 = vrot.lane.b32.xlu0 %v350, 32
    %v353 = vpop.permute.xlu0 %352
    %v355 = vmul.f32 %v337, %v353
    %357 = vrot.lane.b32.xlu0 %v355, 64
    %v358 = vpop.permute.xlu0 %357
    %360 = vst.msk [vmem:[#allocation4] sm:$0xff] %vm142, %v358
    %s361 = scalar_lea.vmem [#allocation3], 56
    %v362 = vld [vmem:[%s361] sm:$0xff]
    %v363 = vadd.f32 %v362, %v326
    %v364 = vxor.u32 %v363, 2147483648
    %v365 = vmul.f32 %v364, 1.442695
    %v366 = vpow.pop %v365
    %v367 = vadd.f32 %v366, 1.0
    %v368 = vrcp.pop %v367
    %v369 = vmul.f32 1.0, %v368
    %v370 = vtanh.pop %v363
    %v371 = vmul.f32 %v369, 0.0
    %373 = vrot.lane.b32.xlu0 %v370, 32
    %v374 = vpop.permute.xlu0 %373
    %v376 = vmul.f32 %v369, %v374
    %378 = vrot.lane.b32.xlu0 %v376, 32
    %v379 = vpop.permute.xlu0 %378
    %v381 = vadd.f32 %v371, %v379
    %v382 = vtanh.pop %v381
    %384 = vrot.lane.b32.xlu0 %v382, 32
    %v385 = vpop.permute.xlu0 %384
    %v387 = vmul.f32 %v369, %v385
    %389 = vrot.lane.b32.xlu0 %v387, 64
    %v390 = vpop.permute.xlu0 %389
    %s392 = scalar_lea.vmem [#allocation5], 56
    %393 = vst.msk [vmem:[%s392] sm:$0xff] %vm142, %v390
    %vm394 = vcmp.lt.f32.partialorder 7.0, %v69
    %v395 = vsel %vm394, 1, 0
    %v396 = vcvt.s32.f32 %v395
    %398 = vset.pattern.permute.xlu0 0
    %399 = vperm.xlu0 %398, %v396
    %v400 = vpop.permute.xlu0 %399
    %v402 = vmul.f32 %v400, %v387
    %v403 = vsub.f32 1.0, %v396
    %405 = vset.pattern.permute.xlu0 0
    %406 = vperm.xlu0 %405, %v403
    %v407 = vpop.permute.xlu0 %406
    %v409 = vmul.f32 %v407, 0.0
    %v410 = vadd.f32 %v402, %v409
    %v411 = vmul.f32 %v400, %v381
    %v412 = vadd.f32 %v411, %v409
    %414 = vrot.lane.b32.xlu0 %v410, 96
    %v415 = vpop.permute.xlu0 %414
    %v417 = vsel %vm142, %v358, %v415
    %v418 = vpack.c.bf16 %v417, %v417
    %v420 = vsel %vm285, %v418, 0
    %422 = vmatprep.subr.bf16.mxu0 %v270
    %423 = vmatpush1.bf16.msra.mxu0 %v269
    %424 = vmatprep.subr.bf16.mxu0 %v272
    %425 = vmatpush1.bf16.msra.mxu0 %v271
    %426 = vmatprep.subr.bf16.mxu0 %v274
    %427 = vmatpush1.bf16.msra.mxu0 %v273
    %428 = vmatprep.subr.bf16.mxu0 %v276
    %429 = vmatpush1.bf16.msra.mxu0 %v275
    %430 = vmatprep.subr.bf16.mxu0 0
    %431 = vmatpush1.bf16.msra.mxu0 0
    %432 = vmatprep.subr.bf16.mxu0 0
    %433 = vmatpush1.bf16.msra.mxu0 0
    %434 = vmatprep.subr.bf16.mxu0 0
    %435 = vmatpush1.bf16.msra.mxu0 0
    %436 = vmatprep.subr.bf16.mxu0 0
    %437 = vmatpush1.bf16.msra.mxu0 0
    %438 = vmatprep.subr.bf16.mxu0 0
    %439 = vmatpush1.bf16.msra.mxu0 0
    %440 = vmatprep.subr.bf16.mxu0 0
    %441 = vmatpush1.bf16.msra.mxu0 0
    %442 = vmatprep.subr.bf16.mxu0 0
    %443 = vmatpush1.bf16.msra.mxu0 0
    %444 = vmatprep.subr.bf16.mxu0 0
    %445 = vmatpush1.bf16.msra.mxu0 0
    %446 = vmatprep.subr.bf16.mxu0 0
    %447 = vmatpush1.bf16.msra.mxu0 0
    %448 = vmatprep.subr.bf16.mxu0 0
    %449 = vmatpush1.bf16.msra.mxu0 0
    %450 = vmatprep.subr.bf16.mxu0 0
    %451 = vmatpush1.bf16.msra.mxu0 0
    %452 = vmatprep.subr.bf16.mxu0 0
    %453 = vmatpush1.bf16.msra.mxu0 0
    %454 = vmatprep.mubr.bf16.mxu0 0
    %455 = vmatmul.mubr.bf16.gmra.mrb[0].mxu0 %v420
    %v456 = vpop.f32.mrb[0].mxu0
    %v457 = vadd.f32 0.0, %v456
    %v458 = vpop.f32.mrb[0].mxu0
    %v459 = vadd.f32 0.0, %v458
    %v460 = vpop.f32.mrb[0].mxu0
    %v461 = vpop.f32.mrb[0].mxu0
    %462 = vdwg.mxu0
    %s463 = scalar_lea.vmem [#allocation2], 8
    %v464 = vld [vmem:[%s463] sm:$0xff]
    %v465 = vadd.f32 %v464, %v457
    %v466 = vxor.u32 %v465, 2147483648
    %v467 = vmul.f32 %v466, 1.442695
    %v468 = vpow.pop %v467
    %v469 = vadd.f32 %v468, 1.0
    %v470 = vrcp.pop %v469
    %v471 = vmul.f32 1.0, %v470
    %v472 = vtanh.pop %v465
    %v473 = vmul.f32 %v471, %v349
    %475 = vrot.lane.b32.xlu0 %v472, 32
    %v476 = vpop.permute.xlu0 %475
    %v478 = vmul.f32 %v471, %v476
    %480 = vrot.lane.b32.xlu0 %v478, 32
    %v481 = vpop.permute.xlu0 %480
    %v483 = vadd.f32 %v473, %v481
    %v484 = vtanh.pop %v483
    %486 = vrot.lane.b32.xlu0 %v484, 32
    %v487 = vpop.permute.xlu0 %486
    %v489 = vmul.f32 %v471, %v487
    %491 = vrot.lane.b32.xlu0 %v489, 64
    %v492 = vpop.permute.xlu0 %491
    %s494 = scalar_lea.vmem [#allocation4], 8
    %495 = vst.msk [vmem:[%s494] sm:$0xff] %vm142, %v492
    %s496 = scalar_lea.vmem [#allocation3], 48
    %v497 = vld [vmem:[%s496] sm:$0xff]
    %v498 = vadd.f32 %v497, %v459
    %v499 = vxor.u32 %v498, 2147483648
    %v500 = vmul.f32 %v499, 1.442695
    %v501 = vpow.pop %v500
    %v502 = vadd.f32 %v501, 1.0
    %v503 = vrcp.pop %v502
    %v504 = vmul.f32 1.0, %v503
    %v505 = vtanh.pop %v498
    %v506 = vmul.f32 %v504, %v412
    %508 = vrot.lane.b32.xlu0 %v505, 32
    %v509 = vpop.permute.xlu0 %508
    %v511 = vmul.f32 %v504, %v509
    %513 = vrot.lane.b32.xlu0 %v511, 32
    %v514 = vpop.permute.xlu0 %513
    %v516 = vadd.f32 %v506, %v514
    %v517 = vtanh.pop %v516
    %519 = vrot.lane.b32.xlu0 %v517, 32
    %v520 = vpop.permute.xlu0 %519
    %v522 = vmul.f32 %v504, %v520
    %524 = vrot.lane.b32.xlu0 %v522, 64
    %v525 = vpop.permute.xlu0 %524
    %s527 = scalar_lea.vmem [#allocation5], 48
    %528 = vst.msk [vmem:[%s527] sm:$0xff] %vm142, %v525
    %vm529 = vcmp.lt.f32.partialorder 6.0, %v69
    %v530 = vsel %vm529, 1, 0
    %v531 = vcvt.s32.f32 %v530
    %533 = vset.pattern.permute.xlu0 0
    %534 = vperm.xlu0 %533, %v531
    %v535 = vpop.permute.xlu0 %534
    %v537 = vmul.f32 %v535, %v522
    %v538 = vsub.f32 1.0, %v531
    %540 = vset.pattern.permute.xlu0 0
    %541 = vperm.xlu0 %540, %v538
    %v542 = vpop.permute.xlu0 %541
    %v544 = vmul.f32 %v542, %v410
    %v545 = vadd.f32 %v537, %v544
    %v546 = vmul.f32 %v535, %v516
    %v547 = vmul.f32 %v542, %v412
    %v548 = vadd.f32 %v546, %v547
    %550 = vrot.lane.b32.xlu0 %v545, 96
    %v551 = vpop.permute.xlu0 %550
    %v553 = vsel %vm142, %v492, %v551
    %v554 = vpack.c.bf16 %v553, %v553
    %v556 = vsel %vm285, %v554, 0
    %558 = vmatprep.subr.bf16.mxu0 %v270
    %559 = vmatpush1.bf16.msra.mxu0 %v269
    %560 = vmatprep.subr.bf16.mxu0 %v272
    %561 = vmatpush1.bf16.msra.mxu0 %v271
    %562 = vmatprep.subr.bf16.mxu0 %v274
    %563 = vmatpush1.bf16.msra.mxu0 %v273
    %564 = vmatprep.subr.bf16.mxu0 %v276
    %565 = vmatpush1.bf16.msra.mxu0 %v275
    %566 = vmatprep.subr.bf16.mxu0 0
    %567 = vmatpush1.bf16.msra.mxu0 0
    %568 = vmatprep.subr.bf16.mxu0 0
    %569 = vmatpush1.bf16.msra.mxu0 0
    %570 = vmatprep.subr.bf16.mxu0 0
    %571 = vmatpush1.bf16.msra.mxu0 0
    %572 = vmatprep.subr.bf16.mxu0 0
    %573 = vmatpush1.bf16.msra.mxu0 0
    %574 = vmatprep.subr.bf16.mxu0 0
    %575 = vmatpush1.bf16.msra.mxu0 0
    %576 = vmatprep.subr.bf16.mxu0 0
    %577 = vmatpush1.bf16.msra.mxu0 0
    %578 = vmatprep.subr.bf16.mxu0 0
    %579 = vmatpush1.bf16.msra.mxu0 0
    %580 = vmatprep.subr.bf16.mxu0 0
    %581 = vmatpush1.bf16.msra.mxu0 0
    %582 = vmatprep.subr.bf16.mxu0 0
    %583 = vmatpush1.bf16.msra.mxu0 0
    %584 = vmatprep.subr.bf16.mxu0 0
    %585 = vmatpush1.bf16.msra.mxu0 0
    %586 = vmatprep.subr.bf16.mxu0 0
    %587 = vmatpush1.bf16.msra.mxu0 0
    %588 = vmatprep.subr.bf16.mxu0 0
    %589 = vmatpush1.bf16.msra.mxu0 0
    %590 = vmatprep.mubr.bf16.mxu0 0
    %591 = vmatmul.mubr.bf16.gmra.mrb[0].mxu0 %v556
    %v592 = vpop.f32.mrb[0].mxu0
    %v593 = vadd.f32 0.0, %v592
    %v594 = vpop.f32.mrb[0].mxu0
    %v595 = vadd.f32 0.0, %v594
    %v596 = vpop.f32.mrb[0].mxu0
    %v597 = vpop.f32.mrb[0].mxu0
    %598 = vdwg.mxu0
    %s599 = scalar_lea.vmem [#allocation2], 16
    %v600 = vld [vmem:[%s599] sm:$0xff]
    %v601 = vadd.f32 %v600, %v593
    %v602 = vxor.u32 %v601, 2147483648
    %v603 = vmul.f32 %v602, 1.442695
    %v604 = vpow.pop %v603
    %v605 = vadd.f32 %v604, 1.0
    %v606 = vrcp.pop %v605
    %v607 = vmul.f32 1.0, %v606
    %v608 = vtanh.pop %v601
    %v609 = vmul.f32 %v607, %v483
    %611 = vrot.lane.b32.xlu0 %v608, 32
    %v612 = vpop.permute.xlu0 %611
    %v614 = vmul.f32 %v607, %v612
    %616 = vrot.lane.b32.xlu0 %v614, 32
    %v617 = vpop.permute.xlu0 %616
    %v619 = vadd.f32 %v609, %v617
    %v620 = vtanh.pop %v619
    %622 = vrot.lane.b32.xlu0 %v620, 32
    %v623 = vpop.permute.xlu0 %622
    %v625 = vmul.f32 %v607, %v623
    %627 = vrot.lane.b32.xlu0 %v625, 64
    %v628 = vpop.permute.xlu0 %627
    %s630 = scalar_lea.vmem [#allocation4], 16
    %631 = vst.msk [vmem:[%s630] sm:$0xff] %vm142, %v628
    %s632 = scalar_lea.vmem [#allocation3], 40
    %v633 = vld [vmem:[%s632] sm:$0xff]
    %v634 = vadd.f32 %v633, %v595
    %v635 = vxor.u32 %v634, 2147483648
    %v636 = vmul.f32 %v635, 1.442695
    %v637 = vpow.pop %v636
    %v638 = vadd.f32 %v637, 1.0
    %v639 = vrcp.pop %v638
    %v640 = vmul.f32 1.0, %v639
    %v641 = vtanh.pop %v634
    %v642 = vmul.f32 %v640, %v548
    %644 = vrot.lane.b32.xlu0 %v641, 32
    %v645 = vpop.permute.xlu0 %644
    %v647 = vmul.f32 %v640, %v645
    %649 = vrot.lane.b32.xlu0 %v647, 32
    %v650 = vpop.permute.xlu0 %649
    %v652 = vadd.f32 %v642, %v650
    %v653 = vtanh.pop %v652
    %655 = vrot.lane.b32.xlu0 %v653, 32
    %v656 = vpop.permute.xlu0 %655
    %v658 = vmul.f32 %v640, %v656
    %660 = vrot.lane.b32.xlu0 %v658, 64
    %v661 = vpop.permute.xlu0 %660
    %s663 = scalar_lea.vmem [#allocation5], 40
    %664 = vst.msk [vmem:[%s663] sm:$0xff] %vm142, %v661
    %vm665 = vcmp.lt.f32.partialorder 5.0, %v69
    %v666 = vsel %vm665, 1, 0
    %v667 = vcvt.s32.f32 %v666
    %669 = vset.pattern.permute.xlu0 0
    %670 = vperm.xlu0 %669, %v667
    %v671 = vpop.permute.xlu0 %670
    %v673 = vmul.f32 %v671, %v658
    %v674 = vsub.f32 1.0, %v667
    %676 = vset.pattern.permute.xlu0 0
    %677 = vperm.xlu0 %676, %v674
    %v678 = vpop.permute.xlu0 %677
    %v680 = vmul.f32 %v678, %v545
    %v681 = vadd.f32 %v673, %v680
    %v682 = vmul.f32 %v671, %v652
    %v683 = vmul.f32 %v678, %v548
    %v684 = vadd.f32 %v682, %v683
    %686 = vrot.lane.b32.xlu0 %v681, 96
    %v687 = vpop.permute.xlu0 %686
    %v689 = vsel %vm142, %v628, %v687
    %v690 = vpack.c.bf16 %v689, %v689
    %v692 = vsel %vm285, %v690, 0
    %694 = vmatprep.subr.bf16.mxu0 %v270
    %695 = vmatpush1.bf16.msra.mxu0 %v269
    %696 = vmatprep.subr.bf16.mxu0 %v272
    %697 = vmatpush1.bf16.msra.mxu0 %v271
    %698 = vmatprep.subr.bf16.mxu0 %v274
    %699 = vmatpush1.bf16.msra.mxu0 %v273
    %700 = vmatprep.subr.bf16.mxu0 %v276
    %701 = vmatpush1.bf16.msra.mxu0 %v275
    %702 = vmatprep.subr.bf16.mxu0 0
    %703 = vmatpush1.bf16.msra.mxu0 0
    %704 = vmatprep.subr.bf16.mxu0 0
    %705 = vmatpush1.bf16.msra.mxu0 0
    %706 = vmatprep.subr.bf16.mxu0 0
    %707 = vmatpush1.bf16.msra.mxu0 0
    %708 = vmatprep.subr.bf16.mxu0 0
    %709 = vmatpush1.bf16.msra.mxu0 0
    %710 = vmatprep.subr.bf16.mxu0 0
    %711 = vmatpush1.bf16.msra.mxu0 0
    %712 = vmatprep.subr.bf16.mxu0 0
    %713 = vmatpush1.bf16.msra.mxu0 0
    %714 = vmatprep.subr.bf16.mxu0 0
    %715 = vmatpush1.bf16.msra.mxu0 0
    %716 = vmatprep.subr.bf16.mxu0 0
    %717 = vmatpush1.bf16.msra.mxu0 0
    %718 = vmatprep.subr.bf16.mxu0 0
    %719 = vmatpush1.bf16.msra.mxu0 0
    %720 = vmatprep.subr.bf16.mxu0 0
    %721 = vmatpush1.bf16.msra.mxu0 0
    %722 = vmatprep.subr.bf16.mxu0 0
    %723 = vmatpush1.bf16.msra.mxu0 0
    %724 = vmatprep.subr.bf16.mxu0 0
    %725 = vmatpush1.bf16.msra.mxu0 0
    %726 = vmatprep.mubr.bf16.mxu0 0
    %727 = vmatmul.mubr.bf16.gmra.mrb[0].mxu0 %v692
    %v728 = vpop.f32.mrb[0].mxu0
    %v729 = vadd.f32 0.0, %v728
    %v730 = vpop.f32.mrb[0].mxu0
    %v731 = vadd.f32 0.0, %v730
    %v732 = vpop.f32.mrb[0].mxu0
    %v733 = vpop.f32.mrb[0].mxu0
    %734 = vdwg.mxu0
    %s735 = scalar_lea.vmem [#allocation2], 24
    %v736 = vld [vmem:[%s735] sm:$0xff]
    %v737 = vadd.f32 %v736, %v729
    %v738 = vxor.u32 %v737, 2147483648
    %v739 = vmul.f32 %v738, 1.442695
    %v740 = vpow.pop %v739
    %v741 = vadd.f32 %v740, 1.0
    %v742 = vrcp.pop %v741
    %v743 = vmul.f32 1.0, %v742
    %v744 = vtanh.pop %v737
    %v745 = vmul.f32 %v743, %v619
    %747 = vrot.lane.b32.xlu0 %v744, 32
    %v748 = vpop.permute.xlu0 %747
    %v750 = vmul.f32 %v743, %v748
    %752 = vrot.lane.b32.xlu0 %v750, 32
    %v753 = vpop.permute.xlu0 %752
    %v755 = vadd.f32 %v745, %v753
    %v756 = vtanh.pop %v755
    %758 = vrot.lane.b32.xlu0 %v756, 32
    %v759 = vpop.permute.xlu0 %758
    %v761 = vmul.f32 %v743, %v759
    %763 = vrot.lane.b32.xlu0 %v761, 64
    %v764 = vpop.permute.xlu0 %763
    %s766 = scalar_lea.vmem [#allocation4], 24
    %767 = vst.msk [vmem:[%s766] sm:$0xff] %vm142, %v764
    %s768 = scalar_lea.vmem [#allocation3], 32
    %v769 = vld [vmem:[%s768] sm:$0xff]
    %v770 = vadd.f32 %v769, %v731
    %v771 = vxor.u32 %v770, 2147483648
    %v772 = vmul.f32 %v771, 1.442695
    %v773 = vpow.pop %v772
    %v774 = vadd.f32 %v773, 1.0
    %v775 = vrcp.pop %v774
    %v776 = vmul.f32 1.0, %v775
    %v777 = vtanh.pop %v770
    %v778 = vmul.f32 %v776, %v684
    %780 = vrot.lane.b32.xlu0 %v777, 32
    %v781 = vpop.permute.xlu0 %780
    %v783 = vmul.f32 %v776, %v781
    %785 = vrot.lane.b32.xlu0 %v783, 32
    %v786 = vpop.permute.xlu0 %785
    %v788 = vadd.f32 %v778, %v786
    %v789 = vtanh.pop %v788
    %791 = vrot.lane.b32.xlu0 %v789, 32
    %v792 = vpop.permute.xlu0 %791
    %v794 = vmul.f32 %v776, %v792
    %796 = vrot.lane.b32.xlu0 %v794, 64
    %v797 = vpop.permute.xlu0 %796
    %s799 = scalar_lea.vmem [#allocation5], 32
    %800 = vst.msk [vmem:[%s799] sm:$0xff] %vm142, %v797
    %vm801 = vcmp.lt.f32.partialorder 4.0, %v69
    %v802 = vsel %vm801, 1, 0
    %v803 = vcvt.s32.f32 %v802
    %805 = vset.pattern.permute.xlu0 0
    %806 = vperm.xlu0 %805, %v803
    %v807 = vpop.permute.xlu0 %806
    %v809 = vmul.f32 %v807, %v794
    %v810 = vsub.f32 1.0, %v803
    %812 = vset.pattern.permute.xlu0 0
    %813 = vperm.xlu0 %812, %v810
    %v814 = vpop.permute.xlu0 %813
    %v816 = vmul.f32 %v814, %v681
    %v817 = vadd.f32 %v809, %v816
    %v818 = vmul.f32 %v807, %v788
    %v819 = vmul.f32 %v814, %v684
    %v820 = vadd.f32 %v818, %v819
    %822 = vrot.lane.b32.xlu0 %v817, 96
    %v823 = vpop.permute.xlu0 %822
    %v825 = vsel %vm142, %v764, %v823
    %v826 = vpack.c.bf16 %v825, %v825
    %v828 = vsel %vm285, %v826, 0
    %830 = vmatprep.subr.bf16.mxu0 %v270
    %831 = vmatpush1.bf16.msra.mxu0 %v269
    %832 = vmatprep.subr.bf16.mxu0 %v272
    %833 = vmatpush1.bf16.msra.mxu0 %v271
    %834 = vmatprep.subr.bf16.mxu0 %v274
    %835 = vmatpush1.bf16.msra.mxu0 %v273
    %836 = vmatprep.subr.bf16.mxu0 %v276
    %837 = vmatpush1.bf16.msra.mxu0 %v275
    %838 = vmatprep.subr.bf16.mxu0 0
    %839 = vmatpush1.bf16.msra.mxu0 0
    %840 = vmatprep.subr.bf16.mxu0 0
    %841 = vmatpush1.bf16.msra.mxu0 0
    %842 = vmatprep.subr.bf16.mxu0 0
    %843 = vmatpush1.bf16.msra.mxu0 0
    %844 = vmatprep.subr.bf16.mxu0 0
    %845 = vmatpush1.bf16.msra.mxu0 0
    %846 = vmatprep.subr.bf16.mxu0 0
    %847 = vmatpush1.bf16.msra.mxu0 0
    %848 = vmatprep.subr.bf16.mxu0 0
    %849 = vmatpush1.bf16.msra.mxu0 0
    %850 = vmatprep.subr.bf16.mxu0 0
    %851 = vmatpush1.bf16.msra.mxu0 0
    %852 = vmatprep.subr.bf16.mxu0 0
    %853 = vmatpush1.bf16.msra.mxu0 0
    %854 = vmatprep.subr.bf16.mxu0 0
    %855 = vmatpush1.bf16.msra.mxu0 0
    %856 = vmatprep.subr.bf16.mxu0 0
    %857 = vmatpush1.bf16.msra.mxu0 0
    %858 = vmatprep.subr.bf16.mxu0 0
    %859 = vmatpush1.bf16.msra.mxu0 0
    %860 = vmatprep.subr.bf16.mxu0 0
    %861 = vmatpush1.bf16.msra.mxu0 0
    %862 = vmatprep.mubr.bf16.mxu0 0
    %863 = vmatmul.mubr.bf16.gmra.mrb[0].mxu0 %v828
    %v864 = vpop.f32.mrb[0].mxu0
    %v865 = vadd.f32 0.0, %v864
    %v866 = vpop.f32.mrb[0].mxu0
    %v867 = vadd.f32 0.0, %v866
    %v868 = vpop.f32.mrb[0].mxu0
    %v869 = vpop.f32.mrb[0].mxu0
    %870 = vdwg.mxu0
    %s871 = scalar_lea.vmem [#allocation2], 32
    %v872 = vld [vmem:[%s871] sm:$0xff]
    %v873 = vadd.f32 %v872, %v865
    %v874 = vxor.u32 %v873, 2147483648
    %v875 = vmul.f32 %v874, 1.442695
    %v876 = vpow.pop %v875
    %v877 = vadd.f32 %v876, 1.0
    %v878 = vrcp.pop %v877
    %v879 = vmul.f32 1.0, %v878
    %v880 = vtanh.pop %v873
    %v881 = vmul.f32 %v879, %v755
    %883 = vrot.lane.b32.xlu0 %v880, 32
    %v884 = vpop.permute.xlu0 %883
    %v886 = vmul.f32 %v879, %v884
    %888 = vrot.lane.b32.xlu0 %v886, 32
    %v889 = vpop.permute.xlu0 %888
    %v891 = vadd.f32 %v881, %v889
    %v892 = vtanh.pop %v891
    %894 = vrot.lane.b32.xlu0 %v892, 32
    %v895 = vpop.permute.xlu0 %894
    %v897 = vmul.f32 %v879, %v895
    %899 = vrot.lane.b32.xlu0 %v897, 64
    %v900 = vpop.permute.xlu0 %899
    %s902 = scalar_lea.vmem [#allocation4], 32
    %903 = vst.msk [vmem:[%s902] sm:$0xff] %vm142, %v900
    %s904 = scalar_lea.vmem [#allocation3], 24
    %v905 = vld [vmem:[%s904] sm:$0xff]
    %v906 = vadd.f32 %v905, %v867
    %v907 = vxor.u32 %v906, 2147483648
    %v908 = vmul.f32 %v907, 1.442695
    %v909 = vpow.pop %v908
    %v910 = vadd.f32 %v909, 1.0
    %v911 = vrcp.pop %v910
    %v912 = vmul.f32 1.0, %v911
    %v913 = vtanh.pop %v906
    %v914 = vmul.f32 %v912, %v820
    %916 = vrot.lane.b32.xlu0 %v913, 32
    %v917 = vpop.permute.xlu0 %916
    %v919 = vmul.f32 %v912, %v917
    %921 = vrot.lane.b32.xlu0 %v919, 32
    %v922 = vpop.permute.xlu0 %921
    %v924 = vadd.f32 %v914, %v922
    %v925 = vtanh.pop %v924
    %927 = vrot.lane.b32.xlu0 %v925, 32
    %v928 = vpop.permute.xlu0 %927
    %v930 = vmul.f32 %v912, %v928
    %932 = vrot.lane.b32.xlu0 %v930, 64
    %v933 = vpop.permute.xlu0 %932
    %s935 = scalar_lea.vmem [#allocation5], 24
    %936 = vst.msk [vmem:[%s935] sm:$0xff] %vm142, %v933
    %vm937 = vcmp.lt.f32.partialorder 3.0, %v69
    %v938 = vsel %vm937, 1, 0
    %v939 = vcvt.s32.f32 %v938
    %941 = vset.pattern.permute.xlu0 0
    %942 = vperm.xlu0 %941, %v939
    %v943 = vpop.permute.xlu0 %942
    %v945 = vmul.f32 %v943, %v930
    %v946 = vsub.f32 1.0, %v939
    %948 = vset.pattern.permute.xlu0 0
    %949 = vperm.xlu0 %948, %v946
    %v950 = vpop.permute.xlu0 %949
    %v952 = vmul.f32 %v950, %v817
    %v953 = vadd.f32 %v945, %v952
    %v954 = vmul.f32 %v943, %v924
    %v955 = vmul.f32 %v950, %v820
    %v956 = vadd.f32 %v954, %v955
    %958 = vrot.lane.b32.xlu0 %v953, 96
    %v959 = vpop.permute.xlu0 %958
    %v961 = vsel %vm142, %v900, %v959
    %v962 = vpack.c.bf16 %v961, %v961
    %v964 = vsel %vm285, %v962, 0
    %966 = vmatprep.subr.bf16.mxu0 %v270
    %967 = vmatpush1.bf16.msra.mxu0 %v269
    %968 = vmatprep.subr.bf16.mxu0 %v272
    %969 = vmatpush1.bf16.msra.mxu0 %v271
    %970 = vmatprep.subr.bf16.mxu0 %v274
    %971 = vmatpush1.bf16.msra.mxu0 %v273
    %972 = vmatprep.subr.bf16.mxu0 %v276
    %973 = vmatpush1.bf16.msra.mxu0 %v275
    %974 = vmatprep.subr.bf16.mxu0 0
    %975 = vmatpush1.bf16.msra.mxu0 0
    %976 = vmatprep.subr.bf16.mxu0 0
    %977 = vmatpush1.bf16.msra.mxu0 0
    %978 = vmatprep.subr.bf16.mxu0 0
    %979 = vmatpush1.bf16.msra.mxu0 0
    %980 = vmatprep.subr.bf16.mxu0 0
    %981 = vmatpush1.bf16.msra.mxu0 0
    %982 = vmatprep.subr.bf16.mxu0 0
    %983 = vmatpush1.bf16.msra.mxu0 0
    %984 = vmatprep.subr.bf16.mxu0 0
    %985 = vmatpush1.bf16.msra.mxu0 0
    %986 = vmatprep.subr.bf16.mxu0 0
    %987 = vmatpush1.bf16.msra.mxu0 0
    %988 = vmatprep.subr.bf16.mxu0 0
    %989 = vmatpush1.bf16.msra.mxu0 0
    %990 = vmatprep.subr.bf16.mxu0 0
    %991 = vmatpush1.bf16.msra.mxu0 0
    %992 = vmatprep.subr.bf16.mxu0 0
    %993 = vmatpush1.bf16.msra.mxu0 0
    %994 = vmatprep.subr.bf16.mxu0 0
    %995 = vmatpush1.bf16.msra.mxu0 0
    %996 = vmatprep.subr.bf16.mxu0 0
    %997 = vmatpush1.bf16.msra.mxu0 0
    %998 = vmatprep.mubr.bf16.mxu0 0
    %999 = vmatmul.mubr.bf16.gmra.mrb[0].mxu0 %v964
    %v1000 = vpop.f32.mrb[0].mxu0
    %v1001 = vadd.f32 0.0, %v1000
    %v1002 = vpop.f32.mrb[0].mxu0
    %v1003 = vadd.f32 0.0, %v1002
    %v1004 = vpop.f32.mrb[0].mxu0
    %v1005 = vpop.f32.mrb[0].mxu0
    %1006 = vdwg.mxu0
    %s1007 = scalar_lea.vmem [#allocation2], 40
    %v1008 = vld [vmem:[%s1007] sm:$0xff]
    %v1009 = vadd.f32 %v1008, %v1001
    %v1010 = vxor.u32 %v1009, 2147483648
    %v1011 = vmul.f32 %v1010, 1.442695
    %v1012 = vpow.pop %v1011
    %v1013 = vadd.f32 %v1012, 1.0
    %v1014 = vrcp.pop %v1013
    %v1015 = vmul.f32 1.0, %v1014
    %v1016 = vtanh.pop %v1009
    %v1017 = vmul.f32 %v1015, %v891
    %1019 = vrot.lane.b32.xlu0 %v1016, 32
    %v1020 = vpop.permute.xlu0 %1019
    %v1022 = vmul.f32 %v1015, %v1020
    %1024 = vrot.lane.b32.xlu0 %v1022, 32
    %v1025 = vpop.permute.xlu0 %1024
    %v1027 = vadd.f32 %v1017, %v1025
    %v1028 = vtanh.pop %v1027
    %1030 = vrot.lane.b32.xlu0 %v1028, 32
    %v1031 = vpop.permute.xlu0 %1030
    %v1033 = vmul.f32 %v1015, %v1031
    %1035 = vrot.lane.b32.xlu0 %v1033, 64
    %v1036 = vpop.permute.xlu0 %1035
    %s1038 = scalar_lea.vmem [#allocation4], 40
    %1039 = vst.msk [vmem:[%s1038] sm:$0xff] %vm142, %v1036
    %s1040 = scalar_lea.vmem [#allocation3], 16
    %v1041 = vld [vmem:[%s1040] sm:$0xff]
    %v1042 = vadd.f32 %v1041, %v1003
    %v1043 = vxor.u32 %v1042, 2147483648
    %v1044 = vmul.f32 %v1043, 1.442695
    %v1045 = vpow.pop %v1044
    %v1046 = vadd.f32 %v1045, 1.0
    %v1047 = vrcp.pop %v1046
    %v1048 = vmul.f32 1.0, %v1047
    %v1049 = vtanh.pop %v1042
    %v1050 = vmul.f32 %v1048, %v956
    %1052 = vrot.lane.b32.xlu0 %v1049, 32
    %v1053 = vpop.permute.xlu0 %1052
    %v1055 = vmul.f32 %v1048, %v1053
    %1057 = vrot.lane.b32.xlu0 %v1055, 32
    %v1058 = vpop.permute.xlu0 %1057
    %v1060 = vadd.f32 %v1050, %v1058
    %v1061 = vtanh.pop %v1060
    %1063 = vrot.lane.b32.xlu0 %v1061, 32
    %v1064 = vpop.permute.xlu0 %1063
    %v1066 = vmul.f32 %v1048, %v1064
    %1068 = vrot.lane.b32.xlu0 %v1066, 64
    %v1069 = vpop.permute.xlu0 %1068
    %s1071 = scalar_lea.vmem [#allocation5], 16
    %1072 = vst.msk [vmem:[%s1071] sm:$0xff] %vm142, %v1069
    %vm1073 = vcmp.lt.f32.partialorder 2.0, %v69
    %v1074 = vsel %vm1073, 1, 0
    %v1075 = vcvt.s32.f32 %v1074
    %1077 = vset.pattern.permute.xlu0 0
    %1078 = vperm.xlu0 %1077, %v1075
    %v1079 = vpop.permute.xlu0 %1078
    %v1081 = vmul.f32 %v1079, %v1066
    %v1082 = vsub.f32 1.0, %v1075
    %1084 = vset.pattern.permute.xlu0 0
    %1085 = vperm.xlu0 %1084, %v1082
    %v1086 = vpop.permute.xlu0 %1085
    %v1088 = vmul.f32 %v1086, %v953
    %v1089 = vadd.f32 %v1081, %v1088
    %v1090 = vmul.f32 %v1079, %v1060
    %v1091 = vmul.f32 %v1086, %v956
    %v1092 = vadd.f32 %v1090, %v1091
    %1094 = vrot.lane.b32.xlu0 %v1089, 96
    %v1095 = vpop.permute.xlu0 %1094
    %v1097 = vsel %vm142, %v1036, %v1095
    %v1098 = vpack.c.bf16 %v1097, %v1097
    %v1100 = vsel %vm285, %v1098, 0
    %1102 = vmatprep.subr.bf16.mxu0 %v270
    %1103 = vmatpush1.bf16.msra.mxu0 %v269
    %1104 = vmatprep.subr.bf16.mxu0 %v272
    %1105 = vmatpush1.bf16.msra.mxu0 %v271
    %1106 = vmatprep.subr.bf16.mxu0 %v274
    %1107 = vmatpush1.bf16.msra.mxu0 %v273
    %1108 = vmatprep.subr.bf16.mxu0 %v276
    %1109 = vmatpush1.bf16.msra.mxu0 %v275
    %1110 = vmatprep.subr.bf16.mxu0 0
    %1111 = vmatpush1.bf16.msra.mxu0 0
    %1112 = vmatprep.subr.bf16.mxu0 0
    %1113 = vmatpush1.bf16.msra.mxu0 0
    %1114 = vmatprep.subr.bf16.mxu0 0
    %1115 = vmatpush1.bf16.msra.mxu0 0
    %1116 = vmatprep.subr.bf16.mxu0 0
    %1117 = vmatpush1.bf16.msra.mxu0 0
    %1118 = vmatprep.subr.bf16.mxu0 0
    %1119 = vmatpush1.bf16.msra.mxu0 0
    %1120 = vmatprep.subr.bf16.mxu0 0
    %1121 = vmatpush1.bf16.msra.mxu0 0
    %1122 = vmatprep.subr.bf16.mxu0 0
    %1123 = vmatpush1.bf16.msra.mxu0 0
    %1124 = vmatprep.subr.bf16.mxu0 0
    %1125 = vmatpush1.bf16.msra.mxu0 0
    %1126 = vmatprep.subr.bf16.mxu0 0
    %1127 = vmatpush1.bf16.msra.mxu0 0
    %1128 = vmatprep.subr.bf16.mxu0 0
    %1129 = vmatpush1.bf16.msra.mxu0 0
    %1130 = vmatprep.subr.bf16.mxu0 0
    %1131 = vmatpush1.bf16.msra.mxu0 0
    %1132 = vmatprep.subr.bf16.mxu0 0
    %1133 = vmatpush1.bf16.msra.mxu0 0
    %1134 = vmatprep.mubr.bf16.mxu0 0
    %1135 = vmatmul.mubr.bf16.gmra.mrb[0].mxu0 %v1100
    %v1136 = vpop.f32.mrb[0].mxu0
    %v1137 = vadd.f32 0.0, %v1136
    %v1138 = vpop.f32.mrb[0].mxu0
    %v1139 = vadd.f32 0.0, %v1138
    %v1140 = vpop.f32.mrb[0].mxu0
    %v1141 = vpop.f32.mrb[0].mxu0
    %1142 = vdwg.mxu0
    %s1143 = scalar_lea.vmem [#allocation2], 48
    %v1144 = vld [vmem:[%s1143] sm:$0xff]
    %v1145 = vadd.f32 %v1144, %v1137
    %v1146 = vxor.u32 %v1145, 2147483648
    %v1147 = vmul.f32 %v1146, 1.442695
    %v1148 = vpow.pop %v1147
    %v1149 = vadd.f32 %v1148, 1.0
    %v1150 = vrcp.pop %v1149
    %v1151 = vmul.f32 1.0, %v1150
    %v1152 = vtanh.pop %v1145
    %v1153 = vmul.f32 %v1151, %v1027
    %1155 = vrot.lane.b32.xlu0 %v1152, 32
    %v1156 = vpop.permute.xlu0 %1155
    %v1158 = vmul.f32 %v1151, %v1156
    %1160 = vrot.lane.b32.xlu0 %v1158, 32
    %v1161 = vpop.permute.xlu0 %1160
    %v1163 = vadd.f32 %v1153, %v1161
    %v1164 = vtanh.pop %v1163
    %1166 = vrot.lane.b32.xlu0 %v1164, 32
    %v1167 = vpop.permute.xlu0 %1166
    %v1169 = vmul.f32 %v1151, %v1167
    %1171 = vrot.lane.b32.xlu0 %v1169, 64
    %v1172 = vpop.permute.xlu0 %1171
    %s1174 = scalar_lea.vmem [#allocation4], 48
    %1175 = vst.msk [vmem:[%s1174] sm:$0xff] %vm142, %v1172
    %s1176 = scalar_lea.vmem [#allocation3], 8
    %v1177 = vld [vmem:[%s1176] sm:$0xff]
    %v1178 = vadd.f32 %v1177, %v1139
    %v1179 = vxor.u32 %v1178, 2147483648
    %v1180 = vmul.f32 %v1179, 1.442695
    %v1181 = vpow.pop %v1180
    %v1182 = vadd.f32 %v1181, 1.0
    %v1183 = vrcp.pop %v1182
    %v1184 = vmul.f32 1.0, %v1183
    %v1185 = vtanh.pop %v1178
    %v1186 = vmul.f32 %v1184, %v1092
    %1188 = vrot.lane.b32.xlu0 %v1185, 32
    %v1189 = vpop.permute.xlu0 %1188
    %v1191 = vmul.f32 %v1184, %v1189
    %1193 = vrot.lane.b32.xlu0 %v1191, 32
    %v1194 = vpop.permute.xlu0 %1193
    %v1196 = vadd.f32 %v1186, %v1194
    %v1197 = vtanh.pop %v1196
    %1199 = vrot.lane.b32.xlu0 %v1197, 32
    %v1200 = vpop.permute.xlu0 %1199
    %v1202 = vmul.f32 %v1184, %v1200
    %1204 = vrot.lane.b32.xlu0 %v1202, 64
    %v1205 = vpop.permute.xlu0 %1204
    %s1207 = scalar_lea.vmem [#allocation5], 8
    %1208 = vst.msk [vmem:[%s1207] sm:$0xff] %vm142, %v1205
    %vm1209 = vcmp.lt.f32.partialorder 1.0, %v69
    %v1210 = vsel %vm1209, 1, 0
    %v1211 = vcvt.s32.f32 %v1210
    %1213 = vset.pattern.permute.xlu0 0
    %1214 = vperm.xlu0 %1213, %v1211
    %v1215 = vpop.permute.xlu0 %1214
    %v1217 = vmul.f32 %v1215, %v1202
    %v1218 = vsub.f32 1.0, %v1211
    %1220 = vset.pattern.permute.xlu0 0
    %1221 = vperm.xlu0 %1220, %v1218
    %v1222 = vpop.permute.xlu0 %1221
    %v1224 = vmul.f32 %v1222, %v1089
    %v1225 = vadd.f32 %v1217, %v1224
    %v1226 = vmul.f32 %v1215, %v1196
    %v1227 = vmul.f32 %v1222, %v1092
    %v1228 = vadd.f32 %v1226, %v1227
    %1230 = vrot.lane.b32.xlu0 %v1225, 96
    %v1231 = vpop.permute.xlu0 %1230
    %v1233 = vsel %vm142, %v1172, %v1231
    %v1234 = vpack.c.bf16 %v1233, %v1233
    %v1236 = vsel %vm285, %v1234, 0
    %1238 = vmatprep.subr.bf16.mxu0 %v270
    %1239 = vmatpush1.bf16.msra.mxu0 %v269
    %1240 = vmatprep.subr.bf16.mxu0 %v272
    %1241 = vmatpush1.bf16.msra.mxu0 %v271
    %1242 = vmatprep.subr.bf16.mxu0 %v274
    %1243 = vmatpush1.bf16.msra.mxu0 %v273
    %1244 = vmatprep.subr.bf16.mxu0 %v276
    %1245 = vmatpush1.bf16.msra.mxu0 %v275
    %1246 = vmatprep.subr.bf16.mxu0 0
    %1247 = vmatpush1.bf16.msra.mxu0 0
    %1248 = vmatprep.subr.bf16.mxu0 0
    %1249 = vmatpush1.bf16.msra.mxu0 0
    %1250 = vmatprep.subr.bf16.mxu0 0
    %1251 = vmatpush1.bf16.msra.mxu0 0
    %1252 = vmatprep.subr.bf16.mxu0 0
    %1253 = vmatpush1.bf16.msra.mxu0 0
    %1254 = vmatprep.subr.bf16.mxu0 0
    %1255 = vmatpush1.bf16.msra.mxu0 0
    %1256 = vmatprep.subr.bf16.mxu0 0
    %1257 = vmatpush1.bf16.msra.mxu0 0
    %1258 = vmatprep.subr.bf16.mxu0 0
    %1259 = vmatpush1.bf16.msra.mxu0 0
    %1260 = vmatprep.subr.bf16.mxu0 0
    %1261 = vmatpush1.bf16.msra.mxu0 0
    %1262 = vmatprep.subr.bf16.mxu0 0
    %1263 = vmatpush1.bf16.msra.mxu0 0
    %1264 = vmatprep.subr.bf16.mxu0 0
    %1265 = vmatpush1.bf16.msra.mxu0 0
    %1266 = vmatprep.subr.bf16.mxu0 0
    %1267 = vmatpush1.bf16.msra.mxu0 0
    %1268 = vmatprep.subr.bf16.mxu0 0
    %1269 = vmatpush1.bf16.msra.mxu0 0
    %1270 = vmatprep.mubr.bf16.mxu0 0
    %1271 = vmatmul.mubr.bf16.gmra.mrb[0].mxu0 %v1236
    %v1272 = vpop.f32.mrb[0].mxu0
    %v1273 = vadd.f32 0.0, %v1272
    %v1274 = vpop.f32.mrb[0].mxu0
    %v1275 = vadd.f32 0.0, %v1274
    %v1276 = vpop.f32.mrb[0].mxu0
    %v1277 = vpop.f32.mrb[0].mxu0
    %1278 = vdwg.mxu0
    %s1279 = scalar_lea.vmem [#allocation2], 56
    %v1280 = vld [vmem:[%s1279] sm:$0xff]
    %v1281 = vadd.f32 %v1280, %v1273
    %v1282 = vxor.u32 %v1281, 2147483648
    %v1283 = vmul.f32 %v1282, 1.442695
    %v1284 = vpow.pop %v1283
    %v1285 = vadd.f32 %v1284, 1.0
    %v1286 = vrcp.pop %v1285
    %v1287 = vmul.f32 1.0, %v1286
    %v1288 = vtanh.pop %v1281
    %v1289 = vmul.f32 %v1287, %v1163
    %1291 = vrot.lane.b32.xlu0 %v1288, 32
    %v1292 = vpop.permute.xlu0 %1291
    %v1294 = vmul.f32 %v1287, %v1292
    %1296 = vrot.lane.b32.xlu0 %v1294, 32
    %v1297 = vpop.permute.xlu0 %1296
    %v1299 = vadd.f32 %v1289, %v1297
    %v1300 = vtanh.pop %v1299
    %1302 = vrot.lane.b32.xlu0 %v1300, 32
    %v1303 = vpop.permute.xlu0 %1302
    %v1305 = vmul.f32 %v1287, %v1303
    %1307 = vrot.lane.b32.xlu0 %v1305, 64
    %v1308 = vpop.permute.xlu0 %1307
    %s1310 = scalar_lea.vmem [#allocation4], 56
    %1311 = vst.msk [vmem:[%s1310] sm:$0xff] %vm142, %v1308
    %v1312 = vld [vmem:[#allocation3] sm:$0xff]
    %v1313 = vadd.f32 %v1312, %v1275
    %v1314 = vxor.u32 %v1313, 2147483648
    %v1315 = vmul.f32 %v1314, 1.442695
    %v1316 = vpow.pop %v1315
    %v1317 = vadd.f32 %v1316, 1.0
    %v1318 = vrcp.pop %v1317
    %v1319 = vmul.f32 1.0, %v1318
    %v1320 = vtanh.pop %v1313
    %v1321 = vmul.f32 %v1319, %v1228
    %1323 = vrot.lane.b32.xlu0 %v1320, 32
    %v1324 = vpop.permute.xlu0 %1323
    %v1326 = vmul.f32 %v1319, %v1324
    %1328 = vrot.lane.b32.xlu0 %v1326, 32
    %v1329 = vpop.permute.xlu0 %1328
    %v1331 = vadd.f32 %v1321, %v1329
    %v1332 = vtanh.pop %v1331
    %1334 = vrot.lane.b32.xlu0 %v1332, 32
    %v1335 = vpop.permute.xlu0 %1334
    %v1337 = vmul.f32 %v1319, %v1335
    %1339 = vrot.lane.b32.xlu0 %v1337, 64
    %v1340 = vpop.permute.xlu0 %1339
    %1342 = vst.msk [vmem:[#allocation5] sm:$0xff] %vm142, %v1340
    %vm1343 = vcmp.lt.f32.partialorder 0.0, %v69
    %v1344 = vsel %vm1343, 1, 0
    %v1345 = vcvt.s32.f32 %v1344
    %v1346 = vld [vmem:[#allocation4] sm:$0xff]
    %v1347 = vld [vmem:[#allocation5] sm:$0xff]
    %v1348 = vadd.f32 %v1346, %v1347
    %1350 = vset.pattern.permute.xlu0 0
    %1351 = vperm.xlu0 %1350, %v1345
    %v1352 = vpop.permute.xlu0 %1351
    %v1354 = vmul.f32 %v1348, %v1352
    %v1356 = vcombine.high %v1354, %v1354
    %v1358 = vunpack.c.l.s4 1966171168
    %v1359 = vunpack.c.0.s8 %v1358
    %v1360 = vlaneseq
    %v1361 = vshrl.u32 %v1360, 7
    %v1362 = vsub.s32 %v1359, %v1361
    %v1363 = vrot.slane %v1354, %v1362
    %v1365 = vunpack.c.l.s4 1966171168
    %v1366 = vunpack.c.0.s8 %v1365
    %v1367 = vlaneseq
    %v1368 = vshrl.u32 %v1367, 7
    %v1369 = vsub.s32 %v1366, %v1368
    %v1370 = vrot.slane %v1356, %v1369
    %v1371 = vcombine.high %v1363, %v1363
    %v1372 = vcombine.high %v1370, %v1370
    %v1374 = vunpack.c.l.s4 1966171168
    %v1375 = vunpack.c.0.s8 %v1374
    %v1376 = vlaneseq
    %v1377 = vshrl.u32 %v1376, 7
    %v1378 = vsub.s32 %v1375, %v1377
    %v1379 = vrot.slane %v1363, %v1378
    %v1381 = vunpack.c.l.s4 1966171168
    %v1382 = vunpack.c.0.s8 %v1381
    %v1383 = vlaneseq
    %v1384 = vshrl.u32 %v1383, 7
    %v1385 = vsub.s32 %v1382, %v1384
    %v1386 = vrot.slane %v1370, %v1385
    %v1388 = vunpack.c.l.s4 1966171168
    %v1389 = vunpack.c.0.s8 %v1388
    %v1390 = vlaneseq
    %v1391 = vshrl.u32 %v1390, 7
    %v1392 = vsub.s32 %v1389, %v1391
    %v1393 = vrot.slane %v1371, %v1392
    %v1395 = vunpack.c.l.s4 1966171168
    %v1396 = vunpack.c.0.s8 %v1395
    %v1397 = vlaneseq
    %v1398 = vshrl.u32 %v1397, 7
    %v1399 = vsub.s32 %v1396, %v1398
    %v1400 = vrot.slane %v1372, %v1399
    %v1401 = vcombine.high %v1379, %v1379
    %v1402 = vcombine.high %v1386, %v1386
    %v1403 = vcombine.high %v1393, %v1393
    %v1404 = vcombine.high %v1400, %v1400
    %vm1413 = vcmask 253952
    %1414 = vst.msk [vmem:[#allocation6] sm:$0x1] %vm1413, %v1379
    %1415 = vst.msk [vmem:[#allocation6 + $0x8] sm:$0x1] %vm1413, %v1393
    %1416 = vst.msk [vmem:[#allocation6 + $0x10] sm:$0x1] %vm1413, %v1401
    %1417 = vst.msk [vmem:[#allocation6 + $0x18] sm:$0x1] %vm1413, %v1403
    %1418 = vst.msk [vmem:[#allocation6 + $0x20] sm:$0x1] %vm1413, %v1386
    %1419 = vst.msk [vmem:[#allocation6 + $0x28] sm:$0x1] %vm1413, %v1400
    %1420 = vst.msk [vmem:[#allocation6 + $0x30] sm:$0x1] %vm1413, %v1402
    %1421 = vst.msk [vmem:[#allocation6 + $0x38] sm:$0x1] %vm1413, %v1404
    %v1422 = vld [vmem:[%s494] sm:$0xff]
    %v1423 = vld [vmem:[%s1207] sm:$0xff]
    %v1424 = vadd.f32 %v1422, %v1423
    %v1425 = vmul.f32 %v1424, %v1215
    %v1427 = vcombine.high %v1425, %v1425
    %v1429 = vunpack.c.l.s4 1966171168
    %v1430 = vunpack.c.0.s8 %v1429
    %v1431 = vlaneseq
    %v1432 = vshrl.u32 %v1431, 7
    %v1433 = vsub.s32 %v1430, %v1432
    %v1434 = vrot.slane %v1425, %v1433
    %v1436 = vunpack.c.l.s4 1966171168
    %v1437 = vunpack.c.0.s8 %v1436
    %v1438 = vlaneseq
    %v1439 = vshrl.u32 %v1438, 7
    %v1440 = vsub.s32 %v1437, %v1439
    %v1441 = vrot.slane %v1427, %v1440
    %v1442 = vcombine.high %v1434, %v1434
    %v1443 = vcombine.high %v1441, %v1441
    %v1445 = vunpack.c.l.s4 1966171168
    %v1446 = vunpack.c.0.s8 %v1445
    %v1447 = vlaneseq
    %v1448 = vshrl.u32 %v1447, 7
    %v1449 = vsub.s32 %v1446, %v1448
    %v1450 = vrot.slane %v1434, %v1449
    %v1452 = vunpack.c.l.s4 1966171168
    %v1453 = vunpack.c.0.s8 %v1452
    %v1454 = vlaneseq
    %v1455 = vshrl.u32 %v1454, 7
    %v1456 = vsub.s32 %v1453, %v1455
    %v1457 = vrot.slane %v1441, %v1456
    %v1459 = vunpack.c.l.s4 1966171168
    %v1460 = vunpack.c.0.s8 %v1459
    %v1461 = vlaneseq
    %v1462 = vshrl.u32 %v1461, 7
    %v1463 = vsub.s32 %v1460, %v1462
    %v1464 = vrot.slane %v1442, %v1463
    %v1466 = vunpack.c.l.s4 1966171168
    %v1467 = vunpack.c.0.s8 %v1466
    %v1468 = vlaneseq
    %v1469 = vshrl.u32 %v1468, 7
    %v1470 = vsub.s32 %v1467, %v1469
    %v1471 = vrot.slane %v1443, %v1470
    %v1472 = vcombine.high %v1450, %v1450
    %v1473 = vcombine.high %v1457, %v1457
    %v1474 = vcombine.high %v1464, %v1464
    %v1475 = vcombine.high %v1471, %v1471
    %1484 = vst.msk [vmem:[#allocation6 + $0x1] sm:$0x1] %vm1413, %v1450
    %1485 = vst.msk [vmem:[#allocation6 + $0x9] sm:$0x1] %vm1413, %v1464
    %1486 = vst.msk [vmem:[#allocation6 + $0x11] sm:$0x1] %vm1413, %v1472
    %1487 = vst.msk [vmem:[#allocation6 + $0x19] sm:$0x1] %vm1413, %v1474
    %1488 = vst.msk [vmem:[#allocation6 + $0x21] sm:$0x1] %vm1413, %v1457
    %1489 = vst.msk [vmem:[#allocation6 + $0x29] sm:$0x1] %vm1413, %v1471
    %1490 = vst.msk [vmem:[#allocation6 + $0x31] sm:$0x1] %vm1413, %v1473
    %1491 = vst.msk [vmem:[#allocation6 + $0x39] sm:$0x1] %vm1413, %v1475
    %v1492 = vld [vmem:[%s630] sm:$0xff]
    %v1493 = vld [vmem:[%s1071] sm:$0xff]
    %v1494 = vadd.f32 %v1492, %v1493
    %v1495 = vmul.f32 %v1494, %v1079
    %v1497 = vcombine.high %v1495, %v1495
    %v1499 = vunpack.c.l.s4 1966171168
    %v1500 = vunpack.c.0.s8 %v1499
    %v1501 = vlaneseq
    %v1502 = vshrl.u32 %v1501, 7
    %v1503 = vsub.s32 %v1500, %v1502
    %v1504 = vrot.slane %v1495, %v1503
    %v1506 = vunpack.c.l.s4 1966171168
    %v1507 = vunpack.c.0.s8 %v1506
    %v1508 = vlaneseq
    %v1509 = vshrl.u32 %v1508, 7
    %v1510 = vsub.s32 %v1507, %v1509
    %v1511 = vrot.slane %v1497, %v1510
    %v1512 = vcombine.high %v1504, %v1504
    %v1513 = vcombine.high %v1511, %v1511
    %v1515 = vunpack.c.l.s4 1966171168
    %v1516 = vunpack.c.0.s8 %v1515
    %v1517 = vlaneseq
    %v1518 = vshrl.u32 %v1517, 7
    %v1519 = vsub.s32 %v1516, %v1518
    %v1520 = vrot.slane %v1504, %v1519
    %v1522 = vunpack.c.l.s4 1966171168
    %v1523 = vunpack.c.0.s8 %v1522
    %v1524 = vlaneseq
    %v1525 = vshrl.u32 %v1524, 7
    %v1526 = vsub.s32 %v1523, %v1525
    %v1527 = vrot.slane %v1511, %v1526
    %v1529 = vunpack.c.l.s4 1966171168
    %v1530 = vunpack.c.0.s8 %v1529
    %v1531 = vlaneseq
    %v1532 = vshrl.u32 %v1531, 7
    %v1533 = vsub.s32 %v1530, %v1532
    %v1534 = vrot.slane %v1512, %v1533
    %v1536 = vunpack.c.l.s4 1966171168
    %v1537 = vunpack.c.0.s8 %v1536
    %v1538 = vlaneseq
    %v1539 = vshrl.u32 %v1538, 7
    %v1540 = vsub.s32 %v1537, %v1539
    %v1541 = vrot.slane %v1513, %v1540
    %v1542 = vcombine.high %v1520, %v1520
    %v1543 = vcombine.high %v1527, %v1527
    %v1544 = vcombine.high %v1534, %v1534
    %v1545 = vcombine.high %v1541, %v1541
    %1554 = vst.msk [vmem:[#allocation6 + $0x2] sm:$0x1] %vm1413, %v1520
    %1555 = vst.msk [vmem:[#allocation6 + $0xa] sm:$0x1] %vm1413, %v1534
    %1556 = vst.msk [vmem:[#allocation6 + $0x12] sm:$0x1] %vm1413, %v1542
    %1557 = vst.msk [vmem:[#allocation6 + $0x1a] sm:$0x1] %vm1413, %v1544
    %1558 = vst.msk [vmem:[#allocation6 + $0x22] sm:$0x1] %vm1413, %v1527
    %1559 = vst.msk [vmem:[#allocation6 + $0x2a] sm:$0x1] %vm1413, %v1541
    %1560 = vst.msk [vmem:[#allocation6 + $0x32] sm:$0x1] %vm1413, %v1543
    %1561 = vst.msk [vmem:[#allocation6 + $0x3a] sm:$0x1] %vm1413, %v1545
    %v1562 = vld [vmem:[%s766] sm:$0xff]
    %v1563 = vld [vmem:[%s935] sm:$0xff]
    %v1564 = vadd.f32 %v1562, %v1563
    %v1565 = vmul.f32 %v1564, %v943
    %v1567 = vcombine.high %v1565, %v1565
    %v1569 = vunpack.c.l.s4 1966171168
    %v1570 = vunpack.c.0.s8 %v1569
    %v1571 = vlaneseq
    %v1572 = vshrl.u32 %v1571, 7
    %v1573 = vsub.s32 %v1570, %v1572
    %v1574 = vrot.slane %v1565, %v1573
    %v1576 = vunpack.c.l.s4 1966171168
    %v1577 = vunpack.c.0.s8 %v1576
    %v1578 = vlaneseq
    %v1579 = vshrl.u32 %v1578, 7
    %v1580 = vsub.s32 %v1577, %v1579
    %v1581 = vrot.slane %v1567, %v1580
    %v1582 = vcombine.high %v1574, %v1574
    %v1583 = vcombine.high %v1581, %v1581
    %v1585 = vunpack.c.l.s4 1966171168
    %v1586 = vunpack.c.0.s8 %v1585
    %v1587 = vlaneseq
    %v1588 = vshrl.u32 %v1587, 7
    %v1589 = vsub.s32 %v1586, %v1588
    %v1590 = vrot.slane %v1574, %v1589
    %v1592 = vunpack.c.l.s4 1966171168
    %v1593 = vunpack.c.0.s8 %v1592
    %v1594 = vlaneseq
    %v1595 = vshrl.u32 %v1594, 7
    %v1596 = vsub.s32 %v1593, %v1595
    %v1597 = vrot.slane %v1581, %v1596
    %v1599 = vunpack.c.l.s4 1966171168
    %v1600 = vunpack.c.0.s8 %v1599
    %v1601 = vlaneseq
    %v1602 = vshrl.u32 %v1601, 7
    %v1603 = vsub.s32 %v1600, %v1602
    %v1604 = vrot.slane %v1582, %v1603
    %v1606 = vunpack.c.l.s4 1966171168
    %v1607 = vunpack.c.0.s8 %v1606
    %v1608 = vlaneseq
    %v1609 = vshrl.u32 %v1608, 7
    %v1610 = vsub.s32 %v1607, %v1609
    %v1611 = vrot.slane %v1583, %v1610
    %v1612 = vcombine.high %v1590, %v1590
    %v1613 = vcombine.high %v1597, %v1597
    %v1614 = vcombine.high %v1604, %v1604
    %v1615 = vcombine.high %v1611, %v1611
    %1624 = vst.msk [vmem:[#allocation6 + $0x3] sm:$0x1] %vm1413, %v1590
    %1625 = vst.msk [vmem:[#allocation6 + $0xb] sm:$0x1] %vm1413, %v1604
    %1626 = vst.msk [vmem:[#allocation6 + $0x13] sm:$0x1] %vm1413, %v1612
    %1627 = vst.msk [vmem:[#allocation6 + $0x1b] sm:$0x1] %vm1413, %v1614
    %1628 = vst.msk [vmem:[#allocation6 + $0x23] sm:$0x1] %vm1413, %v1597
    %1629 = vst.msk [vmem:[#allocation6 + $0x2b] sm:$0x1] %vm1413, %v1611
    %1630 = vst.msk [vmem:[#allocation6 + $0x33] sm:$0x1] %vm1413, %v1613
    %1631 = vst.msk [vmem:[#allocation6 + $0x3b] sm:$0x1] %vm1413, %v1615
    %v1632 = vld [vmem:[%s902] sm:$0xff]
    %v1633 = vld [vmem:[%s799] sm:$0xff]
    %v1634 = vadd.f32 %v1632, %v1633
    %v1635 = vmul.f32 %v1634, %v807
    %v1637 = vcombine.high %v1635, %v1635
    %v1639 = vunpack.c.l.s4 1966171168
    %v1640 = vunpack.c.0.s8 %v1639
    %v1641 = vlaneseq
    %v1642 = vshrl.u32 %v1641, 7
    %v1643 = vsub.s32 %v1640, %v1642
    %v1644 = vrot.slane %v1635, %v1643
    %v1646 = vunpack.c.l.s4 1966171168
    %v1647 = vunpack.c.0.s8 %v1646
    %v1648 = vlaneseq
    %v1649 = vshrl.u32 %v1648, 7
    %v1650 = vsub.s32 %v1647, %v1649
    %v1651 = vrot.slane %v1637, %v1650
    %v1652 = vcombine.high %v1644, %v1644
    %v1653 = vcombine.high %v1651, %v1651
    %v1655 = vunpack.c.l.s4 1966171168
    %v1656 = vunpack.c.0.s8 %v1655
    %v1657 = vlaneseq
    %v1658 = vshrl.u32 %v1657, 7
    %v1659 = vsub.s32 %v1656, %v1658
    %v1660 = vrot.slane %v1644, %v1659
    %v1662 = vunpack.c.l.s4 1966171168
    %v1663 = vunpack.c.0.s8 %v1662
    %v1664 = vlaneseq
    %v1665 = vshrl.u32 %v1664, 7
    %v1666 = vsub.s32 %v1663, %v1665
    %v1667 = vrot.slane %v1651, %v1666
    %v1669 = vunpack.c.l.s4 1966171168
    %v1670 = vunpack.c.0.s8 %v1669
    %v1671 = vlaneseq
    %v1672 = vshrl.u32 %v1671, 7
    %v1673 = vsub.s32 %v1670, %v1672
    %v1674 = vrot.slane %v1652, %v1673
    %v1676 = vunpack.c.l.s4 1966171168
    %v1677 = vunpack.c.0.s8 %v1676
    %v1678 = vlaneseq
    %v1679 = vshrl.u32 %v1678, 7
    %v1680 = vsub.s32 %v1677, %v1679
    %v1681 = vrot.slane %v1653, %v1680
    %v1682 = vcombine.high %v1660, %v1660
    %v1683 = vcombine.high %v1667, %v1667
    %v1684 = vcombine.high %v1674, %v1674
    %v1685 = vcombine.high %v1681, %v1681
    %1694 = vst.msk [vmem:[#allocation6 + $0x4] sm:$0x1] %vm1413, %v1660
    %1695 = vst.msk [vmem:[#allocation6 + $0xc] sm:$0x1] %vm1413, %v1674
    %1696 = vst.msk [vmem:[#allocation6 + $0x14] sm:$0x1] %vm1413, %v1682
    %1697 = vst.msk [vmem:[#allocation6 + $0x1c] sm:$0x1] %vm1413, %v1684
    %1698 = vst.msk [vmem:[#allocation6 + $0x24] sm:$0x1] %vm1413, %v1667
    %1699 = vst.msk [vmem:[#allocation6 + $0x2c] sm:$0x1] %vm1413, %v1681
    %1700 = vst.msk [vmem:[#allocation6 + $0x34] sm:$0x1] %vm1413, %v1683
    %1701 = vst.msk [vmem:[#allocation6 + $0x3c] sm:$0x1] %vm1413, %v1685
    %v1702 = vld [vmem:[%s1038] sm:$0xff]
    %v1703 = vld [vmem:[%s663] sm:$0xff]
    %v1704 = vadd.f32 %v1702, %v1703
    %v1705 = vmul.f32 %v1704, %v671
    %v1707 = vcombine.high %v1705, %v1705
    %v1709 = vunpack.c.l.s4 1966171168
    %v1710 = vunpack.c.0.s8 %v1709
    %v1711 = vlaneseq
    %v1712 = vshrl.u32 %v1711, 7
    %v1713 = vsub.s32 %v1710, %v1712
    %v1714 = vrot.slane %v1705, %v1713
    %v1716 = vunpack.c.l.s4 1966171168
    %v1717 = vunpack.c.0.s8 %v1716
    %v1718 = vlaneseq
    %v1719 = vshrl.u32 %v1718, 7
    %v1720 = vsub.s32 %v1717, %v1719
    %v1721 = vrot.slane %v1707, %v1720
    %v1722 = vcombine.high %v1714, %v1714
    %v1723 = vcombine.high %v1721, %v1721
    %v1725 = vunpack.c.l.s4 1966171168
    %v1726 = vunpack.c.0.s8 %v1725
    %v1727 = vlaneseq
    %v1728 = vshrl.u32 %v1727, 7
    %v1729 = vsub.s32 %v1726, %v1728
    %v1730 = vrot.slane %v1714, %v1729
    %v1732 = vunpack.c.l.s4 1966171168
    %v1733 = vunpack.c.0.s8 %v1732
    %v1734 = vlaneseq
    %v1735 = vshrl.u32 %v1734, 7
    %v1736 = vsub.s32 %v1733, %v1735
    %v1737 = vrot.slane %v1721, %v1736
    %v1739 = vunpack.c.l.s4 1966171168
    %v1740 = vunpack.c.0.s8 %v1739
    %v1741 = vlaneseq
    %v1742 = vshrl.u32 %v1741, 7
    %v1743 = vsub.s32 %v1740, %v1742
    %v1744 = vrot.slane %v1722, %v1743
    %v1746 = vunpack.c.l.s4 1966171168
    %v1747 = vunpack.c.0.s8 %v1746
    %v1748 = vlaneseq
    %v1749 = vshrl.u32 %v1748, 7
    %v1750 = vsub.s32 %v1747, %v1749
    %v1751 = vrot.slane %v1723, %v1750
    %v1752 = vcombine.high %v1730, %v1730
    %v1753 = vcombine.high %v1737, %v1737
    %v1754 = vcombine.high %v1744, %v1744
    %v1755 = vcombine.high %v1751, %v1751
    %1764 = vst.msk [vmem:[#allocation6 + $0x5] sm:$0x1] %vm1413, %v1730
    %1765 = vst.msk [vmem:[#allocation6 + $0xd] sm:$0x1] %vm1413, %v1744
    %1766 = vst.msk [vmem:[#allocation6 + $0x15] sm:$0x1] %vm1413, %v1752
    %1767 = vst.msk [vmem:[#allocation6 + $0x1d] sm:$0x1] %vm1413, %v1754
    %1768 = vst.msk [vmem:[#allocation6 + $0x25] sm:$0x1] %vm1413, %v1737
    %1769 = vst.msk [vmem:[#allocation6 + $0x2d] sm:$0x1] %vm1413, %v1751
    %1770 = vst.msk [vmem:[#allocation6 + $0x35] sm:$0x1] %vm1413, %v1753
    %1771 = vst.msk [vmem:[#allocation6 + $0x3d] sm:$0x1] %vm1413, %v1755
    %v1772 = vld [vmem:[%s1174] sm:$0xff]
    %v1773 = vld [vmem:[%s527] sm:$0xff]
    %v1774 = vadd.f32 %v1772, %v1773
    %v1775 = vmul.f32 %v1774, %v535
    %v1777 = vcombine.high %v1775, %v1775
    %v1779 = vunpack.c.l.s4 1966171168
    %v1780 = vunpack.c.0.s8 %v1779
    %v1781 = vlaneseq
    %v1782 = vshrl.u32 %v1781, 7
    %v1783 = vsub.s32 %v1780, %v1782
    %v1784 = vrot.slane %v1775, %v1783
    %v1786 = vunpack.c.l.s4 1966171168
    %v1787 = vunpack.c.0.s8 %v1786
    %v1788 = vlaneseq
    %v1789 = vshrl.u32 %v1788, 7
    %v1790 = vsub.s32 %v1787, %v1789
    %v1791 = vrot.slane %v1777, %v1790
    %v1792 = vcombine.high %v1784, %v1784
    %v1793 = vcombine.high %v1791, %v1791
    %v1795 = vunpack.c.l.s4 1966171168
    %v1796 = vunpack.c.0.s8 %v1795
    %v1797 = vlaneseq
    %v1798 = vshrl.u32 %v1797, 7
    %v1799 = vsub.s32 %v1796, %v1798
    %v1800 = vrot.slane %v1784, %v1799
    %v1802 = vunpack.c.l.s4 1966171168
    %v1803 = vunpack.c.0.s8 %v1802
    %v1804 = vlaneseq
    %v1805 = vshrl.u32 %v1804, 7
    %v1806 = vsub.s32 %v1803, %v1805
    %v1807 = vrot.slane %v1791, %v1806
    %v1809 = vunpack.c.l.s4 1966171168
    %v1810 = vunpack.c.0.s8 %v1809
    %v1811 = vlaneseq
    %v1812 = vshrl.u32 %v1811, 7
    %v1813 = vsub.s32 %v1810, %v1812
    %v1814 = vrot.slane %v1792, %v1813
    %v1816 = vunpack.c.l.s4 1966171168
    %v1817 = vunpack.c.0.s8 %v1816
    %v1818 = vlaneseq
    %v1819 = vshrl.u32 %v1818, 7
    %v1820 = vsub.s32 %v1817, %v1819
    %v1821 = vrot.slane %v1793, %v1820
    %v1822 = vcombine.high %v1800, %v1800
    %v1823 = vcombine.high %v1807, %v1807
    %v1824 = vcombine.high %v1814, %v1814
    %v1825 = vcombine.high %v1821, %v1821
    %1834 = vst.msk [vmem:[#allocation6 + $0x6] sm:$0x1] %vm1413, %v1800
    %1835 = vst.msk [vmem:[#allocation6 + $0xe] sm:$0x1] %vm1413, %v1814
    %1836 = vst.msk [vmem:[#allocation6 + $0x16] sm:$0x1] %vm1413, %v1822
    %1837 = vst.msk [vmem:[#allocation6 + $0x1e] sm:$0x1] %vm1413, %v1824
    %1838 = vst.msk [vmem:[#allocation6 + $0x26] sm:$0x1] %vm1413, %v1807
    %1839 = vst.msk [vmem:[#allocation6 + $0x2e] sm:$0x1] %vm1413, %v1821
    %1840 = vst.msk [vmem:[#allocation6 + $0x36] sm:$0x1] %vm1413, %v1823
    %1841 = vst.msk [vmem:[#allocation6 + $0x3e] sm:$0x1] %vm1413, %v1825
    %v1842 = vld [vmem:[%s1310] sm:$0xff]
    %v1843 = vld [vmem:[%s392] sm:$0xff]
    %v1844 = vadd.f32 %v1842, %v1843
    %v1845 = vmul.f32 %v1844, %v400
    %v1847 = vcombine.high %v1845, %v1845
    %v1849 = vunpack.c.l.s4 1966171168
    %v1850 = vunpack.c.0.s8 %v1849
    %v1851 = vlaneseq
    %v1852 = vshrl.u32 %v1851, 7
    %v1853 = vsub.s32 %v1850, %v1852
    %v1854 = vrot.slane %v1845, %v1853
    %v1856 = vunpack.c.l.s4 1966171168
    %v1857 = vunpack.c.0.s8 %v1856
    %v1858 = vlaneseq
    %v1859 = vshrl.u32 %v1858, 7
    %v1860 = vsub.s32 %v1857, %v1859
    %v1861 = vrot.slane %v1847, %v1860
    %v1862 = vcombine.high %v1854, %v1854
    %v1863 = vcombine.high %v1861, %v1861
    %v1865 = vunpack.c.l.s4 1966171168
    %v1866 = vunpack.c.0.s8 %v1865
    %v1867 = vlaneseq
    %v1868 = vshrl.u32 %v1867, 7
    %v1869 = vsub.s32 %v1866, %v1868
    %v1870 = vrot.slane %v1854, %v1869
    %v1872 = vunpack.c.l.s4 1966171168
    %v1873 = vunpack.c.0.s8 %v1872
    %v1874 = vlaneseq
    %v1875 = vshrl.u32 %v1874, 7
    %v1876 = vsub.s32 %v1873, %v1875
    %v1877 = vrot.slane %v1861, %v1876
    %v1879 = vunpack.c.l.s4 1966171168
    %v1880 = vunpack.c.0.s8 %v1879
    %v1881 = vlaneseq
    %v1882 = vshrl.u32 %v1881, 7
    %v1883 = vsub.s32 %v1880, %v1882
    %v1884 = vrot.slane %v1862, %v1883
    %v1886 = vunpack.c.l.s4 1966171168
    %v1887 = vunpack.c.0.s8 %v1886
    %v1888 = vlaneseq
    %v1889 = vshrl.u32 %v1888, 7
    %v1890 = vsub.s32 %v1887, %v1889
    %v1891 = vrot.slane %v1863, %v1890
    %v1892 = vcombine.high %v1870, %v1870
    %v1893 = vcombine.high %v1877, %v1877
    %v1894 = vcombine.high %v1884, %v1884
    %v1895 = vcombine.high %v1891, %v1891
    %1904 = vst.msk [vmem:[#allocation6 + $0x7] sm:$0x1] %vm1413, %v1870
    %1905 = vst.msk [vmem:[#allocation6 + $0xf] sm:$0x1] %vm1413, %v1884
    %1906 = vst.msk [vmem:[#allocation6 + $0x17] sm:$0x1] %vm1413, %v1892
    %1907 = vst.msk [vmem:[#allocation6 + $0x1f] sm:$0x1] %vm1413, %v1894
    %1908 = vst.msk [vmem:[#allocation6 + $0x27] sm:$0x1] %vm1413, %v1877
    %1909 = vst.msk [vmem:[#allocation6 + $0x2f] sm:$0x1] %vm1413, %v1891
    %1910 = vst.msk [vmem:[#allocation6 + $0x37] sm:$0x1] %vm1413, %v1893
    %1911 = vst.msk [vmem:[#allocation6 + $0x3f] sm:$0x1] %vm1413, %v1895
    %v1912 = vld [vmem:[#allocation6] sm:$0xff]
    %v1913 = vld [vmem:[#allocation6 + $0x8] sm:$0xff]
    %v1914 = vld [vmem:[#allocation6 + $0x10] sm:$0xff]
    %v1915 = vld [vmem:[#allocation6 + $0x18] sm:$0xff]
    %v1916 = vld [vmem:[#allocation6 + $0x20] sm:$0xff]
    %v1917 = vld [vmem:[#allocation6 + $0x28] sm:$0xff]
    %v1918 = vld [vmem:[#allocation6 + $0x30] sm:$0xff]
    %v1919 = vld [vmem:[#allocation6 + $0x38] sm:$0xff]
    %v1920 = vpack.c.bf16 %v1913, %v1912
    %v1921 = vpack.c.bf16 %v1915, %v1914
    %v1922 = vpack.c.bf16 %v1917, %v1916
    %v1923 = vpack.c.bf16 %v1919, %v1918
    %v1924 = vld [vmem:[%s6] sm:$0xf]
    %v1925 = vld [vmem:[%s6 + $0x4] sm:$0xf]
    %v1926 = vld [vmem:[%s6 + $0x8] sm:$0xf]
    %v1927 = vld [vmem:[%s6 + $0xc] sm:$0xf]
    %v1932 = vunpack.c.l.b16 %v1924
    %v1933 = vunpack.c.l.b16 %v1925
    %v1934 = vunpack.c.l.b16 %v1926
    %v1935 = vunpack.c.l.b16 %v1927
    %v1936 = vpack.c.b16 %v1933, %v1932
    %v1937 = vpack.c.b16 %v1935, %v1934
    %v1941 = vsel %vm142, %v1920, 0
    %v1944 = vsel %vm142, %v1921, 0
    %v1947 = vsel %vm142, %v1922, 0
    %v1950 = vsel %vm142, %v1923, 0
    %1952 = vmatprep.subr.bf16.mxu0 0
    %1953 = vmatpush1.bf16.msra.mxu0 %v1936
    %1954 = vmatprep.subr.bf16.mxu0 0
    %1955 = vmatpush1.bf16.msra.mxu0 %v1937
    %1956 = vmatprep.subr.bf16.mxu0 0
    %1957 = vmatpush1.bf16.msra.mxu0 0
    %1958 = vmatprep.subr.bf16.mxu0 0
    %1959 = vmatpush1.bf16.msra.mxu0 0
    %1960 = vmatprep.subr.bf16.mxu0 0
    %1961 = vmatpush1.bf16.msra.mxu0 0
    %1962 = vmatprep.subr.bf16.mxu0 0
    %1963 = vmatpush1.bf16.msra.mxu0 0
    %1964 = vmatprep.subr.bf16.mxu0 0
    %1965 = vmatpush1.bf16.msra.mxu0 0
    %1966 = vmatprep.subr.bf16.mxu0 0
    %1967 = vmatpush1.bf16.msra.mxu0 0
    %1968 = vmatprep.subr.bf16.mxu0 0
    %1969 = vmatpush1.bf16.msra.mxu0 0
    %1970 = vmatprep.subr.bf16.mxu0 0
    %1971 = vmatpush1.bf16.msra.mxu0 0
    %1972 = vmatprep.subr.bf16.mxu0 0
    %1973 = vmatpush1.bf16.msra.mxu0 0
    %1974 = vmatprep.subr.bf16.mxu0 0
    %1975 = vmatpush1.bf16.msra.mxu0 0
    %1976 = vmatprep.subr.bf16.mxu0 0
    %1977 = vmatpush1.bf16.msra.mxu0 0
    %1978 = vmatprep.subr.bf16.mxu0 0
    %1979 = vmatpush1.bf16.msra.mxu0 0
    %1980 = vmatprep.subr.bf16.mxu0 0
    %1981 = vmatpush1.bf16.msra.mxu0 0
    %1982 = vmatprep.subr.bf16.mxu0 0
    %1983 = vmatpush1.bf16.msra.mxu0 0
    %1984 = vmatprep.mubr.bf16.mxu0 0
    %1985 = vmatmul.mubr.bf16.gmra.mrb[0].mxu0 %v1941
    %v1986 = vpop.f32.mrb[0].mxu0
    %v1987 = vadd.f32 0.0, %v1986
    %v1988 = vpop.f32.mrb[0].mxu0
    %v1989 = vpop.f32.mrb[0].mxu0
    %v1990 = vadd.f32 0.0, %v1989
    %v1991 = vpop.f32.mrb[0].mxu0
    %1992 = vmatprep.mubr.bf16.mxu0 0
    %1993 = vmatmul.mubr.bf16.gmra.mrb[0].mxu0 %v1944
    %v1994 = vpop.f32.mrb[0].mxu0
    %v1995 = vadd.f32 0.0, %v1994
    %v1996 = vpop.f32.mrb[0].mxu0
    %v1997 = vpop.f32.mrb[0].mxu0
    %v1998 = vadd.f32 0.0, %v1997
    %v1999 = vpop.f32.mrb[0].mxu0
    %2000 = vmatprep.mubr.bf16.mxu0 0
    %2001 = vmatmul.mubr.bf16.gmra.mrb[0].mxu0 %v1947
    %v2002 = vpop.f32.mrb[0].mxu0
    %v2003 = vadd.f32 0.0, %v2002
    %v2004 = vpop.f32.mrb[0].mxu0
    %v2005 = vpop.f32.mrb[0].mxu0
    %v2006 = vadd.f32 0.0, %v2005
    %v2007 = vpop.f32.mrb[0].mxu0
    %2008 = vmatprep.mubr.bf16.mxu0 0
    %2009 = vmatmul.mubr.bf16.gmra.mrb[0].mxu0 %v1950
    %v2010 = vpop.f32.mrb[0].mxu0
    %v2011 = vadd.f32 0.0, %v2010
    %v2012 = vpop.f32.mrb[0].mxu0
    %v2013 = vpop.f32.mrb[0].mxu0
    %v2014 = vadd.f32 0.0, %v2013
    %v2015 = vpop.f32.mrb[0].mxu0
    %2016 = vdwg.mxu0
    %v2017 = vpack.c.bf16 %v1987, %v1987
    %v2018 = vpack.c.bf16 %v1990, %v1990
    %v2019 = vpack.c.bf16 %v1995, %v1995
    %v2020 = vpack.c.bf16 %v1998, %v1998
    %v2021 = vpack.c.bf16 %v2003, %v2003
    %v2022 = vpack.c.bf16 %v2006, %v2006
    %v2023 = vpack.c.bf16 %v2011, %v2011
    %v2024 = vpack.c.bf16 %v2014, %v2014
    %2026 = vrot.lane.b32.xlu0 %v2017, 96
    %v2027 = vpop.permute.xlu0 %2026
    %v2029 = vsel %vm142, %v2027, 0
    %v2032 = vsel %vm142, %v2017, 0
    %2034 = vmatprep.subr.bf16.mxu0 0
    %2035 = vmatpush1.bf16.xpose.msra.mxu0 %v2032
    %2036 = vmatprep.subr.bf16.mxu0 0
    %2037 = vmatpush1.bf16.xpose.msra.mxu0 0
    %2038 = vmatprep.subr.bf16.mxu0 0
    %2039 = vmatpush1.bf16.xpose.msra.mxu0 0
    %2040 = vmatprep.subr.bf16.mxu0 0
    %2041 = vmatpush1.bf16.xpose.msra.mxu0 0
    %2042 = vmatprep.subr.bf16.mxu0 0
    %2043 = vmatpush1.bf16.xpose.msra.mxu0 0
    %2044 = vmatprep.subr.bf16.mxu0 0
    %2045 = vmatpush1.bf16.xpose.msra.mxu0 0
    %2046 = vmatprep.subr.bf16.mxu0 0
    %2047 = vmatpush1.bf16.xpose.msra.mxu0 0
    %2048 = vmatprep.subr.bf16.mxu0 0
    %2049 = vmatpush1.bf16.xpose.msra.mxu0 0
    %2050 = vmatprep.subr.bf16.mxu0 0
    %2051 = vmatpush1.bf16.xpose.msra.mxu0 0
    %2052 = vmatprep.subr.bf16.mxu0 0
    %2053 = vmatpush1.bf16.xpose.msra.mxu0 0
    %2054 = vmatprep.subr.bf16.mxu0 0
    %2055 = vmatpush1.bf16.xpose.msra.mxu0 0
    %2056 = vmatprep.subr.bf16.mxu0 0
    %2057 = vmatpush1.bf16.xpose.msra.mxu0 0
    %2058 = vmatprep.subr.bf16.mxu0 0
    %2059 = vmatpush1.bf16.xpose.msra.mxu0 0
    %2060 = vmatprep.subr.bf16.mxu0 0
    %2061 = vmatpush1.bf16.xpose.msra.mxu0 0
    %2062 = vmatprep.subr.bf16.mxu0 0
    %2063 = vmatpush1.bf16.xpose.msra.mxu0 0
    %2064 = vmatprep.subr.bf16.mxu0 0
    %2065 = vmatpush1.bf16.xpose.msra.mxu0 0
    %2066 = vmatprep.mubr.bf16.mxu0 0
    %2067 = vmatmul.mubr.bf16.gmra.mrb[0].mxu0 %v2029
    %v2068 = vpop.f32.mrb[0].mxu0
    %v2069 = vadd.f32 0.0, %v2068
    %v2070 = vpop.f32.mrb[0].mxu0
    %v2071 = vpop.f32.mrb[0].mxu0
    %v2072 = vpop.f32.mrb[0].mxu0
    %2073 = vdwg.mxu0
    %2075 = vrot.lane.b32.xlu0 %v2018, 96
    %v2076 = vpop.permute.xlu0 %2075
    %v2078 = vsel %vm142, %v2076, 0
    %v2081 = vsel %vm142, %v2018, 0
    %2083 = vmatprep.subr.bf16.mxu0 0
    %2084 = vmatpush1.bf16.xpose.msra.mxu0 %v2081
    %2085 = vmatprep.subr.bf16.mxu0 0
    %2086 = vmatpush1.bf16.xpose.msra.mxu0 0
    %2087 = vmatprep.subr.bf16.mxu0 0
    %2088 = vmatpush1.bf16.xpose.msra.mxu0 0
    %2089 = vmatprep.subr.bf16.mxu0 0
    %2090 = vmatpush1.bf16.xpose.msra.mxu0 0
    %2091 = vmatprep.subr.bf16.mxu0 0
    %2092 = vmatpush1.bf16.xpose.msra.mxu0 0
    %2093 = vmatprep.subr.bf16.mxu0 0
    %2094 = vmatpush1.bf16.xpose.msra.mxu0 0
    %2095 = vmatprep.subr.bf16.mxu0 0
    %2096 = vmatpush1.bf16.xpose.msra.mxu0 0
    %2097 = vmatprep.subr.bf16.mxu0 0
    %2098 = vmatpush1.bf16.xpose.msra.mxu0 0
    %2099 = vmatprep.subr.bf16.mxu0 0
    %2100 = vmatpush1.bf16.xpose.msra.mxu0 0
    %2101 = vmatprep.subr.bf16.mxu0 0
    %2102 = vmatpush1.bf16.xpose.msra.mxu0 0
    %2103 = vmatprep.subr.bf16.mxu0 0
    %2104 = vmatpush1.bf16.xpose.msra.mxu0 0
    %2105 = vmatprep.subr.bf16.mxu0 0
    %2106 = vmatpush1.bf16.xpose.msra.mxu0 0
    %2107 = vmatprep.subr.bf16.mxu0 0
    %2108 = vmatpush1.bf16.xpose.msra.mxu0 0
    %2109 = vmatprep.subr.bf16.mxu0 0
    %2110 = vmatpush1.bf16.xpose.msra.mxu0 0
    %2111 = vmatprep.subr.bf16.mxu0 0
    %2112 = vmatpush1.bf16.xpose.msra.mxu0 0
    %2113 = vmatprep.subr.bf16.mxu0 0
    %2114 = vmatpush1.bf16.xpose.msra.mxu0 0
    %2115 = vmatprep.mubr.bf16.mxu0 0
    %2116 = vmatmul.mubr.bf16.gmra.mrb[0].mxu0 %v2078
    %v2117 = vpop.f32.mrb[0].mxu0
    %v2118 = vadd.f32 0.0, %v2117
    %v2119 = vpop.f32.mrb[0].mxu0
    %v2120 = vpop.f32.mrb[0].mxu0
    %v2121 = vpop.f32.mrb[0].mxu0
    %2122 = vdwg.mxu0
    %2124 = vrot.lane.b32.xlu0 %v2019, 96
    %v2125 = vpop.permute.xlu0 %2124
    %v2127 = vsel %vm142, %v2125, 0
    %v2130 = vsel %vm142, %v2019, 0
    %2132 = vmatprep.subr.bf16.mxu0 0
    %2133 = vmatpush1.bf16.xpose.msra.mxu0 %v2130
    %2134 = vmatprep.subr.bf16.mxu0 0
    %2135 = vmatpush1.bf16.xpose.msra.mxu0 0
    %2136 = vmatprep.subr.bf16.mxu0 0
    %2137 = vmatpush1.bf16.xpose.msra.mxu0 0
    %2138 = vmatprep.subr.bf16.mxu0 0
    %2139 = vmatpush1.bf16.xpose.msra.mxu0 0
    %2140 = vmatprep.subr.bf16.mxu0 0
    %2141 = vmatpush1.bf16.xpose.msra.mxu0 0
    %2142 = vmatprep.subr.bf16.mxu0 0
    %2143 = vmatpush1.bf16.xpose.msra.mxu0 0
    %2144 = vmatprep.subr.bf16.mxu0 0
    %2145 = vmatpush1.bf16.xpose.msra.mxu0 0
    %2146 = vmatprep.subr.bf16.mxu0 0
    %2147 = vmatpush1.bf16.xpose.msra.mxu0 0
    %2148 = vmatprep.subr.bf16.mxu0 0
    %2149 = vmatpush1.bf16.xpose.msra.mxu0 0
    %2150 = vmatprep.subr.bf16.mxu0 0
    %2151 = vmatpush1.bf16.xpose.msra.mxu0 0
    %2152 = vmatprep.subr.bf16.mxu0 0
    %2153 = vmatpush1.bf16.xpose.msra.mxu0 0
    %2154 = vmatprep.subr.bf16.mxu0 0
    %2155 = vmatpush1.bf16.xpose.msra.mxu0 0
    %2156 = vmatprep.subr.bf16.mxu0 0
    %2157 = vmatpush1.bf16.xpose.msra.mxu0 0
    %2158 = vmatprep.subr.bf16.mxu0 0
    %2159 = vmatpush1.bf16.xpose.msra.mxu0 0
    %2160 = vmatprep.subr.bf16.mxu0 0
    %2161 = vmatpush1.bf16.xpose.msra.mxu0 0
    %2162 = vmatprep.subr.bf16.mxu0 0
    %2163 = vmatpush1.bf16.xpose.msra.mxu0 0
    %2164 = vmatprep.mubr.bf16.mxu0 0
    %2165 = vmatmul.mubr.bf16.gmra.mrb[0].mxu0 %v2127
    %v2166 = vpop.f32.mrb[0].mxu0
    %v2167 = vadd.f32 0.0, %v2166
    %v2168 = vpop.f32.mrb[0].mxu0
    %v2169 = vpop.f32.mrb[0].mxu0
    %v2170 = vpop.f32.mrb[0].mxu0
    %2171 = vdwg.mxu0
    %2173 = vrot.lane.b32.xlu0 %v2020, 96
    %v2174 = vpop.permute.xlu0 %2173
    %v2176 = vsel %vm142, %v2174, 0
    %v2179 = vsel %vm142, %v2020, 0
    %2181 = vmatprep.subr.bf16.mxu0 0
    %2182 = vmatpush1.bf16.xpose.msra.mxu0 %v2179
    %2183 = vmatprep.subr.bf16.mxu0 0
    %2184 = vmatpush1.bf16.xpose.msra.mxu0 0
    %2185 = vmatprep.subr.bf16.mxu0 0
    %2186 = vmatpush1.bf16.xpose.msra.mxu0 0
    %2187 = vmatprep.subr.bf16.mxu0 0
    %2188 = vmatpush1.bf16.xpose.msra.mxu0 0
    %2189 = vmatprep.subr.bf16.mxu0 0
    %2190 = vmatpush1.bf16.xpose.msra.mxu0 0
    %2191 = vmatprep.subr.bf16.mxu0 0
    %2192 = vmatpush1.bf16.xpose.msra.mxu0 0
    %2193 = vmatprep.subr.bf16.mxu0 0
    %2194 = vmatpush1.bf16.xpose.msra.mxu0 0
    %2195 = vmatprep.subr.bf16.mxu0 0
    %2196 = vmatpush1.bf16.xpose.msra.mxu0 0
    %2197 = vmatprep.subr.bf16.mxu0 0
    %2198 = vmatpush1.bf16.xpose.msra.mxu0 0
    %2199 = vmatprep.subr.bf16.mxu0 0
    %2200 = vmatpush1.bf16.xpose.msra.mxu0 0
    %2201 = vmatprep.subr.bf16.mxu0 0
    %2202 = vmatpush1.bf16.xpose.msra.mxu0 0
    %2203 = vmatprep.subr.bf16.mxu0 0
    %2204 = vmatpush1.bf16.xpose.msra.mxu0 0
    %2205 = vmatprep.subr.bf16.mxu0 0
    %2206 = vmatpush1.bf16.xpose.msra.mxu0 0
    %2207 = vmatprep.subr.bf16.mxu0 0
    %2208 = vmatpush1.bf16.xpose.msra.mxu0 0
    %2209 = vmatprep.subr.bf16.mxu0 0
    %2210 = vmatpush1.bf16.xpose.msra.mxu0 0
    %2211 = vmatprep.subr.bf16.mxu0 0
    %2212 = vmatpush1.bf16.xpose.msra.mxu0 0
    %2213 = vmatprep.mubr.bf16.mxu0 0
    %2214 = vmatmul.mubr.bf16.gmra.mrb[0].mxu0 %v2176
    %v2215 = vpop.f32.mrb[0].mxu0
    %v2216 = vadd.f32 0.0, %v2215
    %v2217 = vpop.f32.mrb[0].mxu0
    %v2218 = vpop.f32.mrb[0].mxu0
    %v2219 = vpop.f32.mrb[0].mxu0
    %2220 = vdwg.mxu0
    %2222 = vrot.lane.b32.xlu0 %v2021, 96
    %v2223 = vpop.permute.xlu0 %2222
    %v2225 = vsel %vm142, %v2223, 0
    %v2228 = vsel %vm142, %v2021, 0
    %2230 = vmatprep.subr.bf16.mxu0 0
    %2231 = vmatpush1.bf16.xpose.msra.mxu0 %v2228
    %2232 = vmatprep.subr.bf16.mxu0 0
    %2233 = vmatpush1.bf16.xpose.msra.mxu0 0
    %2234 = vmatprep.subr.bf16.mxu0 0
    %2235 = vmatpush1.bf16.xpose.msra.mxu0 0
    %2236 = vmatprep.subr.bf16.mxu0 0
    %2237 = vmatpush1.bf16.xpose.msra.mxu0 0
    %2238 = vmatprep.subr.bf16.mxu0 0
    %2239 = vmatpush1.bf16.xpose.msra.mxu0 0
    %2240 = vmatprep.subr.bf16.mxu0 0
    %2241 = vmatpush1.bf16.xpose.msra.mxu0 0
    %2242 = vmatprep.subr.bf16.mxu0 0
    %2243 = vmatpush1.bf16.xpose.msra.mxu0 0
    %2244 = vmatprep.subr.bf16.mxu0 0
    %2245 = vmatpush1.bf16.xpose.msra.mxu0 0
    %2246 = vmatprep.subr.bf16.mxu0 0
    %2247 = vmatpush1.bf16.xpose.msra.mxu0 0
    %2248 = vmatprep.subr.bf16.mxu0 0
    %2249 = vmatpush1.bf16.xpose.msra.mxu0 0
    %2250 = vmatprep.subr.bf16.mxu0 0
    %2251 = vmatpush1.bf16.xpose.msra.mxu0 0
    %2252 = vmatprep.subr.bf16.mxu0 0
    %2253 = vmatpush1.bf16.xpose.msra.mxu0 0
    %2254 = vmatprep.subr.bf16.mxu0 0
    %2255 = vmatpush1.bf16.xpose.msra.mxu0 0
    %2256 = vmatprep.subr.bf16.mxu0 0
    %2257 = vmatpush1.bf16.xpose.msra.mxu0 0
    %2258 = vmatprep.subr.bf16.mxu0 0
    %2259 = vmatpush1.bf16.xpose.msra.mxu0 0
    %2260 = vmatprep.subr.bf16.mxu0 0
    %2261 = vmatpush1.bf16.xpose.msra.mxu0 0
    %2262 = vmatprep.mubr.bf16.mxu0 0
    %2263 = vmatmul.mubr.bf16.gmra.mrb[0].mxu0 %v2225
    %v2264 = vpop.f32.mrb[0].mxu0
    %v2265 = vadd.f32 0.0, %v2264
    %v2266 = vpop.f32.mrb[0].mxu0
    %v2267 = vpop.f32.mrb[0].mxu0
    %v2268 = vpop.f32.mrb[0].mxu0
    %2269 = vdwg.mxu0
    %2271 = vrot.lane.b32.xlu0 %v2022, 96
    %v2272 = vpop.permute.xlu0 %2271
    %v2274 = vsel %vm142, %v2272, 0
    %v2277 = vsel %vm142, %v2022, 0
    %2279 = vmatprep.subr.bf16.mxu0 0
    %2280 = vmatpush1.bf16.xpose.msra.mxu0 %v2277
    %2281 = vmatprep.subr.bf16.mxu0 0
    %2282 = vmatpush1.bf16.xpose.msra.mxu0 0
    %2283 = vmatprep.subr.bf16.mxu0 0
    %2284 = vmatpush1.bf16.xpose.msra.mxu0 0
    %2285 = vmatprep.subr.bf16.mxu0 0
    %2286 = vmatpush1.bf16.xpose.msra.mxu0 0
    %2287 = vmatprep.subr.bf16.mxu0 0
    %2288 = vmatpush1.bf16.xpose.msra.mxu0 0
    %2289 = vmatprep.subr.bf16.mxu0 0
    %2290 = vmatpush1.bf16.xpose.msra.mxu0 0
    %2291 = vmatprep.subr.bf16.mxu0 0
    %2292 = vmatpush1.bf16.xpose.msra.mxu0 0
    %2293 = vmatprep.subr.bf16.mxu0 0
    %2294 = vmatpush1.bf16.xpose.msra.mxu0 0
    %2295 = vmatprep.subr.bf16.mxu0 0
    %2296 = vmatpush1.bf16.xpose.msra.mxu0 0
    %2297 = vmatprep.subr.bf16.mxu0 0
    %2298 = vmatpush1.bf16.xpose.msra.mxu0 0
    %2299 = vmatprep.subr.bf16.mxu0 0
    %2300 = vmatpush1.bf16.xpose.msra.mxu0 0
    %2301 = vmatprep.subr.bf16.mxu0 0
    %2302 = vmatpush1.bf16.xpose.msra.mxu0 0
    %2303 = vmatprep.subr.bf16.mxu0 0
    %2304 = vmatpush1.bf16.xpose.msra.mxu0 0
    %2305 = vmatprep.subr.bf16.mxu0 0
    %2306 = vmatpush1.bf16.xpose.msra.mxu0 0
    %2307 = vmatprep.subr.bf16.mxu0 0
    %2308 = vmatpush1.bf16.xpose.msra.mxu0 0
    %2309 = vmatprep.subr.bf16.mxu0 0
    %2310 = vmatpush1.bf16.xpose.msra.mxu0 0
    %2311 = vmatprep.mubr.bf16.mxu0 0
    %2312 = vmatmul.mubr.bf16.gmra.mrb[0].mxu0 %v2274
    %v2313 = vpop.f32.mrb[0].mxu0
    %v2314 = vadd.f32 0.0, %v2313
    %v2315 = vpop.f32.mrb[0].mxu0
    %v2316 = vpop.f32.mrb[0].mxu0
    %v2317 = vpop.f32.mrb[0].mxu0
    %2318 = vdwg.mxu0
    %2320 = vrot.lane.b32.xlu0 %v2023, 96
    %v2321 = vpop.permute.xlu0 %2320
    %v2323 = vsel %vm142, %v2321, 0
    %v2326 = vsel %vm142, %v2023, 0
    %2328 = vmatprep.subr.bf16.mxu0 0
    %2329 = vmatpush1.bf16.xpose.msra.mxu0 %v2326
    %2330 = vmatprep.subr.bf16.mxu0 0
    %2331 = vmatpush1.bf16.xpose.msra.mxu0 0
    %2332 = vmatprep.subr.bf16.mxu0 0
    %2333 = vmatpush1.bf16.xpose.msra.mxu0 0
    %2334 = vmatprep.subr.bf16.mxu0 0
    %2335 = vmatpush1.bf16.xpose.msra.mxu0 0
    %2336 = vmatprep.subr.bf16.mxu0 0
    %2337 = vmatpush1.bf16.xpose.msra.mxu0 0
    %2338 = vmatprep.subr.bf16.mxu0 0
    %2339 = vmatpush1.bf16.xpose.msra.mxu0 0
    %2340 = vmatprep.subr.bf16.mxu0 0
    %2341 = vmatpush1.bf16.xpose.msra.mxu0 0
    %2342 = vmatprep.subr.bf16.mxu0 0
    %2343 = vmatpush1.bf16.xpose.msra.mxu0 0
    %2344 = vmatprep.subr.bf16.mxu0 0
    %2345 = vmatpush1.bf16.xpose.msra.mxu0 0
    %2346 = vmatprep.subr.bf16.mxu0 0
    %2347 = vmatpush1.bf16.xpose.msra.mxu0 0
    %2348 = vmatprep.subr.bf16.mxu0 0
    %2349 = vmatpush1.bf16.xpose.msra.mxu0 0
    %2350 = vmatprep.subr.bf16.mxu0 0
    %2351 = vmatpush1.bf16.xpose.msra.mxu0 0
    %2352 = vmatprep.subr.bf16.mxu0 0
    %2353 = vmatpush1.bf16.xpose.msra.mxu0 0
    %2354 = vmatprep.subr.bf16.mxu0 0
    %2355 = vmatpush1.bf16.xpose.msra.mxu0 0
    %2356 = vmatprep.subr.bf16.mxu0 0
    %2357 = vmatpush1.bf16.xpose.msra.mxu0 0
    %2358 = vmatprep.subr.bf16.mxu0 0
    %2359 = vmatpush1.bf16.xpose.msra.mxu0 0
    %2360 = vmatprep.mubr.bf16.mxu0 0
    %2361 = vmatmul.mubr.bf16.gmra.mrb[0].mxu0 %v2323
    %v2362 = vpop.f32.mrb[0].mxu0
    %v2363 = vadd.f32 0.0, %v2362
    %v2364 = vpop.f32.mrb[0].mxu0
    %v2365 = vpop.f32.mrb[0].mxu0
    %v2366 = vpop.f32.mrb[0].mxu0
    %2367 = vdwg.mxu0
    %2369 = vrot.lane.b32.xlu0 %v2024, 96
    %v2370 = vpop.permute.xlu0 %2369
    %v2372 = vsel %vm142, %v2370, 0
    %v2375 = vsel %vm142, %v2024, 0
    %2377 = vmatprep.subr.bf16.mxu0 0
    %2378 = vmatpush1.bf16.xpose.msra.mxu0 %v2375
    %2379 = vmatprep.subr.bf16.mxu0 0
    %2380 = vmatpush1.bf16.xpose.msra.mxu0 0
    %2381 = vmatprep.subr.bf16.mxu0 0
    %2382 = vmatpush1.bf16.xpose.msra.mxu0 0
    %2383 = vmatprep.subr.bf16.mxu0 0
    %2384 = vmatpush1.bf16.xpose.msra.mxu0 0
    %2385 = vmatprep.subr.bf16.mxu0 0
    %2386 = vmatpush1.bf16.xpose.msra.mxu0 0
    %2387 = vmatprep.subr.bf16.mxu0 0
    %2388 = vmatpush1.bf16.xpose.msra.mxu0 0
    %2389 = vmatprep.subr.bf16.mxu0 0
    %2390 = vmatpush1.bf16.xpose.msra.mxu0 0
    %2391 = vmatprep.subr.bf16.mxu0 0
    %2392 = vmatpush1.bf16.xpose.msra.mxu0 0
    %2393 = vmatprep.subr.bf16.mxu0 0
    %2394 = vmatpush1.bf16.xpose.msra.mxu0 0
    %2395 = vmatprep.subr.bf16.mxu0 0
    %2396 = vmatpush1.bf16.xpose.msra.mxu0 0
    %2397 = vmatprep.subr.bf16.mxu0 0
    %2398 = vmatpush1.bf16.xpose.msra.mxu0 0
    %2399 = vmatprep.subr.bf16.mxu0 0
    %2400 = vmatpush1.bf16.xpose.msra.mxu0 0
    %2401 = vmatprep.subr.bf16.mxu0 0
    %2402 = vmatpush1.bf16.xpose.msra.mxu0 0
    %2403 = vmatprep.subr.bf16.mxu0 0
    %2404 = vmatpush1.bf16.xpose.msra.mxu0 0
    %2405 = vmatprep.subr.bf16.mxu0 0
    %2406 = vmatpush1.bf16.xpose.msra.mxu0 0
    %2407 = vmatprep.subr.bf16.mxu0 0
    %2408 = vmatpush1.bf16.xpose.msra.mxu0 0
    %2409 = vmatprep.mubr.bf16.mxu0 0
    %2410 = vmatmul.mubr.bf16.gmra.mrb[0].mxu0 %v2372
    %v2411 = vpop.f32.mrb[0].mxu0
    %v2412 = vadd.f32 0.0, %v2411
    %v2413 = vpop.f32.mrb[0].mxu0
    %v2414 = vpop.f32.mrb[0].mxu0
    %v2415 = vpop.f32.mrb[0].mxu0
    %2416 = vdwg.mxu0
    %v2417 = vmul.f32 %v2069, 0.17677669
    %v2418 = vmul.f32 %v2118, 0.17677669
    %v2419 = vmul.f32 %v2167, 0.17677669
    %v2420 = vmul.f32 %v2216, 0.17677669
    %v2421 = vmul.f32 %v2265, 0.17677669
    %v2422 = vmul.f32 %v2314, 0.17677669
    %v2423 = vmul.f32 %v2363, 0.17677669
    %v2424 = vmul.f32 %v2412, 0.17677669
    %v2425 = vld [vmem:[%s2] sm:$0x1]
    %v2426 = vld [vmem:[%s2 + $0x1] sm:$0x1]
    %v2427 = vld [vmem:[%s2 + $0x2] sm:$0x1]
    %v2428 = vld [vmem:[%s2 + $0x3] sm:$0x1]
    %v2429 = vld [vmem:[%s2 + $0x4] sm:$0x1]
    %v2430 = vld [vmem:[%s2 + $0x5] sm:$0x1]
    %v2431 = vld [vmem:[%s2 + $0x6] sm:$0x1]
    %v2432 = vld [vmem:[%s2 + $0x7] sm:$0x1]
    %v2433 = vsub.f32 1.0, %v2425
    %v2434 = vsub.f32 1.0, %v2426
    %v2435 = vsub.f32 1.0, %v2427
    %v2436 = vsub.f32 1.0, %v2428
    %v2437 = vsub.f32 1.0, %v2429
    %v2438 = vsub.f32 1.0, %v2430
    %v2439 = vsub.f32 1.0, %v2431
    %v2440 = vsub.f32 1.0, %v2432
    %v2441 = vmul.f32 %v2433, -100000.0
    %v2442 = vmul.f32 %v2434, -100000.0
    %v2443 = vmul.f32 %v2435, -100000.0
    %v2444 = vmul.f32 %v2436, -100000.0
    %v2445 = vmul.f32 %v2437, -100000.0
    %v2446 = vmul.f32 %v2438, -100000.0
    %v2447 = vmul.f32 %v2439, -100000.0
    %v2448 = vmul.f32 %v2440, -100000.0
    %v2457 = vlaneseq
    %v2458 = vshrl.u32 %v2457, 7
    %v2459 = vsub.s32 0, %v2458
    %v2460 = vrot.slane %v2441, %v2459
    %v2461 = vlaneseq
    %v2462 = vshrl.u32 %v2461, 7
    %v2463 = vsub.s32 0, %v2462
    %v2464 = vrot.slane %v2442, %v2463
    %v2465 = vlaneseq
    %v2466 = vshrl.u32 %v2465, 7
    %v2467 = vsub.s32 0, %v2466
    %v2468 = vrot.slane %v2443, %v2467
    %v2469 = vlaneseq
    %v2470 = vshrl.u32 %v2469, 7
    %v2471 = vsub.s32 0, %v2470
    %v2472 = vrot.slane %v2444, %v2471
    %v2473 = vlaneseq
    %v2474 = vshrl.u32 %v2473, 7
    %v2475 = vsub.s32 0, %v2474
    %v2476 = vrot.slane %v2445, %v2475
    %v2477 = vlaneseq
    %v2478 = vshrl.u32 %v2477, 7
    %v2479 = vsub.s32 0, %v2478
    %v2480 = vrot.slane %v2446, %v2479
    %v2481 = vlaneseq
    %v2482 = vshrl.u32 %v2481, 7
    %v2483 = vsub.s32 0, %v2482
    %v2484 = vrot.slane %v2447, %v2483
    %v2485 = vlaneseq
    %v2486 = vshrl.u32 %v2485, 7
    %v2487 = vsub.s32 0, %v2486
    %v2488 = vrot.slane %v2448, %v2487
    %v2497 = vadd.f32 %v2417, %v2460
    %v2498 = vadd.f32 %v2418, %v2464
    %v2499 = vadd.f32 %v2419, %v2468
    %v2500 = vadd.f32 %v2420, %v2472
    %v2501 = vadd.f32 %v2421, %v2476
    %v2502 = vadd.f32 %v2422, %v2480
    %v2503 = vadd.f32 %v2423, %v2484
    %v2504 = vadd.f32 %v2424, %v2488
    %vm2505 = vcmask 64512
    %v2506 = vsel %vm2505, %v2497, -inf
    %2507 = vmax.xlane.f32.xlu0 %v2506
    %v2508 = vpop.xlane.xlu0 %2507
    %v2509 = vsel %vm2505, %v2498, -inf
    %2510 = vmax.xlane.f32.xlu0 %v2509
    %v2511 = vpop.xlane.xlu0 %2510
    %v2512 = vsel %vm2505, %v2499, -inf
    %2513 = vmax.xlane.f32.xlu0 %v2512
    %v2514 = vpop.xlane.xlu0 %2513
    %v2515 = vsel %vm2505, %v2500, -inf
    %2516 = vmax.xlane.f32.xlu0 %v2515
    %v2517 = vpop.xlane.xlu0 %2516
    %v2518 = vsel %vm2505, %v2501, -inf
    %2519 = vmax.xlane.f32.xlu0 %v2518
    %v2520 = vpop.xlane.xlu0 %2519
    %v2521 = vsel %vm2505, %v2502, -inf
    %2522 = vmax.xlane.f32.xlu0 %v2521
    %v2523 = vpop.xlane.xlu0 %2522
    %v2524 = vsel %vm2505, %v2503, -inf
    %2525 = vmax.xlane.f32.xlu0 %v2524
    %v2526 = vpop.xlane.xlu0 %2525
    %v2527 = vsel %vm2505, %v2504, -inf
    %2528 = vmax.xlane.f32.xlu0 %v2527
    %v2529 = vpop.xlane.xlu0 %2528
    %v2530 = vsub.f32 %v2497, %v2508
    %v2531 = vsub.f32 %v2498, %v2511
    %v2532 = vsub.f32 %v2499, %v2514
    %v2533 = vsub.f32 %v2500, %v2517
    %v2534 = vsub.f32 %v2501, %v2520
    %v2535 = vsub.f32 %v2502, %v2523
    %v2536 = vsub.f32 %v2503, %v2526
    %v2537 = vsub.f32 %v2504, %v2529
    %v2538 = vmul.f32 %v2530, 1.442695
    %v2539 = vpow.pop %v2538
    %v2540 = vmul.f32 %v2531, 1.442695
    %v2541 = vpow.pop %v2540
    %v2542 = vmul.f32 %v2532, 1.442695
    %v2543 = vpow.pop %v2542
    %v2544 = vmul.f32 %v2533, 1.442695
    %v2545 = vpow.pop %v2544
    %v2546 = vmul.f32 %v2534, 1.442695
    %v2547 = vpow.pop %v2546
    %v2548 = vmul.f32 %v2535, 1.442695
    %v2549 = vpow.pop %v2548
    %v2550 = vmul.f32 %v2536, 1.442695
    %v2551 = vpow.pop %v2550
    %v2552 = vmul.f32 %v2537, 1.442695
    %v2553 = vpow.pop %v2552
    %v2554 = vsel %vm2505, %v2539, 0.0
    %2555 = vadd.xlane.f32.xlu0 %v2554
    %v2556 = vpop.xlane.xlu0 %2555
    %v2557 = vsel %vm2505, %v2541, 0.0
    %2558 = vadd.xlane.f32.xlu0 %v2557
    %v2559 = vpop.xlane.xlu0 %2558
    %v2560 = vsel %vm2505, %v2543, 0.0
    %2561 = vadd.xlane.f32.xlu0 %v2560
    %v2562 = vpop.xlane.xlu0 %2561
    %v2563 = vsel %vm2505, %v2545, 0.0
    %2564 = vadd.xlane.f32.xlu0 %v2563
    %v2565 = vpop.xlane.xlu0 %2564
    %v2566 = vsel %vm2505, %v2547, 0.0
    %2567 = vadd.xlane.f32.xlu0 %v2566
    %v2568 = vpop.xlane.xlu0 %2567
    %v2569 = vsel %vm2505, %v2549, 0.0
    %2570 = vadd.xlane.f32.xlu0 %v2569
    %v2571 = vpop.xlane.xlu0 %2570
    %v2572 = vsel %vm2505, %v2551, 0.0
    %2573 = vadd.xlane.f32.xlu0 %v2572
    %v2574 = vpop.xlane.xlu0 %2573
    %v2575 = vsel %vm2505, %v2553, 0.0
    %2576 = vadd.xlane.f32.xlu0 %v2575
    %v2577 = vpop.xlane.xlu0 %2576
    %v2578 = vrcp.pop %v2556
    %v2579 = vmul.f32 %v2539, %v2578
    %v2580 = vrcp.pop %v2559
    %v2581 = vmul.f32 %v2541, %v2580
    %v2582 = vrcp.pop %v2562
    %v2583 = vmul.f32 %v2543, %v2582
    %v2584 = vrcp.pop %v2565
    %v2585 = vmul.f32 %v2545, %v2584
    %v2586 = vrcp.pop %v2568
    %v2587 = vmul.f32 %v2547, %v2586
    %v2588 = vrcp.pop %v2571
    %v2589 = vmul.f32 %v2549, %v2588
    %v2590 = vrcp.pop %v2574
    %v2591 = vmul.f32 %v2551, %v2590
    %v2592 = vrcp.pop %v2577
    %v2593 = vmul.f32 %v2553, %v2592
    %v2594 = vpack.c.bf16 %v2579, %v2579
    %v2595 = vpack.c.bf16 %v2581, %v2581
    %v2596 = vpack.c.bf16 %v2583, %v2583
    %v2597 = vpack.c.bf16 %v2585, %v2585
    %v2598 = vpack.c.bf16 %v2587, %v2587
    %v2599 = vpack.c.bf16 %v2589, %v2589
    %v2600 = vpack.c.bf16 %v2591, %v2591
    %v2601 = vpack.c.bf16 %v2593, %v2593
    %2602 = vrot.lane.b32.xlu0 %v2017, 64
    %v2603 = vpop.permute.xlu0 %2602
    %v2605 = vsel %vm2505, %v2594, 0
    %vm2607 = vcmask 1043456
    %v2609 = vsel %vm2607, %v2603, 0
    %2611 = vmatprep.subr.bf16.mxu0 0
    %2612 = vmatpush1.bf16.msra.mxu0 %v2609
    %2613 = vmatprep.subr.bf16.mxu0 0
    %2614 = vmatpush1.bf16.msra.mxu0 0
    %2615 = vmatprep.subr.bf16.mxu0 0
    %2616 = vmatpush1.bf16.msra.mxu0 0
    %2617 = vmatprep.subr.bf16.mxu0 0
    %2618 = vmatpush1.bf16.msra.mxu0 0
    %2619 = vmatprep.subr.bf16.mxu0 0
    %2620 = vmatpush1.bf16.msra.mxu0 0
    %2621 = vmatprep.subr.bf16.mxu0 0
    %2622 = vmatpush1.bf16.msra.mxu0 0
    %2623 = vmatprep.subr.bf16.mxu0 0
    %2624 = vmatpush1.bf16.msra.mxu0 0
    %2625 = vmatprep.subr.bf16.mxu0 0
    %2626 = vmatpush1.bf16.msra.mxu0 0
    %2627 = vmatprep.subr.bf16.mxu0 0
    %2628 = vmatpush1.bf16.msra.mxu0 0
    %2629 = vmatprep.subr.bf16.mxu0 0
    %2630 = vmatpush1.bf16.msra.mxu0 0
    %2631 = vmatprep.subr.bf16.mxu0 0
    %2632 = vmatpush1.bf16.msra.mxu0 0
    %2633 = vmatprep.subr.bf16.mxu0 0
    %2634 = vmatpush1.bf16.msra.mxu0 0
    %2635 = vmatprep.subr.bf16.mxu0 0
    %2636 = vmatpush1.bf16.msra.mxu0 0
    %2637 = vmatprep.subr.bf16.mxu0 0
    %2638 = vmatpush1.bf16.msra.mxu0 0
    %2639 = vmatprep.subr.bf16.mxu0 0
    %2640 = vmatpush1.bf16.msra.mxu0 0
    %2641 = vmatprep.subr.bf16.mxu0 0
    %2642 = vmatpush1.bf16.msra.mxu0 0
    %2643 = vmatprep.mubr.bf16.mxu0 0
    %2644 = vmatmul.mubr.bf16.gmra.mrb[0].mxu0 %v2605
    %v2645 = vpop.f32.mrb[0].mxu0
    %v2646 = vadd.f32 0.0, %v2645
    %v2647 = vpop.f32.mrb[0].mxu0
    %v2648 = vpop.f32.mrb[0].mxu0
    %v2649 = vpop.f32.mrb[0].mxu0
    %2650 = vdwg.mxu0
    %2651 = vrot.lane.b32.xlu0 %v2018, 64
    %v2652 = vpop.permute.xlu0 %2651
    %v2654 = vsel %vm2505, %v2595, 0
    %v2657 = vsel %vm2607, %v2652, 0
    %2659 = vmatprep.subr.bf16.mxu0 0
    %2660 = vmatpush1.bf16.msra.mxu0 %v2657
    %2661 = vmatprep.subr.bf16.mxu0 0
    %2662 = vmatpush1.bf16.msra.mxu0 0
    %2663 = vmatprep.subr.bf16.mxu0 0
    %2664 = vmatpush1.bf16.msra.mxu0 0
    %2665 = vmatprep.subr.bf16.mxu0 0
    %2666 = vmatpush1.bf16.msra.mxu0 0
    %2667 = vmatprep.subr.bf16.mxu0 0
    %2668 = vmatpush1.bf16.msra.mxu0 0
    %2669 = vmatprep.subr.bf16.mxu0 0
    %2670 = vmatpush1.bf16.msra.mxu0 0
    %2671 = vmatprep.subr.bf16.mxu0 0
    %2672 = vmatpush1.bf16.msra.mxu0 0
    %2673 = vmatprep.subr.bf16.mxu0 0
    %2674 = vmatpush1.bf16.msra.mxu0 0
    %2675 = vmatprep.subr.bf16.mxu0 0
    %2676 = vmatpush1.bf16.msra.mxu0 0
    %2677 = vmatprep.subr.bf16.mxu0 0
    %2678 = vmatpush1.bf16.msra.mxu0 0
    %2679 = vmatprep.subr.bf16.mxu0 0
    %2680 = vmatpush1.bf16.msra.mxu0 0
    %2681 = vmatprep.subr.bf16.mxu0 0
    %2682 = vmatpush1.bf16.msra.mxu0 0
    %2683 = vmatprep.subr.bf16.mxu0 0
    %2684 = vmatpush1.bf16.msra.mxu0 0
    %2685 = vmatprep.subr.bf16.mxu0 0
    %2686 = vmatpush1.bf16.msra.mxu0 0
    %2687 = vmatprep.subr.bf16.mxu0 0
    %2688 = vmatpush1.bf16.msra.mxu0 0
    %2689 = vmatprep.subr.bf16.mxu0 0
    %2690 = vmatpush1.bf16.msra.mxu0 0
    %2691 = vmatprep.mubr.bf16.mxu0 0
    %2692 = vmatmul.mubr.bf16.gmra.mrb[0].mxu0 %v2654
    %v2693 = vpop.f32.mrb[0].mxu0
    %v2694 = vadd.f32 0.0, %v2693
    %v2695 = vpop.f32.mrb[0].mxu0
    %v2696 = vpop.f32.mrb[0].mxu0
    %v2697 = vpop.f32.mrb[0].mxu0
    %2698 = vdwg.mxu0
    %2699 = vrot.lane.b32.xlu0 %v2019, 64
    %v2700 = vpop.permute.xlu0 %2699
    %v2702 = vsel %vm2505, %v2596, 0
    %v2705 = vsel %vm2607, %v2700, 0
    %2707 = vmatprep.subr.bf16.mxu0 0
    %2708 = vmatpush1.bf16.msra.mxu0 %v2705
    %2709 = vmatprep.subr.bf16.mxu0 0
    %2710 = vmatpush1.bf16.msra.mxu0 0
    %2711 = vmatprep.subr.bf16.mxu0 0
    %2712 = vmatpush1.bf16.msra.mxu0 0
    %2713 = vmatprep.subr.bf16.mxu0 0
    %2714 = vmatpush1.bf16.msra.mxu0 0
    %2715 = vmatprep.subr.bf16.mxu0 0
    %2716 = vmatpush1.bf16.msra.mxu0 0
    %2717 = vmatprep.subr.bf16.mxu0 0
    %2718 = vmatpush1.bf16.msra.mxu0 0
    %2719 = vmatprep.subr.bf16.mxu0 0
    %2720 = vmatpush1.bf16.msra.mxu0 0
    %2721 = vmatprep.subr.bf16.mxu0 0
    %2722 = vmatpush1.bf16.msra.mxu0 0
    %2723 = vmatprep.subr.bf16.mxu0 0
    %2724 = vmatpush1.bf16.msra.mxu0 0
    %2725 = vmatprep.subr.bf16.mxu0 0
    %2726 = vmatpush1.bf16.msra.mxu0 0
    %2727 = vmatprep.subr.bf16.mxu0 0
    %2728 = vmatpush1.bf16.msra.mxu0 0
    %2729 = vmatprep.subr.bf16.mxu0 0
    %2730 = vmatpush1.bf16.msra.mxu0 0
    %2731 = vmatprep.subr.bf16.mxu0 0
    %2732 = vmatpush1.bf16.msra.mxu0 0
    %2733 = vmatprep.subr.bf16.mxu0 0
    %2734 = vmatpush1.bf16.msra.mxu0 0
    %2735 = vmatprep.subr.bf16.mxu0 0
    %2736 = vmatpush1.bf16.msra.mxu0 0
    %2737 = vmatprep.subr.bf16.mxu0 0
    %2738 = vmatpush1.bf16.msra.mxu0 0
    %2739 = vmatprep.mubr.bf16.mxu0 0
    %2740 = vmatmul.mubr.bf16.gmra.mrb[0].mxu0 %v2702
    %v2741 = vpop.f32.mrb[0].mxu0
    %v2742 = vadd.f32 0.0, %v2741
    %v2743 = vpop.f32.mrb[0].mxu0
    %v2744 = vpop.f32.mrb[0].mxu0
    %v2745 = vpop.f32.mrb[0].mxu0
    %2746 = vdwg.mxu0
    %2747 = vrot.lane.b32.xlu0 %v2020, 64
    %v2748 = vpop.permute.xlu0 %2747
    %v2750 = vsel %vm2505, %v2597, 0
    %v2753 = vsel %vm2607, %v2748, 0
    %2755 = vmatprep.subr.bf16.mxu0 0
    %2756 = vmatpush1.bf16.msra.mxu0 %v2753
    %2757 = vmatprep.subr.bf16.mxu0 0
    %2758 = vmatpush1.bf16.msra.mxu0 0
    %2759 = vmatprep.subr.bf16.mxu0 0
    %2760 = vmatpush1.bf16.msra.mxu0 0
    %2761 = vmatprep.subr.bf16.mxu0 0
    %2762 = vmatpush1.bf16.msra.mxu0 0
    %2763 = vmatprep.subr.bf16.mxu0 0
    %2764 = vmatpush1.bf16.msra.mxu0 0
    %2765 = vmatprep.subr.bf16.mxu0 0
    %2766 = vmatpush1.bf16.msra.mxu0 0
    %2767 = vmatprep.subr.bf16.mxu0 0
    %2768 = vmatpush1.bf16.msra.mxu0 0
    %2769 = vmatprep.subr.bf16.mxu0 0
    %2770 = vmatpush1.bf16.msra.mxu0 0
    %2771 = vmatprep.subr.bf16.mxu0 0
    %2772 = vmatpush1.bf16.msra.mxu0 0
    %2773 = vmatprep.subr.bf16.mxu0 0
    %2774 = vmatpush1.bf16.msra.mxu0 0
    %2775 = vmatprep.subr.bf16.mxu0 0
    %2776 = vmatpush1.bf16.msra.mxu0 0
    %2777 = vmatprep.subr.bf16.mxu0 0
    %2778 = vmatpush1.bf16.msra.mxu0 0
    %2779 = vmatprep.subr.bf16.mxu0 0
    %2780 = vmatpush1.bf16.msra.mxu0 0
    %2781 = vmatprep.subr.bf16.mxu0 0
    %2782 = vmatpush1.bf16.msra.mxu0 0
    %2783 = vmatprep.subr.bf16.mxu0 0
    %2784 = vmatpush1.bf16.msra.mxu0 0
    %2785 = vmatprep.subr.bf16.mxu0 0
    %2786 = vmatpush1.bf16.msra.mxu0 0
    %2787 = vmatprep.mubr.bf16.mxu0 0
    %2788 = vmatmul.mubr.bf16.gmra.mrb[0].mxu0 %v2750
    %v2789 = vpop.f32.mrb[0].mxu0
    %v2790 = vadd.f32 0.0, %v2789
    %v2791 = vpop.f32.mrb[0].mxu0
    %v2792 = vpop.f32.mrb[0].mxu0
    %v2793 = vpop.f32.mrb[0].mxu0
    %2794 = vdwg.mxu0
    %2795 = vrot.lane.b32.xlu0 %v2021, 64
    %v2796 = vpop.permute.xlu0 %2795
    %v2798 = vsel %vm2505, %v2598, 0
    %v2801 = vsel %vm2607, %v2796, 0
    %2803 = vmatprep.subr.bf16.mxu0 0
    %2804 = vmatpush1.bf16.msra.mxu0 %v2801
    %2805 = vmatprep.subr.bf16.mxu0 0
    %2806 = vmatpush1.bf16.msra.mxu0 0
    %2807 = vmatprep.subr.bf16.mxu0 0
    %2808 = vmatpush1.bf16.msra.mxu0 0
    %2809 = vmatprep.subr.bf16.mxu0 0
    %2810 = vmatpush1.bf16.msra.mxu0 0
    %2811 = vmatprep.subr.bf16.mxu0 0
    %2812 = vmatpush1.bf16.msra.mxu0 0
    %2813 = vmatprep.subr.bf16.mxu0 0
    %2814 = vmatpush1.bf16.msra.mxu0 0
    %2815 = vmatprep.subr.bf16.mxu0 0
    %2816 = vmatpush1.bf16.msra.mxu0 0
    %2817 = vmatprep.subr.bf16.mxu0 0
    %2818 = vmatpush1.bf16.msra.mxu0 0
    %2819 = vmatprep.subr.bf16.mxu0 0
    %2820 = vmatpush1.bf16.msra.mxu0 0
    %2821 = vmatprep.subr.bf16.mxu0 0
    %2822 = vmatpush1.bf16.msra.mxu0 0
    %2823 = vmatprep.subr.bf16.mxu0 0
    %2824 = vmatpush1.bf16.msra.mxu0 0
    %2825 = vmatprep.subr.bf16.mxu0 0
    %2826 = vmatpush1.bf16.msra.mxu0 0
    %2827 = vmatprep.subr.bf16.mxu0 0
    %2828 = vmatpush1.bf16.msra.mxu0 0
    %2829 = vmatprep.subr.bf16.mxu0 0
    %2830 = vmatpush1.bf16.msra.mxu0 0
    %2831 = vmatprep.subr.bf16.mxu0 0
    %2832 = vmatpush1.bf16.msra.mxu0 0
    %2833 = vmatprep.subr.bf16.mxu0 0
    %2834 = vmatpush1.bf16.msra.mxu0 0
    %2835 = vmatprep.mubr.bf16.mxu0 0
    %2836 = vmatmul.mubr.bf16.gmra.mrb[0].mxu0 %v2798
    %v2837 = vpop.f32.mrb[0].mxu0
    %v2838 = vadd.f32 0.0, %v2837
    %v2839 = vpop.f32.mrb[0].mxu0
    %v2840 = vpop.f32.mrb[0].mxu0
    %v2841 = vpop.f32.mrb[0].mxu0
    %2842 = vdwg.mxu0
    %2843 = vrot.lane.b32.xlu0 %v2022, 64
    %v2844 = vpop.permute.xlu0 %2843
    %v2846 = vsel %vm2505, %v2599, 0
    %v2849 = vsel %vm2607, %v2844, 0
    %2851 = vmatprep.subr.bf16.mxu0 0
    %2852 = vmatpush1.bf16.msra.mxu0 %v2849
    %2853 = vmatprep.subr.bf16.mxu0 0
    %2854 = vmatpush1.bf16.msra.mxu0 0
    %2855 = vmatprep.subr.bf16.mxu0 0
    %2856 = vmatpush1.bf16.msra.mxu0 0
    %2857 = vmatprep.subr.bf16.mxu0 0
    %2858 = vmatpush1.bf16.msra.mxu0 0
    %2859 = vmatprep.subr.bf16.mxu0 0
    %2860 = vmatpush1.bf16.msra.mxu0 0
    %2861 = vmatprep.subr.bf16.mxu0 0
    %2862 = vmatpush1.bf16.msra.mxu0 0
    %2863 = vmatprep.subr.bf16.mxu0 0
    %2864 = vmatpush1.bf16.msra.mxu0 0
    %2865 = vmatprep.subr.bf16.mxu0 0
    %2866 = vmatpush1.bf16.msra.mxu0 0
    %2867 = vmatprep.subr.bf16.mxu0 0
    %2868 = vmatpush1.bf16.msra.mxu0 0
    %2869 = vmatprep.subr.bf16.mxu0 0
    %2870 = vmatpush1.bf16.msra.mxu0 0
    %2871 = vmatprep.subr.bf16.mxu0 0
    %2872 = vmatpush1.bf16.msra.mxu0 0
    %2873 = vmatprep.subr.bf16.mxu0 0
    %2874 = vmatpush1.bf16.msra.mxu0 0
    %2875 = vmatprep.subr.bf16.mxu0 0
    %2876 = vmatpush1.bf16.msra.mxu0 0
    %2877 = vmatprep.subr.bf16.mxu0 0
    %2878 = vmatpush1.bf16.msra.mxu0 0
    %2879 = vmatprep.subr.bf16.mxu0 0
    %2880 = vmatpush1.bf16.msra.mxu0 0
    %2881 = vmatprep.subr.bf16.mxu0 0
    %2882 = vmatpush1.bf16.msra.mxu0 0
    %2883 = vmatprep.mubr.bf16.mxu0 0
    %2884 = vmatmul.mubr.bf16.gmra.mrb[0].mxu0 %v2846
    %v2885 = vpop.f32.mrb[0].mxu0
    %v2886 = vadd.f32 0.0, %v2885
    %v2887 = vpop.f32.mrb[0].mxu0
    %v2888 = vpop.f32.mrb[0].mxu0
    %v2889 = vpop.f32.mrb[0].mxu0
    %2890 = vdwg.mxu0
    %2891 = vrot.lane.b32.xlu0 %v2023, 64
    %v2892 = vpop.permute.xlu0 %2891
    %v2894 = vsel %vm2505, %v2600, 0
    %v2897 = vsel %vm2607, %v2892, 0
    %2899 = vmatprep.subr.bf16.mxu0 0
    %2900 = vmatpush1.bf16.msra.mxu0 %v2897
    %2901 = vmatprep.subr.bf16.mxu0 0
    %2902 = vmatpush1.bf16.msra.mxu0 0
    %2903 = vmatprep.subr.bf16.mxu0 0
    %2904 = vmatpush1.bf16.msra.mxu0 0
    %2905 = vmatprep.subr.bf16.mxu0 0
    %2906 = vmatpush1.bf16.msra.mxu0 0
    %2907 = vmatprep.subr.bf16.mxu0 0
    %2908 = vmatpush1.bf16.msra.mxu0 0
    %2909 = vmatprep.subr.bf16.mxu0 0
    %2910 = vmatpush1.bf16.msra.mxu0 0
    %2911 = vmatprep.subr.bf16.mxu0 0
    %2912 = vmatpush1.bf16.msra.mxu0 0
    %2913 = vmatprep.subr.bf16.mxu0 0
    %2914 = vmatpush1.bf16.msra.mxu0 0
    %2915 = vmatprep.subr.bf16.mxu0 0
    %2916 = vmatpush1.bf16.msra.mxu0 0
    %2917 = vmatprep.subr.bf16.mxu0 0
    %2918 = vmatpush1.bf16.msra.mxu0 0
    %2919 = vmatprep.subr.bf16.mxu0 0
    %2920 = vmatpush1.bf16.msra.mxu0 0
    %2921 = vmatprep.subr.bf16.mxu0 0
    %2922 = vmatpush1.bf16.msra.mxu0 0
    %2923 = vmatprep.subr.bf16.mxu0 0
    %2924 = vmatpush1.bf16.msra.mxu0 0
    %2925 = vmatprep.subr.bf16.mxu0 0
    %2926 = vmatpush1.bf16.msra.mxu0 0
    %2927 = vmatprep.subr.bf16.mxu0 0
    %2928 = vmatpush1.bf16.msra.mxu0 0
    %2929 = vmatprep.subr.bf16.mxu0 0
    %2930 = vmatpush1.bf16.msra.mxu0 0
    %2931 = vmatprep.mubr.bf16.mxu0 0
    %2932 = vmatmul.mubr.bf16.gmra.mrb[0].mxu0 %v2894
    %v2933 = vpop.f32.mrb[0].mxu0
    %v2934 = vadd.f32 0.0, %v2933
    %v2935 = vpop.f32.mrb[0].mxu0
    %v2936 = vpop.f32.mrb[0].mxu0
    %v2937 = vpop.f32.mrb[0].mxu0
    %2938 = vdwg.mxu0
    %2939 = vrot.lane.b32.xlu0 %v2024, 64
    %v2940 = vpop.permute.xlu0 %2939
    %v2942 = vsel %vm2505, %v2601, 0
    %v2945 = vsel %vm2607, %v2940, 0
    %2947 = vmatprep.subr.bf16.mxu0 0
    %2948 = vmatpush1.bf16.msra.mxu0 %v2945
    %2949 = vmatprep.subr.bf16.mxu0 0
    %2950 = vmatpush1.bf16.msra.mxu0 0
    %2951 = vmatprep.subr.bf16.mxu0 0
    %2952 = vmatpush1.bf16.msra.mxu0 0
    %2953 = vmatprep.subr.bf16.mxu0 0
    %2954 = vmatpush1.bf16.msra.mxu0 0
    %2955 = vmatprep.subr.bf16.mxu0 0
    %2956 = vmatpush1.bf16.msra.mxu0 0
    %2957 = vmatprep.subr.bf16.mxu0 0
    %2958 = vmatpush1.bf16.msra.mxu0 0
    %2959 = vmatprep.subr.bf16.mxu0 0
    %2960 = vmatpush1.bf16.msra.mxu0 0
    %2961 = vmatprep.subr.bf16.mxu0 0
    %2962 = vmatpush1.bf16.msra.mxu0 0
    %2963 = vmatprep.subr.bf16.mxu0 0
    %2964 = vmatpush1.bf16.msra.mxu0 0
    %2965 = vmatprep.subr.bf16.mxu0 0
    %2966 = vmatpush1.bf16.msra.mxu0 0
    %2967 = vmatprep.subr.bf16.mxu0 0
    %2968 = vmatpush1.bf16.msra.mxu0 0
    %2969 = vmatprep.subr.bf16.mxu0 0
    %2970 = vmatpush1.bf16.msra.mxu0 0
    %2971 = vmatprep.subr.bf16.mxu0 0
    %2972 = vmatpush1.bf16.msra.mxu0 0
    %2973 = vmatprep.subr.bf16.mxu0 0
    %2974 = vmatpush1.bf16.msra.mxu0 0
    %2975 = vmatprep.subr.bf16.mxu0 0
    %2976 = vmatpush1.bf16.msra.mxu0 0
    %2977 = vmatprep.subr.bf16.mxu0 0
    %2978 = vmatpush1.bf16.msra.mxu0 0
    %2979 = vmatprep.mubr.bf16.mxu0 0
    %2980 = vmatmul.mubr.bf16.gmra.mrb[0].mxu0 %v2942
    %v2981 = vpop.f32.mrb[0].mxu0
    %v2982 = vadd.f32 0.0, %v2981
    %v2983 = vpop.f32.mrb[0].mxu0
    %v2984 = vpop.f32.mrb[0].mxu0
    %v2985 = vpop.f32.mrb[0].mxu0
    %2986 = vdwg.mxu0
    %v2987 = vsel %vm142, %v2646, 0.0
    %v2988 = vrot.slane %v2987, 4
    %v2989 = vadd.f32 %v2987, %v2988
    %v2990 = vrot.slane %v2989, 2
    %v2991 = vadd.f32 %v2989, %v2990
    %v2992 = vrot.slane %v2991, 1
    %v2993 = vadd.f32 %v2991, %v2992
    %v2994 = vsel %vm142, %v2694, 0.0
    %v2995 = vrot.slane %v2994, 4
    %v2996 = vadd.f32 %v2994, %v2995
    %v2997 = vrot.slane %v2996, 2
    %v2998 = vadd.f32 %v2996, %v2997
    %v2999 = vrot.slane %v2998, 1
    %v3000 = vadd.f32 %v2998, %v2999
    %v3001 = vsel %vm142, %v2742, 0.0
    %v3002 = vrot.slane %v3001, 4
    %v3003 = vadd.f32 %v3001, %v3002
    %v3004 = vrot.slane %v3003, 2
    %v3005 = vadd.f32 %v3003, %v3004
    %v3006 = vrot.slane %v3005, 1
    %v3007 = vadd.f32 %v3005, %v3006
    %v3008 = vsel %vm142, %v2790, 0.0
    %v3009 = vrot.slane %v3008, 4
    %v3010 = vadd.f32 %v3008, %v3009
    %v3011 = vrot.slane %v3010, 2
    %v3012 = vadd.f32 %v3010, %v3011
    %v3013 = vrot.slane %v3012, 1
    %v3014 = vadd.f32 %v3012, %v3013
    %v3015 = vsel %vm142, %v2838, 0.0
    %v3016 = vrot.slane %v3015, 4
    %v3017 = vadd.f32 %v3015, %v3016
    %v3018 = vrot.slane %v3017, 2
    %v3019 = vadd.f32 %v3017, %v3018
    %v3020 = vrot.slane %v3019, 1
    %v3021 = vadd.f32 %v3019, %v3020
    %v3022 = vsel %vm142, %v2886, 0.0
    %v3023 = vrot.slane %v3022, 4
    %v3024 = vadd.f32 %v3022, %v3023
    %v3025 = vrot.slane %v3024, 2
    %v3026 = vadd.f32 %v3024, %v3025
    %v3027 = vrot.slane %v3026, 1
    %v3028 = vadd.f32 %v3026, %v3027
    %v3029 = vsel %vm142, %v2934, 0.0
    %v3030 = vrot.slane %v3029, 4
    %v3031 = vadd.f32 %v3029, %v3030
    %v3032 = vrot.slane %v3031, 2
    %v3033 = vadd.f32 %v3031, %v3032
    %v3034 = vrot.slane %v3033, 1
    %v3035 = vadd.f32 %v3033, %v3034
    %v3036 = vsel %vm142, %v2982, 0.0
    %v3037 = vrot.slane %v3036, 4
    %v3038 = vadd.f32 %v3036, %v3037
    %v3039 = vrot.slane %v3038, 2
    %v3040 = vadd.f32 %v3038, %v3039
    %v3041 = vrot.slane %v3040, 1
    %v3042 = vadd.f32 %v3040, %v3041
    %vm3051 = vcmask 1041409
    %v3052 = vsel %vm3051, %v3000, %v2993
    %vm3053 = vcmask 1042434
    %v3054 = vsel %vm3053, %v3007, %v3052
    %vm3055 = vcmask 1043459
    %v3056 = vsel %vm3055, %v3014, %v3054
    %vm3057 = vcmask 1044484
    %v3058 = vsel %vm3057, %v3021, %v3056
    %vm3059 = vcmask 1045509
    %v3060 = vsel %vm3059, %v3028, %v3058
    %vm3061 = vcmask 1046534
    %v3062 = vsel %vm3061, %v3035, %v3060
    %vm3063 = vcmask 1047559
    %v3064 = vsel %vm3063, %v3042, %v3062
    %3066 = vst.msk [vmem:[#allocation13] sm:$0xff] %vm142, %v3064
    // Predicated region
    $region42: #{tpu_custom_call.1} parent=1 // pred_check
      _
    $region43: #{tpu_custom_call.1} parent=1 // pred_check_branch
      %3068 = sbr.rel (0) target = $region45
    $region44: #{tpu_custom_call.1} parent=1 // pred_region
      %s3070 = ssub.s32 128, 128
      %3071 = vsyncadd [#allocation9], %s3070
      %s3073 = sshll.u32 [#allocation13], 4
      %s3074 = int_to_ptr.vmem [resolvable:$true] %s3073
      %3076 = dma.vmem_to_hbm [thread:$0]  %s3074, 128, %s7, [#allocation9]
    $region45: #{tpu_custom_call.1} parent=1 // pred_fallthru
      _
    // Predicated region
    $region46: #{tpu_custom_call.1} parent=1 // pred_check
      _
    $region47: #{tpu_custom_call.1} parent=1 // pred_check_branch
      %3078 = sbr.rel (0) target = $region49
    $region48: #{tpu_custom_call.1} parent=1 // pred_region
      %3079 = dma.done [#allocation9], 128
    $region49: #{tpu_custom_call.1} parent=1 // pred_fallthru
      _
    %3080 = vsyncpa [#allocation8], 1
    %3081 = vsyncpa [#allocation11], 1
    %3082 = vsyncpa [#allocation9], 1

</llo_original>
